<compile_context>
chip_gen: v7x
topology: tpu7x:2x2x1
jax: 0.10.0
libtpu: 0.0.40
codegen_flags: <defaults>
</compile_context>

<pallas_src>
import jax
import jax.numpy as jnp
import numpy as np
from jax.experimental import pallas as pl
from jax.experimental.pallas import tpu as pltpu


def _qa_head_kernel(x_ref, mask_ref, w1_ref, b1_ref, wse_ref, bse_ref, out_ref):
    """One grid step == one tile of `bt` batch elements (M = bt*S rows for the MXU).

    x_ref    : (bt*S, H) f32   flattened encoder representation rows (cast to bf16 here)
    mask_ref : (bt, 1, S) f32  attention mask (0 == padding), lane-dense over S
    w1_ref   : (H, H)    bf16  encoder_linear weight (x @ W1 convention)
    b1_ref   : (1, H)    f32   encoder_linear bias
    wse_ref  : (H, 2)    bf16  [w_start | w_end] stacked head weights
    bse_ref  : (1, 2)    f32   [b_start, b_end]
    out_ref  : (bt, 2, S) f32  [start_prob ; end_prob], softmax over the seq dim (lanes)
    """
    bt, _, S = out_ref.shape

    # bf16 cast inside the kernel (hidden under the MXU) instead of a separate XLA pass.
    x = x_ref[...].astype(jnp.bfloat16)                                   # (M, H) bf16

    # encoder_linear: Linear(1024,1024) + Tanh (Dropout == identity at inference).
    # All bt*S rows share W1 -> single MXU matmul with M = bt*S.
    h = jnp.tanh(
        jnp.dot(x, w1_ref[...], preferred_element_type=jnp.float32)
        + b1_ref[...])                                                    # (M, H) f32

    # start_layer / end_layer folded into one (H, 2) matmul on the MXU.
    logits = (jnp.dot(h.astype(wse_ref.dtype), wse_ref[...],
                      preferred_element_type=jnp.float32)
              + bse_ref[...])                                             # (M, 2) f32

    # Lane-dense epilogue: (M, 2) -> (bt, S, 2) -> (bt, 2, S) so masked_fill / softmax /
    # store all operate with S in the 128-wide lane dimension (dense vst, no vst.msk).
    logits = jnp.transpose(logits.reshape(bt, S, 2), (0, 2, 1))           # (bt, 2, S)

    neg = jnp.float32(-1e30)
    logits = jnp.where(mask_ref[...] == 0.0, neg, logits)                 # (bt, 2, S)
    mx = jnp.max(logits, axis=-1, keepdims=True)                          # (bt, 2, 1)
    e = jnp.exp(logits - mx)                                              # f32 exp (EUP)
    denom = jnp.sum(e, axis=-1, keepdims=True)                            # (bt, 2, 1)
    out_ref[...] = e / denom        # exact division: the probabilities may feed a loss


def _pick_batch_tile(B, S, target_rows=1024, max_rows=2048):
    """Pick bt (a divisor of B) so that rows = bt*S:
       - is a multiple of 8 (the (8,128) tiling constraint on the x block),
       - lands near `target_rows` MXU rows without exceeding `max_rows`,
       - leaves >= 2 grid steps whenever B >= 2 (so v7x's 2 TCs both get work).
       Falls back to bt = B (block == full array, always legal) for odd toy shapes."""
    divisors = [d for d in range(1, B + 1) if B % d == 0]
    cands = []
    for d in divisors:
        rows = d * S
        if rows % 8 != 0:            # would violate the (8,128) block constraint
            continue
        if B >= 2 and B // d < 2:    # keep at least 2 grid steps for megacore/v7x
            continue
        cands.append(d)
    if not cands:
        return B
    capped = [d for d in cands if d * S <= max_rows]
    pool = capped if capped else [min(cands, key=lambda d: d * S)]
    return min(pool, key=lambda d: abs(d * S - target_rows))


def pack_params(w1, b1, w_start, w_end, b_se):
    """One-time weight preprocessing, hoisted out of the per-call jit path."""
    w1_bf = jnp.asarray(w1, jnp.bfloat16)                                       # (H, H)
    wse_bf = jnp.concatenate([w_start, w_end], axis=0).T.astype(jnp.bfloat16)   # (H, 2)
    b1_2d = jnp.asarray(b1, jnp.float32).reshape(1, -1)                         # (1, H)
    bse_2d = jnp.asarray(b_se, jnp.float32).reshape(1, 2)                       # (1, 2)
    return w1_bf, b1_2d, wse_bf, bse_2d


@jax.jit
def qa_head_pallas(encoder_rep, input_mask, w1_bf, b1_2d, wse_bf, bse_2d):
    B, S, H = encoder_rep.shape
    bt = _pick_batch_tile(B, S)
    grid = (B // bt,)
    rows = bt * S

    # Activations stay f32 here (free metadata reshape); bf16 cast happens in-kernel.
    x2d = encoder_rep.reshape(B * S, H)
    mask3 = input_mask.astype(jnp.float32)[:, None, :]                          # (B, 1, S)

    # Explicit VMEM budget so a tile tuned on v5e/v6e (128 MiB) doesn't blow v7x (64 MiB):
    #   x double-buffered f32 + W1 double-buffered bf16 + f32/bf16 intermediates of h.
    est = 2 * rows * H * 4 + 2 * H * H * 2 + rows * H * 8 + (1 << 20)
    vmem_limit = int(min(max(est * 5 // 4, 32 << 20), 60 << 20))

    grid_spec = pltpu.PrefetchScalarGridSpec(
        num_scalar_prefetch=0,
        grid=grid,
        in_specs=[
            pl.BlockSpec((rows, H), lambda i: (i, 0)),       # flattened encoder rows (f32)
            pl.BlockSpec((bt, 1, S), lambda i: (i, 0, 0)),   # mask, lane-dense over S
            pl.BlockSpec((H, H), lambda i: (0, 0)),          # W1 (constant index_map)
            pl.BlockSpec((1, H), lambda i: (0, 0)),          # b1
            pl.BlockSpec((H, 2), lambda i: (0, 0)),          # [w_start | w_end]
            pl.BlockSpec((1, 2), lambda i: (0, 0)),          # [b_start, b_end]
        ],
        out_specs=pl.BlockSpec((bt, 2, S), lambda i: (i, 0, 0)),
    )
    probs = pl.pallas_call(
        _qa_head_kernel,
        out_shape=jax.ShapeDtypeStruct((B, 2, S), jnp.float32),
        grid_spec=grid_spec,
        compiler_params=pltpu.CompilerParams(
            dimension_semantics=("parallel",),   # shards batch tiles across v7x's 2 TCs
            vmem_limit_bytes=vmem_limit),
    )(x2d, mask3, w1_bf, b1_2d, wse_bf, bse_2d)

    # Split the lane-dense probability slab into the module's two outputs (free slices).
    return probs[:, 0, :], probs[:, 1, :]


def my_model_forward(encoder_rep, input_mask, packed_params,
                     start_index=None, end_index=None, epsilon=1e-6):
    """Mirrors MyModel.forward (minus the pretrained encoder)."""
    sp, ep = qa_head_pallas(encoder_rep, input_mask, *packed_params)
    if start_index is None or end_index is None:
        return sp, ep
    # glue: gather + log + mean in plain JAX
    s = jnp.take_along_axis(sp, start_index[:, None], axis=1) + epsilon
    e = jnp.take_along_axis(ep, end_index[:, None], axis=1) + epsilon
    return jnp.mean((-jnp.log(s) - jnp.log(e)) / 2.0)


def _bf16_round(a):
    return np.asarray(
        jnp.asarray(a, jnp.float32).astype(jnp.bfloat16).astype(jnp.float32),
        np.float64)


def _reference(encoder_rep, input_mask, params):
    """float64 reference matching the kernel's bf16-operand / f32-accumulate path."""
    w1, b1, ws, we, bse = params
    x = _bf16_round(encoder_rep)
    w1r = _bf16_round(w1)
    wsr = _bf16_round(ws).reshape(-1)
    wer = _bf16_round(we).reshape(-1)
    b1r = np.asarray(b1, np.float64).reshape(1, -1)
    bser = np.asarray(bse, np.float64)
    m = np.asarray(input_mask, np.float64)

    h = np.tanh(x @ w1r + b1r)                                # (B,S,H)
    h = _bf16_round(h)                                        # kernel casts h to bf16
    sl = h @ wsr + bser[0]                                    # (B,S)
    el = h @ wer + bser[1]
    sl = np.where(m == 0.0, -1e30, sl)
    el = np.where(m == 0.0, -1e30, el)

    def softmax(v):
        v = v - v.max(axis=1, keepdims=True)
        e = np.exp(v)
        return e / e.sum(axis=1, keepdims=True)

    return softmax(sl), softmax(el)


if __name__ == "__main__":
    B, S, H = 2, 8, 1024
    key = jax.random.PRNGKey(0)
    k_x, k_w1, k_b1, k_ws, k_we, k_b = jax.random.split(key, 6)

    # deterministic parameter init (nn.Linear-style uniform(+-1/sqrt(fan_in)))
    bound = 1.0 / np.sqrt(H)
    w1 = jax.random.uniform(k_w1, (H, H), jnp.float32, -bound, bound)
    b1 = jax.random.uniform(k_b1, (H,), jnp.float32, -bound, bound)
    w_start = jax.random.uniform(k_ws, (1, H), jnp.float32, -bound, bound)
    w_end = jax.random.uniform(k_we, (1, H), jnp.float32, -bound, bound)
    b_se = jax.random.uniform(k_b, (2,), jnp.float32, -bound, bound)
    params = (w1, b1, w_start, w_end, b_se)
    packed_params = pack_params(*params)   # one-time bf16 cast / packing, outside jit

    # synthetic "encoder_rep" (stand-in for the BERT encoder output) and mask
    encoder_rep = jax.random.normal(k_x, (B, S, H), jnp.float32)
    input_mask = jnp.array(
        [[1, 1, 1, 1, 1, 1, 1, 1],
         [1, 1, 1, 1, 1, 0, 0, 0]], dtype=jnp.float32)

    start_prob, end_prob = my_model_forward(encoder_rep, input_mask, packed_params)
    jax.block_until_ready((start_prob, end_prob))

    sp_ref, ep_ref = _reference(encoder_rep, input_mask, params)
    np.testing.assert_allclose(np.asarray(start_prob), sp_ref, rtol=2e-2, atol=1e-4)
    np.testing.assert_allclose(np.asarray(end_prob), ep_ref, rtol=2e-2, atol=1e-4)

    # also exercise the loss branch (gather/log/mean glue in plain JAX)
    start_idx = jnp.array([0, 2], dtype=jnp.int32)
    end_idx = jnp.array([3, 4], dtype=jnp.int32)
    loss = my_model_forward(encoder_rep, input_mask, packed_params, start_idx, end_idx)
    jax.block_until_ready(loss)

    print("KERNEL_OK")
</pallas_src>

<mosaic_0001>
module attributes {stable_mosaic.version = 11 : i64} {
  func.func @_qa_head_kernel(%arg0: i32, %arg1: memref<8x1024xf32, #tpu.memory_space<vmem>>, %arg2: memref<1x1x8xf32, #tpu.memory_space<vmem>>, %arg3: memref<1024x1024xbf16, #tpu.memory_space<vmem>>, %arg4: memref<1x1024xf32, #tpu.memory_space<vmem>>, %arg5: memref<1024x2xbf16, #tpu.memory_space<vmem>>, %arg6: memref<1x2xf32, #tpu.memory_space<vmem>>, %arg7: memref<1x2x8xf32, #tpu.memory_space<vmem>>) attributes {dimension_semantics = [#tpu.dimension_semantics<parallel>], iteration_bounds = array<i64: 2>, scalar_prefetch = 0 : i64, scratch_operands = 0 : i64, tpu.core_type = #tpu.core_type<tc>, window_params = [{transform_indices = @transform_0, window_bounds = array<i64: 8, 1024>}, {transform_indices = @transform_1, window_bounds = array<i64: 1, 1, 8>}, {pipeline_mode = #tpu.pipeline_mode<synchronous>, transform_indices = @transform_2, window_bounds = array<i64: 1024, 1024>}, {pipeline_mode = #tpu.pipeline_mode<synchronous>, transform_indices = @transform_3, window_bounds = array<i64: 1, 1024>}, {pipeline_mode = #tpu.pipeline_mode<synchronous>, transform_indices = @transform_4, window_bounds = array<i64: 1024, 2>}, {pipeline_mode = #tpu.pipeline_mode<synchronous>, transform_indices = @transform_5, window_bounds = array<i64: 1, 2>}, {transform_indices = @transform_6, window_bounds = array<i64: 1, 2, 8>}]} {
    %c0 = arith.constant 0 : index
    %c0_0 = arith.constant 0 : index
    %0 = vector.load %arg1[%c0, %c0_0] : memref<8x1024xf32, #tpu.memory_space<vmem>>, vector<8x1024xf32>
    %1 = arith.truncf %0 : vector<8x1024xf32> to vector<8x1024xbf16>
    %c0_1 = arith.constant 0 : index
    %c0_2 = arith.constant 0 : index
    %2 = vector.load %arg3[%c0_1, %c0_2] : memref<1024x1024xbf16, #tpu.memory_space<vmem>>, vector<1024x1024xbf16>
    %cst = arith.constant dense<0.000000e+00> : vector<8x1024xf32>
    %3 = tpu.matmul %1, %2, %cst {dimension_numbers = #tpu.dot_dimension_numbers<[1], [0], [0], [1], [0, 0, 1, 1], [], []>} : vector<8x1024xbf16>, vector<1024x1024xbf16>, vector<8x1024xf32> -> vector<8x1024xf32>
    %c0_3 = arith.constant 0 : index
    %c0_4 = arith.constant 0 : index
    %4 = vector.load %arg4[%c0_3, %c0_4] : memref<1x1024xf32, #tpu.memory_space<vmem>>, vector<1x1024xf32>
    %5 = vector.broadcast %4 : vector<1x1024xf32> to vector<8x1024xf32>
    %6 = arith.addf %3, %5 : vector<8x1024xf32>
    %7 = math.tanh %6 : vector<8x1024xf32>
    %8 = arith.truncf %7 : vector<8x1024xf32> to vector<8x1024xbf16>
    %c0_5 = arith.constant 0 : index
    %c0_6 = arith.constant 0 : index
    %9 = vector.load %arg5[%c0_5, %c0_6] : memref<1024x2xbf16, #tpu.memory_space<vmem>>, vector<1024x2xbf16>
    %cst_7 = arith.constant dense<0.000000e+00> : vector<8x2xf32>
    %10 = tpu.matmul %8, %9, %cst_7 {dimension_numbers = #tpu.dot_dimension_numbers<[1], [0], [0], [1], [0, 0, 1, 1], [], []>} : vector<8x1024xbf16>, vector<1024x2xbf16>, vector<8x2xf32> -> vector<8x2xf32>
    %c0_8 = arith.constant 0 : index
    %c0_9 = arith.constant 0 : index
    %11 = vector.load %arg6[%c0_8, %c0_9] : memref<1x2xf32, #tpu.memory_space<vmem>>, vector<1x2xf32>
    %12 = vector.broadcast %11 : vector<1x2xf32> to vector<8x2xf32>
    %13 = arith.addf %10, %12 : vector<8x2xf32>
    %14 = vector.shape_cast %13 : vector<8x2xf32> to vector<1x8x2xf32>
    %15 = tpu.transpose %14, [0, 2, 1] : vector<1x8x2xf32> -> vector<1x2x8xf32>
    %c0_10 = arith.constant 0 : index
    %c0_11 = arith.constant 0 : index
    %c0_12 = arith.constant 0 : index
    %16 = vector.load %arg2[%c0_10, %c0_11, %c0_12] : memref<1x1x8xf32, #tpu.memory_space<vmem>>, vector<1x1x8xf32>
    %cst_13 = arith.constant 0.000000e+00 : f32
    %17 = vector.broadcast %cst_13 : f32 to vector<1x1x8xf32>
    %18 = arith.cmpf oeq, %16, %17 : vector<1x1x8xf32>
    %cst_14 = arith.constant -1.000000e+30 : f32
    %19 = vector.shape_cast %18 : vector<1x1x8xi1> to vector<1x1x8xi1>
    %20 = vector.broadcast %19 : vector<1x1x8xi1> to vector<1x2x8xi1>
    %21 = vector.broadcast %cst_14 : f32 to vector<1x2x8xf32>
    %22 = arith.select %20, %21, %15 : vector<1x2x8xi1>, vector<1x2x8xf32>
    %cst_15 = arith.constant dense<0xFF800000> : vector<1x2xf32>
    %23 = vector.multi_reduction <maximumf>, %22, %cst_15 [2] : vector<1x2x8xf32> to vector<1x2xf32>
    %24 = vector.shape_cast %23 : vector<1x2xf32> to vector<1x2x1xf32>
    %25 = vector.broadcast %24 : vector<1x2x1xf32> to vector<1x2x8xf32>
    %26 = arith.subf %22, %25 : vector<1x2x8xf32>
    %27 = math.exp %26 : vector<1x2x8xf32>
    %cst_16 = arith.constant dense<0.000000e+00> : vector<1x2xf32>
    %28 = vector.multi_reduction <add>, %27, %cst_16 [2] : vector<1x2x8xf32> to vector<1x2xf32>
    %29 = vector.shape_cast %28 : vector<1x2xf32> to vector<1x2x1xf32>
    %30 = vector.broadcast %29 : vector<1x2x1xf32> to vector<1x2x8xf32>
    %31 = arith.divf %27, %30 : vector<1x2x8xf32>
    %c0_17 = arith.constant 0 : index
    %c0_18 = arith.constant 0 : index
    %c0_19 = arith.constant 0 : index
    %32 = vector.load %arg7[%c0_17, %c0_18, %c0_19] : memref<1x2x8xf32, #tpu.memory_space<vmem>>, vector<1x2x8xf32>
    tpu.vector_store %arg7[%c0_17, %c0_18, %c0_19], %31 {strides = array<i32>} : memref<1x2x8xf32, #tpu.memory_space<vmem>>, vector<1x2x8xf32>,
    return
  }
  func.func @transform_0(%arg0: i32) -> (i32, i32) {
    %c0_i32 = arith.constant 0 : i32
    %c0_i32_0 = arith.constant 0 : i32
    return %arg0, %c0_i32 : i32, i32
  }
  func.func @transform_1(%arg0: i32) -> (i32, i32, i32) {
    %c0_i32 = arith.constant 0 : i32
    %c0_i32_0 = arith.constant 0 : i32
    %c0_i32_1 = arith.constant 0 : i32
    return %arg0, %c0_i32, %c0_i32_0 : i32, i32, i32
  }
  func.func @transform_2(%arg0: i32) -> (i32, i32) {
    %c0_i32 = arith.constant 0 : i32
    %c0_i32_0 = arith.constant 0 : i32
    %c0_i32_1 = arith.constant 0 : i32
    return %c0_i32, %c0_i32_0 : i32, i32
  }
  func.func @transform_3(%arg0: i32) -> (i32, i32) {
    %c0_i32 = arith.constant 0 : i32
    %c0_i32_0 = arith.constant 0 : i32
    %c0_i32_1 = arith.constant 0 : i32
    return %c0_i32, %c0_i32_0 : i32, i32
  }
  func.func @transform_4(%arg0: i32) -> (i32, i32) {
    %c0_i32 = arith.constant 0 : i32
    %c0_i32_0 = arith.constant 0 : i32
    %c0_i32_1 = arith.constant 0 : i32
    return %c0_i32, %c0_i32_0 : i32, i32
  }
  func.func @transform_5(%arg0: i32) -> (i32, i32) {
    %c0_i32 = arith.constant 0 : i32
    %c0_i32_0 = arith.constant 0 : i32
    %c0_i32_1 = arith.constant 0 : i32
    return %c0_i32, %c0_i32_0 : i32, i32
  }
  func.func @transform_6(%arg0: i32) -> (i32, i32, i32) {
    %c0_i32 = arith.constant 0 : i32
    %c0_i32_0 = arith.constant 0 : i32
    %c0_i32_1 = arith.constant 0 : i32
    return %arg0, %c0_i32, %c0_i32_0 : i32, i32, i32
  }
}

</mosaic_0001>

<llo_original>
// kernel: qa_head_pallas.1
$region0: #{qa_head_pallas.1}
  #allocation0 [shape = 'u32[]', space=smem, size = 0x4, offset = 0x4, fixed_abs, tag = 'smem constant byte address 0x4 - core index']
  #allocation1 [shape = 'u32[144,128]{1,0:T(1,128)}', space=vmem, size = 0x12000, scoped, tag = 'internal scratch']
  %s0 = inlined_call_operand.hbm [shape: f32[16,1024], index: 0, kind: input, shape index: {}]
  %s1 = inlined_call_operand.hbm [shape: f32[2,1,8], index: 1, kind: input, shape index: {}]
  %s2 = inlined_call_operand.hbm [shape: bf16[1024,1024], index: 2, kind: input, shape index: {}]
  %s3 = inlined_call_operand.hbm [shape: f32[1,1024], index: 3, kind: input, shape index: {}]
  %s4 = inlined_call_operand.vmem [shape: bf16[1024,2], index: 4, kind: input, shape index: {}]
  %s5 = inlined_call_operand.hbm [shape: f32[1,2], index: 5, kind: input, shape index: {}]
  %s6 = inlined_call_operand.vmem [shape: f32[2,2,8], index: 6, kind: output, shape index: {}]
  %s7 = sld [smem:[#allocation0]]
  $region77: #{qa_head_pallas.1} parent=0
    _
  %s9 = ssub.s32 1, %s7
  %s10 = scalar_select 0, %s9, %s7
  $region1: #{qa_head_pallas.1} parent=0
    #allocation2 [shape = 'u8[65536]{0}', space=vmem, size = 0x10000, scoped, tag = 'input window, operand 0']
    #allocation3 [shape = 's32[2]{0}', space=sflag, size = 0x8, scoped, tag = 'scoped memory for qa_head_pallas.1']
    #allocation4 [shape = 'u8[1024]{0}', space=vmem, size = 0x400, scoped, tag = 'input window, operand 1']
    #allocation5 [shape = 's32[2]{0}', space=sflag, size = 0x8, scoped, tag = 'scoped memory for qa_head_pallas.1']
    #allocation6 [shape = 'u8[2097152]{0}', space=vmem, size = 0x200000, scoped, tag = 'input window, operand 2, single buffered']
    #allocation7 [shape = 'u8[4096]{0}', space=vmem, size = 0x1000, scoped, tag = 'input window, operand 3, single buffered']
    #allocation8 [shape = 's32[1]{0}', space=sflag, size = 0x4, scoped, tag = 'scoped memory for qa_head_pallas.1']
    #allocation9 [shape = 'u8[512]{0}', space=vmem, size = 0x400, scoped, tag = 'input window, operand 5, single buffered']
    %11 = vsyncpa [#allocation3], 0
    %s12 = scalar_lea.sflag [#allocation3], 1
    %13 = vsyncpa %s12, 0
    %14 = vsyncpa [#allocation5], 0
    %s15 = scalar_lea.sflag [#allocation5], 1
    %16 = vsyncpa %s15, 0
    %17 = vsyncpa [#allocation8], 0
    loop: start=0, step=1, limit=4
    $region2: #{qa_head_pallas.1} parent=1 // loop_pre_header
      _
    $region3: #{qa_head_pallas.1} parent=1 // loop_header
      %s19 = sphi 0, %s23
      %p20 = scmp.ge.s32.totalorder %s19, 4
      %s29 = sphi 0, %s31
      %s32 = sphi 0, %s29
      %s33 = sphi 0, %s32
      %s49 = sphi 0, %s33
      %s55 = sphi 0, %s57
      %s58 = sphi 0, %s55
      %s59 = sphi 0, %s58
      %s75 = sphi 0, %s59
      %s79 = sphi 0, %s79
      %s81 = sphi 0, %s79
      %s82 = sphi 0, %s81
      %s96 = sphi 0, %s82
      %s100 = sphi 0, %s100
      %s102 = sphi 0, %s100
      %s103 = sphi 0, %s102
      %s117 = sphi 0, %s103
      %s121 = sphi 0, %s121
      %s123 = sphi 0, %s121
      %s124 = sphi 0, %s123
      %s138 = sphi 0, %s124
      %s142 = sphi 0, %s142
      %s144 = sphi 0, %s142
      %s145 = sphi 0, %s144
      %s159 = sphi 0, %s145
      %s165 = sphi 0, %s167
      %s168 = sphi 0, %s165
      %s169 = sphi 0, %s168
      %s185 = sphi 0, %s169
    $region4: #{qa_head_pallas.1} parent=1 // loop_header_branch
      %22 = sbr.rel (%p20) target = $region8
    $region5: #{qa_head_pallas.1} parent=1 // loop_body
      %s24 = ssub.s32 %s19, 1
      %s25 = ssub.s32 %s19, 2
      %s26 = sadd.s32 %s19, 1
      %s27 = ssub.s32 %s19, %s26
      %p28 = scmp.eq.s32.totalorder %s27, 0
      %s30 = sadd.s32 %s29, 1
      %s31 = scalar_select %p28, %s29, %s30
      %p34 = pneg %p28
      %p35 = scmp.eq.s32.totalorder %s19, 1
      %p36 = por %p34, %p35
      %p37 = scmp.ne.s32.totalorder %s29, %s32
      %p38 = scmp.eq.s32.totalorder %s19, 0
      %p39 = por %p37, %p38
      %p40 = scmp.ne.s32.totalorder %s29, %s32
      %p41 = scmp.eq.s32.totalorder %s24, 1
      %p42 = por %p40, %p41
      %p43 = scmp.ne.s32.totalorder %s32, %s33
      %p44 = scmp.eq.s32.totalorder %s24, 0
      %p45 = por %p43, %p44
      %p46 = scmp.ne.s32.totalorder %s32, %s33
      %p47 = scmp.eq.s32.totalorder %s25, 1
      %p48 = por %p46, %p47
      %p50 = scmp.ne.s32.totalorder %s33, %s49
      %p51 = scmp.eq.s32.totalorder %s25, 0
      %p52 = por %p50, %p51
      %s53 = ssub.s32 %s19, %s26
      %p54 = scmp.eq.s32.totalorder %s53, 0
      %s56 = sadd.s32 %s55, 1
      %s57 = scalar_select %p54, %s55, %s56
      %p60 = pneg %p54
      %p61 = scmp.eq.s32.totalorder %s19, 1
      %p62 = por %p60, %p61
      %p63 = scmp.ne.s32.totalorder %s55, %s58
      %p64 = scmp.eq.s32.totalorder %s19, 0
      %p65 = por %p63, %p64
      %p66 = scmp.ne.s32.totalorder %s55, %s58
      %p67 = scmp.eq.s32.totalorder %s24, 1
      %p68 = por %p66, %p67
      %p69 = scmp.ne.s32.totalorder %s58, %s59
      %p70 = scmp.eq.s32.totalorder %s24, 0
      %p71 = por %p69, %p70
      %p72 = scmp.ne.s32.totalorder %s58, %s59
      %p73 = scmp.eq.s32.totalorder %s25, 1
      %p74 = por %p72, %p73
      %p76 = scmp.ne.s32.totalorder %s59, %s75
      %p77 = scmp.eq.s32.totalorder %s25, 0
      %p78 = por %p76, %p77
      %s80 = sadd.s32 %s79, 1
      %p83 = scmp.eq.s32.totalorder %s19, 1
      %p84 = scmp.ne.s32.totalorder %s79, %s81
      %p85 = scmp.eq.s32.totalorder %s19, 0
      %p86 = por %p84, %p85
      %p87 = scmp.ne.s32.totalorder %s79, %s81
      %p88 = scmp.eq.s32.totalorder %s24, 1
      %p89 = por %p87, %p88
      %p90 = scmp.ne.s32.totalorder %s81, %s82
      %p91 = scmp.eq.s32.totalorder %s24, 0
      %p92 = por %p90, %p91
      %p93 = scmp.ne.s32.totalorder %s81, %s82
      %p94 = scmp.eq.s32.totalorder %s25, 1
      %p95 = por %p93, %p94
      %p97 = scmp.ne.s32.totalorder %s82, %s96
      %p98 = scmp.eq.s32.totalorder %s25, 0
      %p99 = por %p97, %p98
      %s101 = sadd.s32 %s100, 1
      %p104 = scmp.eq.s32.totalorder %s19, 1
      %p105 = scmp.ne.s32.totalorder %s100, %s102
      %p106 = scmp.eq.s32.totalorder %s19, 0
      %p107 = por %p105, %p106
      %p108 = scmp.ne.s32.totalorder %s100, %s102
      %p109 = scmp.eq.s32.totalorder %s24, 1
      %p110 = por %p108, %p109
      %p111 = scmp.ne.s32.totalorder %s102, %s103
      %p112 = scmp.eq.s32.totalorder %s24, 0
      %p113 = por %p111, %p112
      %p114 = scmp.ne.s32.totalorder %s102, %s103
      %p115 = scmp.eq.s32.totalorder %s25, 1
      %p116 = por %p114, %p115
      %p118 = scmp.ne.s32.totalorder %s103, %s117
      %p119 = scmp.eq.s32.totalorder %s25, 0
      %p120 = por %p118, %p119
      %s122 = sadd.s32 %s121, 1
      %p125 = scmp.eq.s32.totalorder %s19, 1
      %p126 = scmp.ne.s32.totalorder %s121, %s123
      %p127 = scmp.eq.s32.totalorder %s19, 0
      %p128 = por %p126, %p127
      %p129 = scmp.ne.s32.totalorder %s121, %s123
      %p130 = scmp.eq.s32.totalorder %s24, 1
      %p131 = por %p129, %p130
      %p132 = scmp.ne.s32.totalorder %s123, %s124
      %p133 = scmp.eq.s32.totalorder %s24, 0
      %p134 = por %p132, %p133
      %p135 = scmp.ne.s32.totalorder %s123, %s124
      %p136 = scmp.eq.s32.totalorder %s25, 1
      %p137 = por %p135, %p136
      %p139 = scmp.ne.s32.totalorder %s124, %s138
      %p140 = scmp.eq.s32.totalorder %s25, 0
      %p141 = por %p139, %p140
      %s143 = sadd.s32 %s142, 1
      %p146 = scmp.eq.s32.totalorder %s19, 1
      %p147 = scmp.ne.s32.totalorder %s142, %s144
      %p148 = scmp.eq.s32.totalorder %s19, 0
      %p149 = por %p147, %p148
      %p150 = scmp.ne.s32.totalorder %s142, %s144
      %p151 = scmp.eq.s32.totalorder %s24, 1
      %p152 = por %p150, %p151
      %p153 = scmp.ne.s32.totalorder %s144, %s145
      %p154 = scmp.eq.s32.totalorder %s24, 0
      %p155 = por %p153, %p154
      %p156 = scmp.ne.s32.totalorder %s144, %s145
      %p157 = scmp.eq.s32.totalorder %s25, 1
      %p158 = por %p156, %p157
      %p160 = scmp.ne.s32.totalorder %s145, %s159
      %p161 = scmp.eq.s32.totalorder %s25, 0
      %p162 = por %p160, %p161
      %s163 = ssub.s32 %s19, %s26
      %p164 = scmp.eq.s32.totalorder %s163, 0
      %s166 = sadd.s32 %s165, 1
      %s167 = scalar_select %p164, %s165, %s166
      %p170 = pneg %p164
      %p171 = scmp.eq.s32.totalorder %s19, 1
      %p172 = por %p170, %p171
      %p173 = scmp.ne.s32.totalorder %s165, %s168
      %p174 = scmp.eq.s32.totalorder %s19, 0
      %p175 = por %p173, %p174
      %p176 = scmp.ne.s32.totalorder %s165, %s168
      %p177 = scmp.eq.s32.totalorder %s24, 1
      %p178 = por %p176, %p177
      %p179 = scmp.ne.s32.totalorder %s168, %s169
      %p180 = scmp.eq.s32.totalorder %s24, 0
      %p181 = por %p179, %p180
      %p182 = scmp.ne.s32.totalorder %s168, %s169
      %p183 = scmp.eq.s32.totalorder %s25, 1
      %p184 = por %p182, %p183
      %p186 = scmp.ne.s32.totalorder %s169, %s185
      %p187 = scmp.eq.s32.totalorder %s25, 0
      %p188 = por %p186, %p187
      %p189 = scmp.le.s32.totalorder 1, %s19
      %p190 = scmp.lt.s32.totalorder %s19, 3
      %p191 = pnand %p189, %p190
      %p192 = pneg %p191
      // Predicated region
      $region9: #{qa_head_pallas.1} parent=5 // pred_check
        _
      $region10: #{qa_head_pallas.1} parent=5 // pred_check_branch
        %194 = sbr.rel (%p191) target = $region12
      $region11: #{qa_head_pallas.1} parent=5 // pred_region
        %s195 = ssub.s32 %s19, 1
        // Predicated region
        $region13: #{qa_head_pallas.1} parent=11 // pred_check
          %p196 = pneg %p92
        $region14: #{qa_head_pallas.1} parent=11 // pred_check_branch
          %198 = sbr.rel (%p196) target = $region16
        $region15: #{qa_head_pallas.1} parent=11 // pred_region
          %s200 = ssub.s32 65536, 65536
          %201 = vsyncadd [#allocation5], %s200
          %s202 = sshll.u32 [#allocation6], 4
          %s203 = int_to_ptr.vmem [resolvable:$true] %s202
          %208 = dma.hbm_to_vmem [thread:$0]  %s2, 65536, %s203, [#allocation5], 512, 512, 32
        $region16: #{qa_head_pallas.1} parent=11 // pred_fallthru
          _
        // Predicated region
        $region17: #{qa_head_pallas.1} parent=11 // pred_check
          %p209 = pneg %p113
        $region18: #{qa_head_pallas.1} parent=11 // pred_check_branch
          %211 = sbr.rel (%p209) target = $region20
        $region19: #{qa_head_pallas.1} parent=11 // pred_region
          %s213 = ssub.s32 128, 128
          %214 = vsyncadd [#allocation8], %s213
          %s216 = sshll.u32 [#allocation7], 4
          %s217 = int_to_ptr.vmem [resolvable:$true] %s216
          %219 = dma.hbm_to_vmem [thread:$0]  %s3, 128, %s217, [#allocation8]
        $region20: #{qa_head_pallas.1} parent=11 // pred_fallthru
          _
        // Predicated region
        $region21: #{qa_head_pallas.1} parent=11 // pred_check
          %p220 = pneg %p134
        $region22: #{qa_head_pallas.1} parent=11 // pred_check_branch
          %222 = sbr.rel (%p220) target = $region24
        $region23: #{qa_head_pallas.1} parent=11 // pred_region
          _
        $region24: #{qa_head_pallas.1} parent=11 // pred_fallthru
          _
        // Predicated region
        $region25: #{qa_head_pallas.1} parent=11 // pred_check
          %p223 = pneg %p155
        $region26: #{qa_head_pallas.1} parent=11 // pred_check_branch
          %225 = sbr.rel (%p223) target = $region28
        $region27: #{qa_head_pallas.1} parent=11 // pred_region
          %s227 = ssub.s32 16, 16
          %228 = vsyncadd [#allocation8], %s227
          %s230 = sshll.u32 [#allocation9], 4
          %s231 = int_to_ptr.vmem [resolvable:$true] %s230
          %233 = dma.hbm_to_vmem [thread:$0]  %s5, 16, %s231, [#allocation8]
        $region28: #{qa_head_pallas.1} parent=11 // pred_fallthru
          _
      $region12: #{qa_head_pallas.1} parent=5 // pred_fallthru
        _
      %p234 = scmp.lt.s32.totalorder %s19, 2
      // Predicated region
      $region29: #{qa_head_pallas.1} parent=5 // pred_check
        %p235 = pneg %p234
      $region30: #{qa_head_pallas.1} parent=5 // pred_check_branch
        %237 = sbr.rel (%p235) target = $region32
      $region31: #{qa_head_pallas.1} parent=5 // pred_region
        // Predicated region
        $region33: #{qa_head_pallas.1} parent=31 // pred_check
          %p238 = pneg %p39
        $region34: #{qa_head_pallas.1} parent=31 // pred_check_branch
          %240 = sbr.rel (%p238) target = $region36
        $region35: #{qa_head_pallas.1} parent=31 // pred_region
          %s241 = sand.u32 %s29, 1
          %s242 = scalar_lea.sflag [#allocation3], %s241
          %s243 = sand.u32 %s29, 1
          %s244 = smul.addr %s243, 64
          %s245 = scalar_lea.vmem [#allocation2], %s244
          %s247 = ssub.s32 1024, 1024
          %248 = vsyncadd %s242, %s247
          %s249 = smul.addr %s19, 8
          %s250 = smul.addr %s249, 128
          %s251 = scalar_lea.hbm %s0, %s250
          %s253 = sshll.u32 %s245, 4
          %s254 = int_to_ptr.vmem [resolvable:$true] %s253
          %256 = dma.hbm_to_vmem [thread:$0]  %s251, 1024, %s254, %s242
        $region36: #{qa_head_pallas.1} parent=31 // pred_fallthru
          _
        // Predicated region
        $region37: #{qa_head_pallas.1} parent=31 // pred_check
          %p257 = pneg %p65
        $region38: #{qa_head_pallas.1} parent=31 // pred_check_branch
          %259 = sbr.rel (%p257) target = $region40
        $region39: #{qa_head_pallas.1} parent=31 // pred_region
          %s260 = sand.u32 %s19, 1
          %s261 = scalar_lea.sflag [#allocation5], %s260
          %s262 = sand.u32 %s55, 1
          %s263 = scalar_lea.vmem [#allocation4], %s262
          %s265 = ssub.s32 16, 16
          %266 = vsyncadd %s261, %s265
          %s267 = smul.addr %s19, 16
          %s268 = scalar_lea.hbm %s1, %s267
          %s270 = sshll.u32 %s263, 4
          %s271 = int_to_ptr.vmem [resolvable:$true] %s270
          %273 = dma.hbm_to_vmem [thread:$0]  %s268, 16, %s271, %s261
        $region40: #{qa_head_pallas.1} parent=31 // pred_fallthru
          _
      $region32: #{qa_head_pallas.1} parent=5 // pred_fallthru
        _
      %p274 = scmp.le.s32.totalorder 1, %s19
      %p275 = scmp.lt.s32.totalorder %s19, 3
      %p276 = pnand %p274, %p275
      %p277 = pneg %p276
      // Predicated region
      $region41: #{qa_head_pallas.1} parent=5 // pred_check
        _
      $region42: #{qa_head_pallas.1} parent=5 // pred_check_branch
        %279 = sbr.rel (%p276) target = $region44
      $region43: #{qa_head_pallas.1} parent=5 // pred_region
        %s280 = ssub.s32 %s19, 1
        %s281 = sand.u32 %s32, 1
        %s282 = scalar_lea.sflag [#allocation3], %s281
        %s283 = sand.u32 %s32, 1
        %s284 = smul.addr %s283, 64
        %s285 = scalar_lea.vmem [#allocation2], %s284
        // Predicated region
        $region45: #{qa_head_pallas.1} parent=43 // pred_check
          %p286 = pneg %p45
        $region46: #{qa_head_pallas.1} parent=43 // pred_check_branch
          %288 = sbr.rel (%p286) target = $region48
        $region47: #{qa_head_pallas.1} parent=43 // pred_region
          %289 = dma.done %s282, 1024
        $region48: #{qa_head_pallas.1} parent=43 // pred_fallthru
          _
        %s290 = sand.u32 %s24, 1
        %s291 = scalar_lea.sflag [#allocation5], %s290
        %s292 = sand.u32 %s58, 1
        %s293 = scalar_lea.vmem [#allocation4], %s292
        // Predicated region
        $region49: #{qa_head_pallas.1} parent=43 // pred_check
          %p294 = pneg %p71
        $region50: #{qa_head_pallas.1} parent=43 // pred_check_branch
          %296 = sbr.rel (%p294) target = $region52
        $region51: #{qa_head_pallas.1} parent=43 // pred_region
          %297 = dma.done %s291, 16
        $region52: #{qa_head_pallas.1} parent=43 // pred_fallthru
          _
        // Predicated region
        $region53: #{qa_head_pallas.1} parent=43 // pred_check
          %p298 = pneg %p92
        $region54: #{qa_head_pallas.1} parent=43 // pred_check_branch
          %300 = sbr.rel (%p298) target = $region56
        $region55: #{qa_head_pallas.1} parent=43 // pred_region
          %301 = dma.done [#allocation5], 65536
        $region56: #{qa_head_pallas.1} parent=43 // pred_fallthru
          _
        // Predicated region
        $region57: #{qa_head_pallas.1} parent=43 // pred_check
          %p302 = pneg %p113
        $region58: #{qa_head_pallas.1} parent=43 // pred_check_branch
          %304 = sbr.rel (%p302) target = $region60
        $region59: #{qa_head_pallas.1} parent=43 // pred_region
          %305 = dma.done [#allocation8], 128
        $region60: #{qa_head_pallas.1} parent=43 // pred_fallthru
          _
        // Predicated region
        $region61: #{qa_head_pallas.1} parent=43 // pred_check
          %p306 = pneg %p155
        $region62: #{qa_head_pallas.1} parent=43 // pred_check_branch
          %308 = sbr.rel (%p306) target = $region64
        $region63: #{qa_head_pallas.1} parent=43 // pred_region
          %309 = dma.done [#allocation8], 16
        $region64: #{qa_head_pallas.1} parent=43 // pred_fallthru
          _
        %s310 = sand.u32 %s32, 1
        %s311 = scalar_lea.sflag [#allocation3], %s310
        %s312 = sand.u32 %s32, 1
        %s313 = smul.addr %s312, 64
        %s314 = scalar_lea.vmem [#allocation2], %s313
        %p315 = pneg %p45
        %p316 = pneg %p42
        %s317 = sand.u32 %s24, 1
        %s318 = scalar_lea.sflag [#allocation5], %s317
        %s319 = sand.u32 %s58, 1
        %s320 = scalar_lea.vmem [#allocation4], %s319
        %p321 = pneg %p71
        %p322 = pneg %p68
        %p323 = pneg %p92
        %p324 = pneg %p89
        %p325 = pneg %p113
        %p326 = pneg %p110
        %p327 = pneg %p134
        %p328 = pneg %p131
        %p329 = pneg %p155
        %p330 = pneg %p152
        %p331 = pneg %p181
        %p332 = pneg %p178
        %p333 = scmp.lt.s32.totalorder %s24, 1
        %s334 = scalar_select %p333, %s24, 1
        %s335 = smul.addr %s334, 2
        %s336 = scalar_lea.vmem %s6, %s335
        %p337 = scmp.lt.s32.totalorder %s24, 1
        %s338 = scalar_select %p337, %s24, 1
        %s339 = smul.addr %s338, 2
        %s340 = scalar_lea.vmem %s6, %s339
        %v342 = vld [vmem:[%s285] sm:$0xff]
        %v343 = vld [vmem:[%s285 + $0x8] sm:$0xff]
        %v344 = vld [vmem:[%s285 + $0x10] sm:$0xff]
        %v345 = vld [vmem:[%s285 + $0x18] sm:$0xff]
        %v346 = vld [vmem:[%s285 + $0x20] sm:$0xff]
        %v347 = vld [vmem:[%s285 + $0x28] sm:$0xff]
        %v348 = vld [vmem:[%s285 + $0x30] sm:$0xff]
        %v349 = vld [vmem:[%s285 + $0x38] sm:$0xff]
        %v350 = vpack.c.bf16 %v342, %v342
        %v351 = vpack.c.bf16 %v343, %v343
        %v352 = vpack.c.bf16 %v344, %v344
        %v353 = vpack.c.bf16 %v345, %v345
        %v354 = vpack.c.bf16 %v346, %v346
        %v355 = vpack.c.bf16 %v347, %v347
        %v356 = vpack.c.bf16 %v348, %v348
        %v357 = vpack.c.bf16 %v349, %v349
        %v358 = vld [vmem:[#allocation6] sm:$0xff]
        %v359 = vld [vmem:[#allocation6 + $0x8] sm:$0xff]
        %v360 = vld [vmem:[#allocation6 + $0x10] sm:$0xff]
        %v361 = vld [vmem:[#allocation6 + $0x18] sm:$0xff]
        %v362 = vld [vmem:[#allocation6 + $0x20] sm:$0xff]
        %v363 = vld [vmem:[#allocation6 + $0x28] sm:$0xff]
        %v364 = vld [vmem:[#allocation6 + $0x30] sm:$0xff]
        %v365 = vld [vmem:[#allocation6 + $0x38] sm:$0xff]
        %v366 = vld [vmem:[#allocation6 + $0x40] sm:$0xff]
        %v367 = vld [vmem:[#allocation6 + $0x48] sm:$0xff]
        %v368 = vld [vmem:[#allocation6 + $0x50] sm:$0xff]
        %v369 = vld [vmem:[#allocation6 + $0x58] sm:$0xff]
        %v370 = vld [vmem:[#allocation6 + $0x60] sm:$0xff]
        %v371 = vld [vmem:[#allocation6 + $0x68] sm:$0xff]
        %v372 = vld [vmem:[#allocation6 + $0x70] sm:$0xff]
        %v373 = vld [vmem:[#allocation6 + $0x78] sm:$0xff]
        %v374 = vld [vmem:[#allocation6 + $0x80] sm:$0xff]
        %v375 = vld [vmem:[#allocation6 + $0x88] sm:$0xff]
        %v376 = vld [vmem:[#allocation6 + $0x90] sm:$0xff]
        %v377 = vld [vmem:[#allocation6 + $0x98] sm:$0xff]
        %v378 = vld [vmem:[#allocation6 + $0xa0] sm:$0xff]
        %v379 = vld [vmem:[#allocation6 + $0xa8] sm:$0xff]
        %v380 = vld [vmem:[#allocation6 + $0xb0] sm:$0xff]
        %v381 = vld [vmem:[#allocation6 + $0xb8] sm:$0xff]
        %v382 = vld [vmem:[#allocation6 + $0xc0] sm:$0xff]
        %v383 = vld [vmem:[#allocation6 + $0xc8] sm:$0xff]
        %v384 = vld [vmem:[#allocation6 + $0xd0] sm:$0xff]
        %v385 = vld [vmem:[#allocation6 + $0xd8] sm:$0xff]
        %v386 = vld [vmem:[#allocation6 + $0xe0] sm:$0xff]
        %v387 = vld [vmem:[#allocation6 + $0xe8] sm:$0xff]
        %v388 = vld [vmem:[#allocation6 + $0xf0] sm:$0xff]
        %v389 = vld [vmem:[#allocation6 + $0xf8] sm:$0xff]
        %v390 = vld [vmem:[#allocation6 + $0x100] sm:$0xff]
        %v391 = vld [vmem:[#allocation6 + $0x108] sm:$0xff]
        %v392 = vld [vmem:[#allocation6 + $0x110] sm:$0xff]
        %v393 = vld [vmem:[#allocation6 + $0x118] sm:$0xff]
        %v394 = vld [vmem:[#allocation6 + $0x120] sm:$0xff]
        %v395 = vld [vmem:[#allocation6 + $0x128] sm:$0xff]
        %v396 = vld [vmem:[#allocation6 + $0x130] sm:$0xff]
        %v397 = vld [vmem:[#allocation6 + $0x138] sm:$0xff]
        %v398 = vld [vmem:[#allocation6 + $0x140] sm:$0xff]
        %v399 = vld [vmem:[#allocation6 + $0x148] sm:$0xff]
        %v400 = vld [vmem:[#allocation6 + $0x150] sm:$0xff]
        %v401 = vld [vmem:[#allocation6 + $0x158] sm:$0xff]
        %v402 = vld [vmem:[#allocation6 + $0x160] sm:$0xff]
        %v403 = vld [vmem:[#allocation6 + $0x168] sm:$0xff]
        %v404 = vld [vmem:[#allocation6 + $0x170] sm:$0xff]
        %v405 = vld [vmem:[#allocation6 + $0x178] sm:$0xff]
        %v406 = vld [vmem:[#allocation6 + $0x180] sm:$0xff]
        %v407 = vld [vmem:[#allocation6 + $0x188] sm:$0xff]
        %v408 = vld [vmem:[#allocation6 + $0x190] sm:$0xff]
        %v409 = vld [vmem:[#allocation6 + $0x198] sm:$0xff]
        %v410 = vld [vmem:[#allocation6 + $0x1a0] sm:$0xff]
        %v411 = vld [vmem:[#allocation6 + $0x1a8] sm:$0xff]
        %v412 = vld [vmem:[#allocation6 + $0x1b0] sm:$0xff]
        %v413 = vld [vmem:[#allocation6 + $0x1b8] sm:$0xff]
        %v414 = vld [vmem:[#allocation6 + $0x1c0] sm:$0xff]
        %v415 = vld [vmem:[#allocation6 + $0x1c8] sm:$0xff]
        %v416 = vld [vmem:[#allocation6 + $0x1d0] sm:$0xff]
        %v417 = vld [vmem:[#allocation6 + $0x1d8] sm:$0xff]
        %v418 = vld [vmem:[#allocation6 + $0x1e0] sm:$0xff]
        %v419 = vld [vmem:[#allocation6 + $0x1e8] sm:$0xff]
        %v420 = vld [vmem:[#allocation6 + $0x1f0] sm:$0xff]
        %v421 = vld [vmem:[#allocation6 + $0x1f8] sm:$0xff]
        %v422 = vld [vmem:[#allocation6 + $0x200] sm:$0xff]
        %v423 = vld [vmem:[#allocation6 + $0x208] sm:$0xff]
        %v424 = vld [vmem:[#allocation6 + $0x210] sm:$0xff]
        %v425 = vld [vmem:[#allocation6 + $0x218] sm:$0xff]
        %v426 = vld [vmem:[#allocation6 + $0x220] sm:$0xff]
        %v427 = vld [vmem:[#allocation6 + $0x228] sm:$0xff]
        %v428 = vld [vmem:[#allocation6 + $0x230] sm:$0xff]
        %v429 = vld [vmem:[#allocation6 + $0x238] sm:$0xff]
        %v430 = vld [vmem:[#allocation6 + $0x240] sm:$0xff]
        %v431 = vld [vmem:[#allocation6 + $0x248] sm:$0xff]
        %v432 = vld [vmem:[#allocation6 + $0x250] sm:$0xff]
        %v433 = vld [vmem:[#allocation6 + $0x258] sm:$0xff]
        %v434 = vld [vmem:[#allocation6 + $0x260] sm:$0xff]
        %v435 = vld [vmem:[#allocation6 + $0x268] sm:$0xff]
        %v436 = vld [vmem:[#allocation6 + $0x270] sm:$0xff]
        %v437 = vld [vmem:[#allocation6 + $0x278] sm:$0xff]
        %v438 = vld [vmem:[#allocation6 + $0x280] sm:$0xff]
        %v439 = vld [vmem:[#allocation6 + $0x288] sm:$0xff]
        %v440 = vld [vmem:[#allocation6 + $0x290] sm:$0xff]
        %v441 = vld [vmem:[#allocation6 + $0x298] sm:$0xff]
        %v442 = vld [vmem:[#allocation6 + $0x2a0] sm:$0xff]
        %v443 = vld [vmem:[#allocation6 + $0x2a8] sm:$0xff]
        %v444 = vld [vmem:[#allocation6 + $0x2b0] sm:$0xff]
        %v445 = vld [vmem:[#allocation6 + $0x2b8] sm:$0xff]
        %v446 = vld [vmem:[#allocation6 + $0x2c0] sm:$0xff]
        %v447 = vld [vmem:[#allocation6 + $0x2c8] sm:$0xff]
        %v448 = vld [vmem:[#allocation6 + $0x2d0] sm:$0xff]
        %v449 = vld [vmem:[#allocation6 + $0x2d8] sm:$0xff]
        %v450 = vld [vmem:[#allocation6 + $0x2e0] sm:$0xff]
        %v451 = vld [vmem:[#allocation6 + $0x2e8] sm:$0xff]
        %v452 = vld [vmem:[#allocation6 + $0x2f0] sm:$0xff]
        %v453 = vld [vmem:[#allocation6 + $0x2f8] sm:$0xff]
        %v454 = vld [vmem:[#allocation6 + $0x300] sm:$0xff]
        %v455 = vld [vmem:[#allocation6 + $0x308] sm:$0xff]
        %v456 = vld [vmem:[#allocation6 + $0x310] sm:$0xff]
        %v457 = vld [vmem:[#allocation6 + $0x318] sm:$0xff]
        %v458 = vld [vmem:[#allocation6 + $0x320] sm:$0xff]
        %v459 = vld [vmem:[#allocation6 + $0x328] sm:$0xff]
        %v460 = vld [vmem:[#allocation6 + $0x330] sm:$0xff]
        %v461 = vld [vmem:[#allocation6 + $0x338] sm:$0xff]
        %v462 = vld [vmem:[#allocation6 + $0x340] sm:$0xff]
        %v463 = vld [vmem:[#allocation6 + $0x348] sm:$0xff]
        %v464 = vld [vmem:[#allocation6 + $0x350] sm:$0xff]
        %v465 = vld [vmem:[#allocation6 + $0x358] sm:$0xff]
        %v466 = vld [vmem:[#allocation6 + $0x360] sm:$0xff]
        %v467 = vld [vmem:[#allocation6 + $0x368] sm:$0xff]
        %v468 = vld [vmem:[#allocation6 + $0x370] sm:$0xff]
        %v469 = vld [vmem:[#allocation6 + $0x378] sm:$0xff]
        %v470 = vld [vmem:[#allocation6 + $0x380] sm:$0xff]
        %v471 = vld [vmem:[#allocation6 + $0x388] sm:$0xff]
        %v472 = vld [vmem:[#allocation6 + $0x390] sm:$0xff]
        %v473 = vld [vmem:[#allocation6 + $0x398] sm:$0xff]
        %v474 = vld [vmem:[#allocation6 + $0x3a0] sm:$0xff]
        %v475 = vld [vmem:[#allocation6 + $0x3a8] sm:$0xff]
        %v476 = vld [vmem:[#allocation6 + $0x3b0] sm:$0xff]
        %v477 = vld [vmem:[#allocation6 + $0x3b8] sm:$0xff]
        %v478 = vld [vmem:[#allocation6 + $0x3c0] sm:$0xff]
        %v479 = vld [vmem:[#allocation6 + $0x3c8] sm:$0xff]
        %v480 = vld [vmem:[#allocation6 + $0x3d0] sm:$0xff]
        %v481 = vld [vmem:[#allocation6 + $0x3d8] sm:$0xff]
        %v482 = vld [vmem:[#allocation6 + $0x3e0] sm:$0xff]
        %v483 = vld [vmem:[#allocation6 + $0x3e8] sm:$0xff]
        %v484 = vld [vmem:[#allocation6 + $0x3f0] sm:$0xff]
        %v485 = vld [vmem:[#allocation6 + $0x3f8] sm:$0xff]
        %v486 = vld [vmem:[#allocation6 + $0x400] sm:$0xff]
        %v487 = vld [vmem:[#allocation6 + $0x408] sm:$0xff]
        %v488 = vld [vmem:[#allocation6 + $0x410] sm:$0xff]
        %v489 = vld [vmem:[#allocation6 + $0x418] sm:$0xff]
        %v490 = vld [vmem:[#allocation6 + $0x420] sm:$0xff]
        %v491 = vld [vmem:[#allocation6 + $0x428] sm:$0xff]
        %v492 = vld [vmem:[#allocation6 + $0x430] sm:$0xff]
        %v493 = vld [vmem:[#allocation6 + $0x438] sm:$0xff]
        %v494 = vld [vmem:[#allocation6 + $0x440] sm:$0xff]
        %v495 = vld [vmem:[#allocation6 + $0x448] sm:$0xff]
        %v496 = vld [vmem:[#allocation6 + $0x450] sm:$0xff]
        %v497 = vld [vmem:[#allocation6 + $0x458] sm:$0xff]
        %v498 = vld [vmem:[#allocation6 + $0x460] sm:$0xff]
        %v499 = vld [vmem:[#allocation6 + $0x468] sm:$0xff]
        %v500 = vld [vmem:[#allocation6 + $0x470] sm:$0xff]
        %v501 = vld [vmem:[#allocation6 + $0x478] sm:$0xff]
        %v502 = vld [vmem:[#allocation6 + $0x480] sm:$0xff]
        %v503 = vld [vmem:[#allocation6 + $0x488] sm:$0xff]
        %v504 = vld [vmem:[#allocation6 + $0x490] sm:$0xff]
        %v505 = vld [vmem:[#allocation6 + $0x498] sm:$0xff]
        %v506 = vld [vmem:[#allocation6 + $0x4a0] sm:$0xff]
        %v507 = vld [vmem:[#allocation6 + $0x4a8] sm:$0xff]
        %v508 = vld [vmem:[#allocation6 + $0x4b0] sm:$0xff]
        %v509 = vld [vmem:[#allocation6 + $0x4b8] sm:$0xff]
        %v510 = vld [vmem:[#allocation6 + $0x4c0] sm:$0xff]
        %v511 = vld [vmem:[#allocation6 + $0x4c8] sm:$0xff]
        %v512 = vld [vmem:[#allocation6 + $0x4d0] sm:$0xff]
        %v513 = vld [vmem:[#allocation6 + $0x4d8] sm:$0xff]
        %v514 = vld [vmem:[#allocation6 + $0x4e0] sm:$0xff]
        %v515 = vld [vmem:[#allocation6 + $0x4e8] sm:$0xff]
        %v516 = vld [vmem:[#allocation6 + $0x4f0] sm:$0xff]
        %v517 = vld [vmem:[#allocation6 + $0x4f8] sm:$0xff]
        %v518 = vld [vmem:[#allocation6 + $0x500] sm:$0xff]
        %v519 = vld [vmem:[#allocation6 + $0x508] sm:$0xff]
        %v520 = vld [vmem:[#allocation6 + $0x510] sm:$0xff]
        %v521 = vld [vmem:[#allocation6 + $0x518] sm:$0xff]
        %v522 = vld [vmem:[#allocation6 + $0x520] sm:$0xff]
        %v523 = vld [vmem:[#allocation6 + $0x528] sm:$0xff]
        %v524 = vld [vmem:[#allocation6 + $0x530] sm:$0xff]
        %v525 = vld [vmem:[#allocation6 + $0x538] sm:$0xff]
        %v526 = vld [vmem:[#allocation6 + $0x540] sm:$0xff]
        %v527 = vld [vmem:[#allocation6 + $0x548] sm:$0xff]
        %v528 = vld [vmem:[#allocation6 + $0x550] sm:$0xff]
        %v529 = vld [vmem:[#allocation6 + $0x558] sm:$0xff]
        %v530 = vld [vmem:[#allocation6 + $0x560] sm:$0xff]
        %v531 = vld [vmem:[#allocation6 + $0x568] sm:$0xff]
        %v532 = vld [vmem:[#allocation6 + $0x570] sm:$0xff]
        %v533 = vld [vmem:[#allocation6 + $0x578] sm:$0xff]
        %v534 = vld [vmem:[#allocation6 + $0x580] sm:$0xff]
        %v535 = vld [vmem:[#allocation6 + $0x588] sm:$0xff]
        %v536 = vld [vmem:[#allocation6 + $0x590] sm:$0xff]
        %v537 = vld [vmem:[#allocation6 + $0x598] sm:$0xff]
        %v538 = vld [vmem:[#allocation6 + $0x5a0] sm:$0xff]
        %v539 = vld [vmem:[#allocation6 + $0x5a8] sm:$0xff]
        %v540 = vld [vmem:[#allocation6 + $0x5b0] sm:$0xff]
        %v541 = vld [vmem:[#allocation6 + $0x5b8] sm:$0xff]
        %v542 = vld [vmem:[#allocation6 + $0x5c0] sm:$0xff]
        %v543 = vld [vmem:[#allocation6 + $0x5c8] sm:$0xff]
        %v544 = vld [vmem:[#allocation6 + $0x5d0] sm:$0xff]
        %v545 = vld [vmem:[#allocation6 + $0x5d8] sm:$0xff]
        %v546 = vld [vmem:[#allocation6 + $0x5e0] sm:$0xff]
        %v547 = vld [vmem:[#allocation6 + $0x5e8] sm:$0xff]
        %v548 = vld [vmem:[#allocation6 + $0x5f0] sm:$0xff]
        %v549 = vld [vmem:[#allocation6 + $0x5f8] sm:$0xff]
        %v550 = vld [vmem:[#allocation6 + $0x600] sm:$0xff]
        %v551 = vld [vmem:[#allocation6 + $0x608] sm:$0xff]
        %v552 = vld [vmem:[#allocation6 + $0x610] sm:$0xff]
        %v553 = vld [vmem:[#allocation6 + $0x618] sm:$0xff]
        %v554 = vld [vmem:[#allocation6 + $0x620] sm:$0xff]
        %v555 = vld [vmem:[#allocation6 + $0x628] sm:$0xff]
        %v556 = vld [vmem:[#allocation6 + $0x630] sm:$0xff]
        %v557 = vld [vmem:[#allocation6 + $0x638] sm:$0xff]
        %v558 = vld [vmem:[#allocation6 + $0x640] sm:$0xff]
        %v559 = vld [vmem:[#allocation6 + $0x648] sm:$0xff]
        %v560 = vld [vmem:[#allocation6 + $0x650] sm:$0xff]
        %v561 = vld [vmem:[#allocation6 + $0x658] sm:$0xff]
        %v562 = vld [vmem:[#allocation6 + $0x660] sm:$0xff]
        %v563 = vld [vmem:[#allocation6 + $0x668] sm:$0xff]
        %v564 = vld [vmem:[#allocation6 + $0x670] sm:$0xff]
        %v565 = vld [vmem:[#allocation6 + $0x678] sm:$0xff]
        %v566 = vld [vmem:[#allocation6 + $0x680] sm:$0xff]
        %v567 = vld [vmem:[#allocation6 + $0x688] sm:$0xff]
        %v568 = vld [vmem:[#allocation6 + $0x690] sm:$0xff]
        %v569 = vld [vmem:[#allocation6 + $0x698] sm:$0xff]
        %v570 = vld [vmem:[#allocation6 + $0x6a0] sm:$0xff]
        %v571 = vld [vmem:[#allocation6 + $0x6a8] sm:$0xff]
        %v572 = vld [vmem:[#allocation6 + $0x6b0] sm:$0xff]
        %v573 = vld [vmem:[#allocation6 + $0x6b8] sm:$0xff]
        %v574 = vld [vmem:[#allocation6 + $0x6c0] sm:$0xff]
        %v575 = vld [vmem:[#allocation6 + $0x6c8] sm:$0xff]
        %v576 = vld [vmem:[#allocation6 + $0x6d0] sm:$0xff]
        %v577 = vld [vmem:[#allocation6 + $0x6d8] sm:$0xff]
        %v578 = vld [vmem:[#allocation6 + $0x6e0] sm:$0xff]
        %v579 = vld [vmem:[#allocation6 + $0x6e8] sm:$0xff]
        %v580 = vld [vmem:[#allocation6 + $0x6f0] sm:$0xff]
        %v581 = vld [vmem:[#allocation6 + $0x6f8] sm:$0xff]
        %v582 = vld [vmem:[#allocation6 + $0x700] sm:$0xff]
        %v583 = vld [vmem:[#allocation6 + $0x708] sm:$0xff]
        %v584 = vld [vmem:[#allocation6 + $0x710] sm:$0xff]
        %v585 = vld [vmem:[#allocation6 + $0x718] sm:$0xff]
        %v586 = vld [vmem:[#allocation6 + $0x720] sm:$0xff]
        %v587 = vld [vmem:[#allocation6 + $0x728] sm:$0xff]
        %v588 = vld [vmem:[#allocation6 + $0x730] sm:$0xff]
        %v589 = vld [vmem:[#allocation6 + $0x738] sm:$0xff]
        %v590 = vld [vmem:[#allocation6 + $0x740] sm:$0xff]
        %v591 = vld [vmem:[#allocation6 + $0x748] sm:$0xff]
        %v592 = vld [vmem:[#allocation6 + $0x750] sm:$0xff]
        %v593 = vld [vmem:[#allocation6 + $0x758] sm:$0xff]
        %v594 = vld [vmem:[#allocation6 + $0x760] sm:$0xff]
        %v595 = vld [vmem:[#allocation6 + $0x768] sm:$0xff]
        %v596 = vld [vmem:[#allocation6 + $0x770] sm:$0xff]
        %v597 = vld [vmem:[#allocation6 + $0x778] sm:$0xff]
        %v598 = vld [vmem:[#allocation6 + $0x780] sm:$0xff]
        %v599 = vld [vmem:[#allocation6 + $0x788] sm:$0xff]
        %v600 = vld [vmem:[#allocation6 + $0x790] sm:$0xff]
        %v601 = vld [vmem:[#allocation6 + $0x798] sm:$0xff]
        %v602 = vld [vmem:[#allocation6 + $0x7a0] sm:$0xff]
        %v603 = vld [vmem:[#allocation6 + $0x7a8] sm:$0xff]
        %v604 = vld [vmem:[#allocation6 + $0x7b0] sm:$0xff]
        %v605 = vld [vmem:[#allocation6 + $0x7b8] sm:$0xff]
        %v606 = vld [vmem:[#allocation6 + $0x7c0] sm:$0xff]
        %v607 = vld [vmem:[#allocation6 + $0x7c8] sm:$0xff]
        %v608 = vld [vmem:[#allocation6 + $0x7d0] sm:$0xff]
        %v609 = vld [vmem:[#allocation6 + $0x7d8] sm:$0xff]
        %v610 = vld [vmem:[#allocation6 + $0x7e0] sm:$0xff]
        %v611 = vld [vmem:[#allocation6 + $0x7e8] sm:$0xff]
        %v612 = vld [vmem:[#allocation6 + $0x7f0] sm:$0xff]
        %v613 = vld [vmem:[#allocation6 + $0x7f8] sm:$0xff]
        %v614 = vld [vmem:[#allocation6 + $0x800] sm:$0xff]
        %v615 = vld [vmem:[#allocation6 + $0x808] sm:$0xff]
        %v616 = vld [vmem:[#allocation6 + $0x810] sm:$0xff]
        %v617 = vld [vmem:[#allocation6 + $0x818] sm:$0xff]
        %v618 = vld [vmem:[#allocation6 + $0x820] sm:$0xff]
        %v619 = vld [vmem:[#allocation6 + $0x828] sm:$0xff]
        %v620 = vld [vmem:[#allocation6 + $0x830] sm:$0xff]
        %v621 = vld [vmem:[#allocation6 + $0x838] sm:$0xff]
        %v622 = vld [vmem:[#allocation6 + $0x840] sm:$0xff]
        %v623 = vld [vmem:[#allocation6 + $0x848] sm:$0xff]
        %v624 = vld [vmem:[#allocation6 + $0x850] sm:$0xff]
        %v625 = vld [vmem:[#allocation6 + $0x858] sm:$0xff]
        %v626 = vld [vmem:[#allocation6 + $0x860] sm:$0xff]
        %v627 = vld [vmem:[#allocation6 + $0x868] sm:$0xff]
        %v628 = vld [vmem:[#allocation6 + $0x870] sm:$0xff]
        %v629 = vld [vmem:[#allocation6 + $0x878] sm:$0xff]
        %v630 = vld [vmem:[#allocation6 + $0x880] sm:$0xff]
        %v631 = vld [vmem:[#allocation6 + $0x888] sm:$0xff]
        %v632 = vld [vmem:[#allocation6 + $0x890] sm:$0xff]
        %v633 = vld [vmem:[#allocation6 + $0x898] sm:$0xff]
        %v634 = vld [vmem:[#allocation6 + $0x8a0] sm:$0xff]
        %v635 = vld [vmem:[#allocation6 + $0x8a8] sm:$0xff]
        %v636 = vld [vmem:[#allocation6 + $0x8b0] sm:$0xff]
        %v637 = vld [vmem:[#allocation6 + $0x8b8] sm:$0xff]
        %v638 = vld [vmem:[#allocation6 + $0x8c0] sm:$0xff]
        %v639 = vld [vmem:[#allocation6 + $0x8c8] sm:$0xff]
        %v640 = vld [vmem:[#allocation6 + $0x8d0] sm:$0xff]
        %v641 = vld [vmem:[#allocation6 + $0x8d8] sm:$0xff]
        %v642 = vld [vmem:[#allocation6 + $0x8e0] sm:$0xff]
        %v643 = vld [vmem:[#allocation6 + $0x8e8] sm:$0xff]
        %v644 = vld [vmem:[#allocation6 + $0x8f0] sm:$0xff]
        %v645 = vld [vmem:[#allocation6 + $0x8f8] sm:$0xff]
        %v646 = vld [vmem:[#allocation6 + $0x900] sm:$0xff]
        %v647 = vld [vmem:[#allocation6 + $0x908] sm:$0xff]
        %v648 = vld [vmem:[#allocation6 + $0x910] sm:$0xff]
        %v649 = vld [vmem:[#allocation6 + $0x918] sm:$0xff]
        %v650 = vld [vmem:[#allocation6 + $0x920] sm:$0xff]
        %v651 = vld [vmem:[#allocation6 + $0x928] sm:$0xff]
        %v652 = vld [vmem:[#allocation6 + $0x930] sm:$0xff]
        %v653 = vld [vmem:[#allocation6 + $0x938] sm:$0xff]
        %v654 = vld [vmem:[#allocation6 + $0x940] sm:$0xff]
        %v655 = vld [vmem:[#allocation6 + $0x948] sm:$0xff]
        %v656 = vld [vmem:[#allocation6 + $0x950] sm:$0xff]
        %v657 = vld [vmem:[#allocation6 + $0x958] sm:$0xff]
        %v658 = vld [vmem:[#allocation6 + $0x960] sm:$0xff]
        %v659 = vld [vmem:[#allocation6 + $0x968] sm:$0xff]
        %v660 = vld [vmem:[#allocation6 + $0x970] sm:$0xff]
        %v661 = vld [vmem:[#allocation6 + $0x978] sm:$0xff]
        %v662 = vld [vmem:[#allocation6 + $0x980] sm:$0xff]
        %v663 = vld [vmem:[#allocation6 + $0x988] sm:$0xff]
        %v664 = vld [vmem:[#allocation6 + $0x990] sm:$0xff]
        %v665 = vld [vmem:[#allocation6 + $0x998] sm:$0xff]
        %v666 = vld [vmem:[#allocation6 + $0x9a0] sm:$0xff]
        %v667 = vld [vmem:[#allocation6 + $0x9a8] sm:$0xff]
        %v668 = vld [vmem:[#allocation6 + $0x9b0] sm:$0xff]
        %v669 = vld [vmem:[#allocation6 + $0x9b8] sm:$0xff]
        %v670 = vld [vmem:[#allocation6 + $0x9c0] sm:$0xff]
        %v671 = vld [vmem:[#allocation6 + $0x9c8] sm:$0xff]
        %v672 = vld [vmem:[#allocation6 + $0x9d0] sm:$0xff]
        %v673 = vld [vmem:[#allocation6 + $0x9d8] sm:$0xff]
        %v674 = vld [vmem:[#allocation6 + $0x9e0] sm:$0xff]
        %v675 = vld [vmem:[#allocation6 + $0x9e8] sm:$0xff]
        %v676 = vld [vmem:[#allocation6 + $0x9f0] sm:$0xff]
        %v677 = vld [vmem:[#allocation6 + $0x9f8] sm:$0xff]
        %v678 = vld [vmem:[#allocation6 + $0xa00] sm:$0xff]
        %v679 = vld [vmem:[#allocation6 + $0xa08] sm:$0xff]
        %v680 = vld [vmem:[#allocation6 + $0xa10] sm:$0xff]
        %v681 = vld [vmem:[#allocation6 + $0xa18] sm:$0xff]
        %v682 = vld [vmem:[#allocation6 + $0xa20] sm:$0xff]
        %v683 = vld [vmem:[#allocation6 + $0xa28] sm:$0xff]
        %v684 = vld [vmem:[#allocation6 + $0xa30] sm:$0xff]
        %v685 = vld [vmem:[#allocation6 + $0xa38] sm:$0xff]
        %v686 = vld [vmem:[#allocation6 + $0xa40] sm:$0xff]
        %v687 = vld [vmem:[#allocation6 + $0xa48] sm:$0xff]
        %v688 = vld [vmem:[#allocation6 + $0xa50] sm:$0xff]
        %v689 = vld [vmem:[#allocation6 + $0xa58] sm:$0xff]
        %v690 = vld [vmem:[#allocation6 + $0xa60] sm:$0xff]
        %v691 = vld [vmem:[#allocation6 + $0xa68] sm:$0xff]
        %v692 = vld [vmem:[#allocation6 + $0xa70] sm:$0xff]
        %v693 = vld [vmem:[#allocation6 + $0xa78] sm:$0xff]
        %v694 = vld [vmem:[#allocation6 + $0xa80] sm:$0xff]
        %v695 = vld [vmem:[#allocation6 + $0xa88] sm:$0xff]
        %v696 = vld [vmem:[#allocation6 + $0xa90] sm:$0xff]
        %v697 = vld [vmem:[#allocation6 + $0xa98] sm:$0xff]
        %v698 = vld [vmem:[#allocation6 + $0xaa0] sm:$0xff]
        %v699 = vld [vmem:[#allocation6 + $0xaa8] sm:$0xff]
        %v700 = vld [vmem:[#allocation6 + $0xab0] sm:$0xff]
        %v701 = vld [vmem:[#allocation6 + $0xab8] sm:$0xff]
        %v702 = vld [vmem:[#allocation6 + $0xac0] sm:$0xff]
        %v703 = vld [vmem:[#allocation6 + $0xac8] sm:$0xff]
        %v704 = vld [vmem:[#allocation6 + $0xad0] sm:$0xff]
        %v705 = vld [vmem:[#allocation6 + $0xad8] sm:$0xff]
        %v706 = vld [vmem:[#allocation6 + $0xae0] sm:$0xff]
        %v707 = vld [vmem:[#allocation6 + $0xae8] sm:$0xff]
        %v708 = vld [vmem:[#allocation6 + $0xaf0] sm:$0xff]
        %v709 = vld [vmem:[#allocation6 + $0xaf8] sm:$0xff]
        %v710 = vld [vmem:[#allocation6 + $0xb00] sm:$0xff]
        %v711 = vld [vmem:[#allocation6 + $0xb08] sm:$0xff]
        %v712 = vld [vmem:[#allocation6 + $0xb10] sm:$0xff]
        %v713 = vld [vmem:[#allocation6 + $0xb18] sm:$0xff]
        %v714 = vld [vmem:[#allocation6 + $0xb20] sm:$0xff]
        %v715 = vld [vmem:[#allocation6 + $0xb28] sm:$0xff]
        %v716 = vld [vmem:[#allocation6 + $0xb30] sm:$0xff]
        %v717 = vld [vmem:[#allocation6 + $0xb38] sm:$0xff]
        %v718 = vld [vmem:[#allocation6 + $0xb40] sm:$0xff]
        %v719 = vld [vmem:[#allocation6 + $0xb48] sm:$0xff]
        %v720 = vld [vmem:[#allocation6 + $0xb50] sm:$0xff]
        %v721 = vld [vmem:[#allocation6 + $0xb58] sm:$0xff]
        %v722 = vld [vmem:[#allocation6 + $0xb60] sm:$0xff]
        %v723 = vld [vmem:[#allocation6 + $0xb68] sm:$0xff]
        %v724 = vld [vmem:[#allocation6 + $0xb70] sm:$0xff]
        %v725 = vld [vmem:[#allocation6 + $0xb78] sm:$0xff]
        %v726 = vld [vmem:[#allocation6 + $0xb80] sm:$0xff]
        %v727 = vld [vmem:[#allocation6 + $0xb88] sm:$0xff]
        %v728 = vld [vmem:[#allocation6 + $0xb90] sm:$0xff]
        %v729 = vld [vmem:[#allocation6 + $0xb98] sm:$0xff]
        %v730 = vld [vmem:[#allocation6 + $0xba0] sm:$0xff]
        %v731 = vld [vmem:[#allocation6 + $0xba8] sm:$0xff]
        %v732 = vld [vmem:[#allocation6 + $0xbb0] sm:$0xff]
        %v733 = vld [vmem:[#allocation6 + $0xbb8] sm:$0xff]
        %v734 = vld [vmem:[#allocation6 + $0xbc0] sm:$0xff]
        %v735 = vld [vmem:[#allocation6 + $0xbc8] sm:$0xff]
        %v736 = vld [vmem:[#allocation6 + $0xbd0] sm:$0xff]
        %v737 = vld [vmem:[#allocation6 + $0xbd8] sm:$0xff]
        %v738 = vld [vmem:[#allocation6 + $0xbe0] sm:$0xff]
        %v739 = vld [vmem:[#allocation6 + $0xbe8] sm:$0xff]
        %v740 = vld [vmem:[#allocation6 + $0xbf0] sm:$0xff]
        %v741 = vld [vmem:[#allocation6 + $0xbf8] sm:$0xff]
        %v742 = vld [vmem:[#allocation6 + $0xc00] sm:$0xff]
        %v743 = vld [vmem:[#allocation6 + $0xc08] sm:$0xff]
        %v744 = vld [vmem:[#allocation6 + $0xc10] sm:$0xff]
        %v745 = vld [vmem:[#allocation6 + $0xc18] sm:$0xff]
        %v746 = vld [vmem:[#allocation6 + $0xc20] sm:$0xff]
        %v747 = vld [vmem:[#allocation6 + $0xc28] sm:$0xff]
        %v748 = vld [vmem:[#allocation6 + $0xc30] sm:$0xff]
        %v749 = vld [vmem:[#allocation6 + $0xc38] sm:$0xff]
        %v750 = vld [vmem:[#allocation6 + $0xc40] sm:$0xff]
        %v751 = vld [vmem:[#allocation6 + $0xc48] sm:$0xff]
        %v752 = vld [vmem:[#allocation6 + $0xc50] sm:$0xff]
        %v753 = vld [vmem:[#allocation6 + $0xc58] sm:$0xff]
        %v754 = vld [vmem:[#allocation6 + $0xc60] sm:$0xff]
        %v755 = vld [vmem:[#allocation6 + $0xc68] sm:$0xff]
        %v756 = vld [vmem:[#allocation6 + $0xc70] sm:$0xff]
        %v757 = vld [vmem:[#allocation6 + $0xc78] sm:$0xff]
        %v758 = vld [vmem:[#allocation6 + $0xc80] sm:$0xff]
        %v759 = vld [vmem:[#allocation6 + $0xc88] sm:$0xff]
        %v760 = vld [vmem:[#allocation6 + $0xc90] sm:$0xff]
        %v761 = vld [vmem:[#allocation6 + $0xc98] sm:$0xff]
        %v762 = vld [vmem:[#allocation6 + $0xca0] sm:$0xff]
        %v763 = vld [vmem:[#allocation6 + $0xca8] sm:$0xff]
        %v764 = vld [vmem:[#allocation6 + $0xcb0] sm:$0xff]
        %v765 = vld [vmem:[#allocation6 + $0xcb8] sm:$0xff]
        %v766 = vld [vmem:[#allocation6 + $0xcc0] sm:$0xff]
        %v767 = vld [vmem:[#allocation6 + $0xcc8] sm:$0xff]
        %v768 = vld [vmem:[#allocation6 + $0xcd0] sm:$0xff]
        %v769 = vld [vmem:[#allocation6 + $0xcd8] sm:$0xff]
        %v770 = vld [vmem:[#allocation6 + $0xce0] sm:$0xff]
        %v771 = vld [vmem:[#allocation6 + $0xce8] sm:$0xff]
        %v772 = vld [vmem:[#allocation6 + $0xcf0] sm:$0xff]
        %v773 = vld [vmem:[#allocation6 + $0xcf8] sm:$0xff]
        %v774 = vld [vmem:[#allocation6 + $0xd00] sm:$0xff]
        %v775 = vld [vmem:[#allocation6 + $0xd08] sm:$0xff]
        %v776 = vld [vmem:[#allocation6 + $0xd10] sm:$0xff]
        %v777 = vld [vmem:[#allocation6 + $0xd18] sm:$0xff]
        %v778 = vld [vmem:[#allocation6 + $0xd20] sm:$0xff]
        %v779 = vld [vmem:[#allocation6 + $0xd28] sm:$0xff]
        %v780 = vld [vmem:[#allocation6 + $0xd30] sm:$0xff]
        %v781 = vld [vmem:[#allocation6 + $0xd38] sm:$0xff]
        %v782 = vld [vmem:[#allocation6 + $0xd40] sm:$0xff]
        %v783 = vld [vmem:[#allocation6 + $0xd48] sm:$0xff]
        %v784 = vld [vmem:[#allocation6 + $0xd50] sm:$0xff]
        %v785 = vld [vmem:[#allocation6 + $0xd58] sm:$0xff]
        %v786 = vld [vmem:[#allocation6 + $0xd60] sm:$0xff]
        %v787 = vld [vmem:[#allocation6 + $0xd68] sm:$0xff]
        %v788 = vld [vmem:[#allocation6 + $0xd70] sm:$0xff]
        %v789 = vld [vmem:[#allocation6 + $0xd78] sm:$0xff]
        %v790 = vld [vmem:[#allocation6 + $0xd80] sm:$0xff]
        %v791 = vld [vmem:[#allocation6 + $0xd88] sm:$0xff]
        %v792 = vld [vmem:[#allocation6 + $0xd90] sm:$0xff]
        %v793 = vld [vmem:[#allocation6 + $0xd98] sm:$0xff]
        %v794 = vld [vmem:[#allocation6 + $0xda0] sm:$0xff]
        %v795 = vld [vmem:[#allocation6 + $0xda8] sm:$0xff]
        %v796 = vld [vmem:[#allocation6 + $0xdb0] sm:$0xff]
        %v797 = vld [vmem:[#allocation6 + $0xdb8] sm:$0xff]
        %v798 = vld [vmem:[#allocation6 + $0xdc0] sm:$0xff]
        %v799 = vld [vmem:[#allocation6 + $0xdc8] sm:$0xff]
        %v800 = vld [vmem:[#allocation6 + $0xdd0] sm:$0xff]
        %v801 = vld [vmem:[#allocation6 + $0xdd8] sm:$0xff]
        %v802 = vld [vmem:[#allocation6 + $0xde0] sm:$0xff]
        %v803 = vld [vmem:[#allocation6 + $0xde8] sm:$0xff]
        %v804 = vld [vmem:[#allocation6 + $0xdf0] sm:$0xff]
        %v805 = vld [vmem:[#allocation6 + $0xdf8] sm:$0xff]
        %v806 = vld [vmem:[#allocation6 + $0xe00] sm:$0xff]
        %v807 = vld [vmem:[#allocation6 + $0xe08] sm:$0xff]
        %v808 = vld [vmem:[#allocation6 + $0xe10] sm:$0xff]
        %v809 = vld [vmem:[#allocation6 + $0xe18] sm:$0xff]
        %v810 = vld [vmem:[#allocation6 + $0xe20] sm:$0xff]
        %v811 = vld [vmem:[#allocation6 + $0xe28] sm:$0xff]
        %v812 = vld [vmem:[#allocation6 + $0xe30] sm:$0xff]
        %v813 = vld [vmem:[#allocation6 + $0xe38] sm:$0xff]
        %v814 = vld [vmem:[#allocation6 + $0xe40] sm:$0xff]
        %v815 = vld [vmem:[#allocation6 + $0xe48] sm:$0xff]
        %v816 = vld [vmem:[#allocation6 + $0xe50] sm:$0xff]
        %v817 = vld [vmem:[#allocation6 + $0xe58] sm:$0xff]
        %v818 = vld [vmem:[#allocation6 + $0xe60] sm:$0xff]
        %v819 = vld [vmem:[#allocation6 + $0xe68] sm:$0xff]
        %v820 = vld [vmem:[#allocation6 + $0xe70] sm:$0xff]
        %v821 = vld [vmem:[#allocation6 + $0xe78] sm:$0xff]
        %v822 = vld [vmem:[#allocation6 + $0xe80] sm:$0xff]
        %v823 = vld [vmem:[#allocation6 + $0xe88] sm:$0xff]
        %v824 = vld [vmem:[#allocation6 + $0xe90] sm:$0xff]
        %v825 = vld [vmem:[#allocation6 + $0xe98] sm:$0xff]
        %v826 = vld [vmem:[#allocation6 + $0xea0] sm:$0xff]
        %v827 = vld [vmem:[#allocation6 + $0xea8] sm:$0xff]
        %v828 = vld [vmem:[#allocation6 + $0xeb0] sm:$0xff]
        %v829 = vld [vmem:[#allocation6 + $0xeb8] sm:$0xff]
        %v830 = vld [vmem:[#allocation6 + $0xec0] sm:$0xff]
        %v831 = vld [vmem:[#allocation6 + $0xec8] sm:$0xff]
        %v832 = vld [vmem:[#allocation6 + $0xed0] sm:$0xff]
        %v833 = vld [vmem:[#allocation6 + $0xed8] sm:$0xff]
        %v834 = vld [vmem:[#allocation6 + $0xee0] sm:$0xff]
        %v835 = vld [vmem:[#allocation6 + $0xee8] sm:$0xff]
        %v836 = vld [vmem:[#allocation6 + $0xef0] sm:$0xff]
        %v837 = vld [vmem:[#allocation6 + $0xef8] sm:$0xff]
        %v838 = vld [vmem:[#allocation6 + $0xf00] sm:$0xff]
        %v839 = vld [vmem:[#allocation6 + $0xf08] sm:$0xff]
        %v840 = vld [vmem:[#allocation6 + $0xf10] sm:$0xff]
        %v841 = vld [vmem:[#allocation6 + $0xf18] sm:$0xff]
        %v842 = vld [vmem:[#allocation6 + $0xf20] sm:$0xff]
        %v843 = vld [vmem:[#allocation6 + $0xf28] sm:$0xff]
        %v844 = vld [vmem:[#allocation6 + $0xf30] sm:$0xff]
        %v845 = vld [vmem:[#allocation6 + $0xf38] sm:$0xff]
        %v846 = vld [vmem:[#allocation6 + $0xf40] sm:$0xff]
        %v847 = vld [vmem:[#allocation6 + $0xf48] sm:$0xff]
        %v848 = vld [vmem:[#allocation6 + $0xf50] sm:$0xff]
        %v849 = vld [vmem:[#allocation6 + $0xf58] sm:$0xff]
        %v850 = vld [vmem:[#allocation6 + $0xf60] sm:$0xff]
        %v851 = vld [vmem:[#allocation6 + $0xf68] sm:$0xff]
        %v852 = vld [vmem:[#allocation6 + $0xf70] sm:$0xff]
        %v853 = vld [vmem:[#allocation6 + $0xf78] sm:$0xff]
        %v854 = vld [vmem:[#allocation6 + $0xf80] sm:$0xff]
        %v855 = vld [vmem:[#allocation6 + $0xf88] sm:$0xff]
        %v856 = vld [vmem:[#allocation6 + $0xf90] sm:$0xff]
        %v857 = vld [vmem:[#allocation6 + $0xf98] sm:$0xff]
        %v858 = vld [vmem:[#allocation6 + $0xfa0] sm:$0xff]
        %v859 = vld [vmem:[#allocation6 + $0xfa8] sm:$0xff]
        %v860 = vld [vmem:[#allocation6 + $0xfb0] sm:$0xff]
        %v861 = vld [vmem:[#allocation6 + $0xfb8] sm:$0xff]
        %v862 = vld [vmem:[#allocation6 + $0xfc0] sm:$0xff]
        %v863 = vld [vmem:[#allocation6 + $0xfc8] sm:$0xff]
        %v864 = vld [vmem:[#allocation6 + $0xfd0] sm:$0xff]
        %v865 = vld [vmem:[#allocation6 + $0xfd8] sm:$0xff]
        %v866 = vld [vmem:[#allocation6 + $0xfe0] sm:$0xff]
        %v867 = vld [vmem:[#allocation6 + $0xfe8] sm:$0xff]
        %v868 = vld [vmem:[#allocation6 + $0xff0] sm:$0xff]
        %v869 = vld [vmem:[#allocation6 + $0xff8] sm:$0xff]
        %v870 = vld [vmem:[#allocation7] sm:$0xff]
        %v872 = vlaneseq
        %v873 = vshrl.u32 %v872, 7
        %v874 = vsub.s32 0, %v873
        %v875 = vrot.slane %v870, %v874
        %v876 = vlaneseq
        %v877 = vshrl.u32 %v876, 7
        %v878 = vsub.s32 1, %v877
        %v879 = vrot.slane %v870, %v878
        %v880 = vlaneseq
        %v881 = vshrl.u32 %v880, 7
        %v882 = vsub.s32 2, %v881
        %v883 = vrot.slane %v870, %v882
        %v884 = vlaneseq
        %v885 = vshrl.u32 %v884, 7
        %v886 = vsub.s32 3, %v885
        %v887 = vrot.slane %v870, %v886
        %v888 = vlaneseq
        %v889 = vshrl.u32 %v888, 7
        %v890 = vsub.s32 4, %v889
        %v891 = vrot.slane %v870, %v890
        %v892 = vlaneseq
        %v893 = vshrl.u32 %v892, 7
        %v894 = vsub.s32 5, %v893
        %v895 = vrot.slane %v870, %v894
        %v896 = vlaneseq
        %v897 = vshrl.u32 %v896, 7
        %v898 = vsub.s32 6, %v897
        %v899 = vrot.slane %v870, %v898
        %v900 = vlaneseq
        %v901 = vshrl.u32 %v900, 7
        %v902 = vsub.s32 7, %v901
        %v903 = vrot.slane %v870, %v902
        %v1424 = vunpack.c.l.b16 %v358
        %v1425 = vunpack.c.h.b16 %v358
        %v1426 = vunpack.c.l.b16 %v359
        %v1427 = vunpack.c.h.b16 %v359
        %v1428 = vunpack.c.l.b16 %v360
        %v1429 = vunpack.c.h.b16 %v360
        %v1430 = vunpack.c.l.b16 %v361
        %v1431 = vunpack.c.h.b16 %v361
        %v1432 = vunpack.c.l.b16 %v362
        %v1433 = vunpack.c.h.b16 %v362
        %v1434 = vunpack.c.l.b16 %v363
        %v1435 = vunpack.c.h.b16 %v363
        %v1436 = vunpack.c.l.b16 %v364
        %v1437 = vunpack.c.h.b16 %v364
        %v1438 = vunpack.c.l.b16 %v365
        %v1439 = vunpack.c.h.b16 %v365
        %v1440 = vunpack.c.l.b16 %v366
        %v1441 = vunpack.c.h.b16 %v366
        %v1442 = vunpack.c.l.b16 %v367
        %v1443 = vunpack.c.h.b16 %v367
        %v1444 = vunpack.c.l.b16 %v368
        %v1445 = vunpack.c.h.b16 %v368
        %v1446 = vunpack.c.l.b16 %v369
        %v1447 = vunpack.c.h.b16 %v369
        %v1448 = vunpack.c.l.b16 %v370
        %v1449 = vunpack.c.h.b16 %v370
        %v1450 = vunpack.c.l.b16 %v371
        %v1451 = vunpack.c.h.b16 %v371
        %v1452 = vunpack.c.l.b16 %v372
        %v1453 = vunpack.c.h.b16 %v372
        %v1454 = vunpack.c.l.b16 %v373
        %v1455 = vunpack.c.h.b16 %v373
        %v1456 = vunpack.c.l.b16 %v374
        %v1457 = vunpack.c.h.b16 %v374
        %v1458 = vunpack.c.l.b16 %v375
        %v1459 = vunpack.c.h.b16 %v375
        %v1460 = vunpack.c.l.b16 %v376
        %v1461 = vunpack.c.h.b16 %v376
        %v1462 = vunpack.c.l.b16 %v377
        %v1463 = vunpack.c.h.b16 %v377
        %v1464 = vunpack.c.l.b16 %v378
        %v1465 = vunpack.c.h.b16 %v378
        %v1466 = vunpack.c.l.b16 %v379
        %v1467 = vunpack.c.h.b16 %v379
        %v1468 = vunpack.c.l.b16 %v380
        %v1469 = vunpack.c.h.b16 %v380
        %v1470 = vunpack.c.l.b16 %v381
        %v1471 = vunpack.c.h.b16 %v381
        %v1472 = vunpack.c.l.b16 %v382
        %v1473 = vunpack.c.h.b16 %v382
        %v1474 = vunpack.c.l.b16 %v383
        %v1475 = vunpack.c.h.b16 %v383
        %v1476 = vunpack.c.l.b16 %v384
        %v1477 = vunpack.c.h.b16 %v384
        %v1478 = vunpack.c.l.b16 %v385
        %v1479 = vunpack.c.h.b16 %v385
        %v1480 = vunpack.c.l.b16 %v386
        %v1481 = vunpack.c.h.b16 %v386
        %v1482 = vunpack.c.l.b16 %v387
        %v1483 = vunpack.c.h.b16 %v387
        %v1484 = vunpack.c.l.b16 %v388
        %v1485 = vunpack.c.h.b16 %v388
        %v1486 = vunpack.c.l.b16 %v389
        %v1487 = vunpack.c.h.b16 %v389
        %v1488 = vunpack.c.l.b16 %v390
        %v1489 = vunpack.c.h.b16 %v390
        %v1490 = vunpack.c.l.b16 %v391
        %v1491 = vunpack.c.h.b16 %v391
        %v1492 = vunpack.c.l.b16 %v392
        %v1493 = vunpack.c.h.b16 %v392
        %v1494 = vunpack.c.l.b16 %v393
        %v1495 = vunpack.c.h.b16 %v393
        %v1496 = vunpack.c.l.b16 %v394
        %v1497 = vunpack.c.h.b16 %v394
        %v1498 = vunpack.c.l.b16 %v395
        %v1499 = vunpack.c.h.b16 %v395
        %v1500 = vunpack.c.l.b16 %v396
        %v1501 = vunpack.c.h.b16 %v396
        %v1502 = vunpack.c.l.b16 %v397
        %v1503 = vunpack.c.h.b16 %v397
        %v1504 = vunpack.c.l.b16 %v398
        %v1505 = vunpack.c.h.b16 %v398
        %v1506 = vunpack.c.l.b16 %v399
        %v1507 = vunpack.c.h.b16 %v399
        %v1508 = vunpack.c.l.b16 %v400
        %v1509 = vunpack.c.h.b16 %v400
        %v1510 = vunpack.c.l.b16 %v401
        %v1511 = vunpack.c.h.b16 %v401
        %v1512 = vunpack.c.l.b16 %v402
        %v1513 = vunpack.c.h.b16 %v402
        %v1514 = vunpack.c.l.b16 %v403
        %v1515 = vunpack.c.h.b16 %v403
        %v1516 = vunpack.c.l.b16 %v404
        %v1517 = vunpack.c.h.b16 %v404
        %v1518 = vunpack.c.l.b16 %v405
        %v1519 = vunpack.c.h.b16 %v405
        %v1520 = vunpack.c.l.b16 %v406
        %v1521 = vunpack.c.h.b16 %v406
        %v1522 = vunpack.c.l.b16 %v407
        %v1523 = vunpack.c.h.b16 %v407
        %v1524 = vunpack.c.l.b16 %v408
        %v1525 = vunpack.c.h.b16 %v408
        %v1526 = vunpack.c.l.b16 %v409
        %v1527 = vunpack.c.h.b16 %v409
        %v1528 = vunpack.c.l.b16 %v410
        %v1529 = vunpack.c.h.b16 %v410
        %v1530 = vunpack.c.l.b16 %v411
        %v1531 = vunpack.c.h.b16 %v411
        %v1532 = vunpack.c.l.b16 %v412
        %v1533 = vunpack.c.h.b16 %v412
        %v1534 = vunpack.c.l.b16 %v413
        %v1535 = vunpack.c.h.b16 %v413
        %v1536 = vunpack.c.l.b16 %v414
        %v1537 = vunpack.c.h.b16 %v414
        %v1538 = vunpack.c.l.b16 %v415
        %v1539 = vunpack.c.h.b16 %v415
        %v1540 = vunpack.c.l.b16 %v416
        %v1541 = vunpack.c.h.b16 %v416
        %v1542 = vunpack.c.l.b16 %v417
        %v1543 = vunpack.c.h.b16 %v417
        %v1544 = vunpack.c.l.b16 %v418
        %v1545 = vunpack.c.h.b16 %v418
        %v1546 = vunpack.c.l.b16 %v419
        %v1547 = vunpack.c.h.b16 %v419
        %v1548 = vunpack.c.l.b16 %v420
        %v1549 = vunpack.c.h.b16 %v420
        %v1550 = vunpack.c.l.b16 %v421
        %v1551 = vunpack.c.h.b16 %v421
        %v1552 = vunpack.c.l.b16 %v422
        %v1553 = vunpack.c.h.b16 %v422
        %v1554 = vunpack.c.l.b16 %v423
        %v1555 = vunpack.c.h.b16 %v423
        %v1556 = vunpack.c.l.b16 %v424
        %v1557 = vunpack.c.h.b16 %v424
        %v1558 = vunpack.c.l.b16 %v425
        %v1559 = vunpack.c.h.b16 %v425
        %v1560 = vunpack.c.l.b16 %v426
        %v1561 = vunpack.c.h.b16 %v426
        %v1562 = vunpack.c.l.b16 %v427
        %v1563 = vunpack.c.h.b16 %v427
        %v1564 = vunpack.c.l.b16 %v428
        %v1565 = vunpack.c.h.b16 %v428
        %v1566 = vunpack.c.l.b16 %v429
        %v1567 = vunpack.c.h.b16 %v429
        %v1568 = vunpack.c.l.b16 %v430
        %v1569 = vunpack.c.h.b16 %v430
        %v1570 = vunpack.c.l.b16 %v431
        %v1571 = vunpack.c.h.b16 %v431
        %v1572 = vunpack.c.l.b16 %v432
        %v1573 = vunpack.c.h.b16 %v432
        %v1574 = vunpack.c.l.b16 %v433
        %v1575 = vunpack.c.h.b16 %v433
        %v1576 = vunpack.c.l.b16 %v434
        %v1577 = vunpack.c.h.b16 %v434
        %v1578 = vunpack.c.l.b16 %v435
        %v1579 = vunpack.c.h.b16 %v435
        %v1580 = vunpack.c.l.b16 %v436
        %v1581 = vunpack.c.h.b16 %v436
        %v1582 = vunpack.c.l.b16 %v437
        %v1583 = vunpack.c.h.b16 %v437
        %v1584 = vunpack.c.l.b16 %v438
        %v1585 = vunpack.c.h.b16 %v438
        %v1586 = vunpack.c.l.b16 %v439
        %v1587 = vunpack.c.h.b16 %v439
        %v1588 = vunpack.c.l.b16 %v440
        %v1589 = vunpack.c.h.b16 %v440
        %v1590 = vunpack.c.l.b16 %v441
        %v1591 = vunpack.c.h.b16 %v441
        %v1592 = vunpack.c.l.b16 %v442
        %v1593 = vunpack.c.h.b16 %v442
        %v1594 = vunpack.c.l.b16 %v443
        %v1595 = vunpack.c.h.b16 %v443
        %v1596 = vunpack.c.l.b16 %v444
        %v1597 = vunpack.c.h.b16 %v444
        %v1598 = vunpack.c.l.b16 %v445
        %v1599 = vunpack.c.h.b16 %v445
        %v1600 = vunpack.c.l.b16 %v446
        %v1601 = vunpack.c.h.b16 %v446
        %v1602 = vunpack.c.l.b16 %v447
        %v1603 = vunpack.c.h.b16 %v447
        %v1604 = vunpack.c.l.b16 %v448
        %v1605 = vunpack.c.h.b16 %v448
        %v1606 = vunpack.c.l.b16 %v449
        %v1607 = vunpack.c.h.b16 %v449
        %v1608 = vunpack.c.l.b16 %v450
        %v1609 = vunpack.c.h.b16 %v450
        %v1610 = vunpack.c.l.b16 %v451
        %v1611 = vunpack.c.h.b16 %v451
        %v1612 = vunpack.c.l.b16 %v452
        %v1613 = vunpack.c.h.b16 %v452
        %v1614 = vunpack.c.l.b16 %v453
        %v1615 = vunpack.c.h.b16 %v453
        %v1616 = vunpack.c.l.b16 %v454
        %v1617 = vunpack.c.h.b16 %v454
        %v1618 = vunpack.c.l.b16 %v455
        %v1619 = vunpack.c.h.b16 %v455
        %v1620 = vunpack.c.l.b16 %v456
        %v1621 = vunpack.c.h.b16 %v456
        %v1622 = vunpack.c.l.b16 %v457
        %v1623 = vunpack.c.h.b16 %v457
        %v1624 = vunpack.c.l.b16 %v458
        %v1625 = vunpack.c.h.b16 %v458
        %v1626 = vunpack.c.l.b16 %v459
        %v1627 = vunpack.c.h.b16 %v459
        %v1628 = vunpack.c.l.b16 %v460
        %v1629 = vunpack.c.h.b16 %v460
        %v1630 = vunpack.c.l.b16 %v461
        %v1631 = vunpack.c.h.b16 %v461
        %v1632 = vunpack.c.l.b16 %v462
        %v1633 = vunpack.c.h.b16 %v462
        %v1634 = vunpack.c.l.b16 %v463
        %v1635 = vunpack.c.h.b16 %v463
        %v1636 = vunpack.c.l.b16 %v464
        %v1637 = vunpack.c.h.b16 %v464
        %v1638 = vunpack.c.l.b16 %v465
        %v1639 = vunpack.c.h.b16 %v465
        %v1640 = vunpack.c.l.b16 %v466
        %v1641 = vunpack.c.h.b16 %v466
        %v1642 = vunpack.c.l.b16 %v467
        %v1643 = vunpack.c.h.b16 %v467
        %v1644 = vunpack.c.l.b16 %v468
        %v1645 = vunpack.c.h.b16 %v468
        %v1646 = vunpack.c.l.b16 %v469
        %v1647 = vunpack.c.h.b16 %v469
        %v1648 = vunpack.c.l.b16 %v470
        %v1649 = vunpack.c.h.b16 %v470
        %v1650 = vunpack.c.l.b16 %v471
        %v1651 = vunpack.c.h.b16 %v471
        %v1652 = vunpack.c.l.b16 %v472
        %v1653 = vunpack.c.h.b16 %v472
        %v1654 = vunpack.c.l.b16 %v473
        %v1655 = vunpack.c.h.b16 %v473
        %v1656 = vunpack.c.l.b16 %v474
        %v1657 = vunpack.c.h.b16 %v474
        %v1658 = vunpack.c.l.b16 %v475
        %v1659 = vunpack.c.h.b16 %v475
        %v1660 = vunpack.c.l.b16 %v476
        %v1661 = vunpack.c.h.b16 %v476
        %v1662 = vunpack.c.l.b16 %v477
        %v1663 = vunpack.c.h.b16 %v477
        %v1664 = vunpack.c.l.b16 %v478
        %v1665 = vunpack.c.h.b16 %v478
        %v1666 = vunpack.c.l.b16 %v479
        %v1667 = vunpack.c.h.b16 %v479
        %v1668 = vunpack.c.l.b16 %v480
        %v1669 = vunpack.c.h.b16 %v480
        %v1670 = vunpack.c.l.b16 %v481
        %v1671 = vunpack.c.h.b16 %v481
        %v1672 = vunpack.c.l.b16 %v482
        %v1673 = vunpack.c.h.b16 %v482
        %v1674 = vunpack.c.l.b16 %v483
        %v1675 = vunpack.c.h.b16 %v483
        %v1676 = vunpack.c.l.b16 %v484
        %v1677 = vunpack.c.h.b16 %v484
        %v1678 = vunpack.c.l.b16 %v485
        %v1679 = vunpack.c.h.b16 %v485
        %v1680 = vunpack.c.l.b16 %v486
        %v1681 = vunpack.c.h.b16 %v486
        %v1682 = vunpack.c.l.b16 %v487
        %v1683 = vunpack.c.h.b16 %v487
        %v1684 = vunpack.c.l.b16 %v488
        %v1685 = vunpack.c.h.b16 %v488
        %v1686 = vunpack.c.l.b16 %v489
        %v1687 = vunpack.c.h.b16 %v489
        %v1688 = vunpack.c.l.b16 %v490
        %v1689 = vunpack.c.h.b16 %v490
        %v1690 = vunpack.c.l.b16 %v491
        %v1691 = vunpack.c.h.b16 %v491
        %v1692 = vunpack.c.l.b16 %v492
        %v1693 = vunpack.c.h.b16 %v492
        %v1694 = vunpack.c.l.b16 %v493
        %v1695 = vunpack.c.h.b16 %v493
        %v1696 = vunpack.c.l.b16 %v494
        %v1697 = vunpack.c.h.b16 %v494
        %v1698 = vunpack.c.l.b16 %v495
        %v1699 = vunpack.c.h.b16 %v495
        %v1700 = vunpack.c.l.b16 %v496
        %v1701 = vunpack.c.h.b16 %v496
        %v1702 = vunpack.c.l.b16 %v497
        %v1703 = vunpack.c.h.b16 %v497
        %v1704 = vunpack.c.l.b16 %v498
        %v1705 = vunpack.c.h.b16 %v498
        %v1706 = vunpack.c.l.b16 %v499
        %v1707 = vunpack.c.h.b16 %v499
        %v1708 = vunpack.c.l.b16 %v500
        %v1709 = vunpack.c.h.b16 %v500
        %v1710 = vunpack.c.l.b16 %v501
        %v1711 = vunpack.c.h.b16 %v501
        %v1712 = vunpack.c.l.b16 %v502
        %v1713 = vunpack.c.h.b16 %v502
        %v1714 = vunpack.c.l.b16 %v503
        %v1715 = vunpack.c.h.b16 %v503
        %v1716 = vunpack.c.l.b16 %v504
        %v1717 = vunpack.c.h.b16 %v504
        %v1718 = vunpack.c.l.b16 %v505
        %v1719 = vunpack.c.h.b16 %v505
        %v1720 = vunpack.c.l.b16 %v506
        %v1721 = vunpack.c.h.b16 %v506
        %v1722 = vunpack.c.l.b16 %v507
        %v1723 = vunpack.c.h.b16 %v507
        %v1724 = vunpack.c.l.b16 %v508
        %v1725 = vunpack.c.h.b16 %v508
        %v1726 = vunpack.c.l.b16 %v509
        %v1727 = vunpack.c.h.b16 %v509
        %v1728 = vunpack.c.l.b16 %v510
        %v1729 = vunpack.c.h.b16 %v510
        %v1730 = vunpack.c.l.b16 %v511
        %v1731 = vunpack.c.h.b16 %v511
        %v1732 = vunpack.c.l.b16 %v512
        %v1733 = vunpack.c.h.b16 %v512
        %v1734 = vunpack.c.l.b16 %v513
        %v1735 = vunpack.c.h.b16 %v513
        %v1736 = vunpack.c.l.b16 %v514
        %v1737 = vunpack.c.h.b16 %v514
        %v1738 = vunpack.c.l.b16 %v515
        %v1739 = vunpack.c.h.b16 %v515
        %v1740 = vunpack.c.l.b16 %v516
        %v1741 = vunpack.c.h.b16 %v516
        %v1742 = vunpack.c.l.b16 %v517
        %v1743 = vunpack.c.h.b16 %v517
        %v1744 = vunpack.c.l.b16 %v518
        %v1745 = vunpack.c.h.b16 %v518
        %v1746 = vunpack.c.l.b16 %v519
        %v1747 = vunpack.c.h.b16 %v519
        %v1748 = vunpack.c.l.b16 %v520
        %v1749 = vunpack.c.h.b16 %v520
        %v1750 = vunpack.c.l.b16 %v521
        %v1751 = vunpack.c.h.b16 %v521
        %v1752 = vunpack.c.l.b16 %v522
        %v1753 = vunpack.c.h.b16 %v522
        %v1754 = vunpack.c.l.b16 %v523
        %v1755 = vunpack.c.h.b16 %v523
        %v1756 = vunpack.c.l.b16 %v524
        %v1757 = vunpack.c.h.b16 %v524
        %v1758 = vunpack.c.l.b16 %v525
        %v1759 = vunpack.c.h.b16 %v525
        %v1760 = vunpack.c.l.b16 %v526
        %v1761 = vunpack.c.h.b16 %v526
        %v1762 = vunpack.c.l.b16 %v527
        %v1763 = vunpack.c.h.b16 %v527
        %v1764 = vunpack.c.l.b16 %v528
        %v1765 = vunpack.c.h.b16 %v528
        %v1766 = vunpack.c.l.b16 %v529
        %v1767 = vunpack.c.h.b16 %v529
        %v1768 = vunpack.c.l.b16 %v530
        %v1769 = vunpack.c.h.b16 %v530
        %v1770 = vunpack.c.l.b16 %v531
        %v1771 = vunpack.c.h.b16 %v531
        %v1772 = vunpack.c.l.b16 %v532
        %v1773 = vunpack.c.h.b16 %v532
        %v1774 = vunpack.c.l.b16 %v533
        %v1775 = vunpack.c.h.b16 %v533
        %v1776 = vunpack.c.l.b16 %v534
        %v1777 = vunpack.c.h.b16 %v534
        %v1778 = vunpack.c.l.b16 %v535
        %v1779 = vunpack.c.h.b16 %v535
        %v1780 = vunpack.c.l.b16 %v536
        %v1781 = vunpack.c.h.b16 %v536
        %v1782 = vunpack.c.l.b16 %v537
        %v1783 = vunpack.c.h.b16 %v537
        %v1784 = vunpack.c.l.b16 %v538
        %v1785 = vunpack.c.h.b16 %v538
        %v1786 = vunpack.c.l.b16 %v539
        %v1787 = vunpack.c.h.b16 %v539
        %v1788 = vunpack.c.l.b16 %v540
        %v1789 = vunpack.c.h.b16 %v540
        %v1790 = vunpack.c.l.b16 %v541
        %v1791 = vunpack.c.h.b16 %v541
        %v1792 = vunpack.c.l.b16 %v542
        %v1793 = vunpack.c.h.b16 %v542
        %v1794 = vunpack.c.l.b16 %v543
        %v1795 = vunpack.c.h.b16 %v543
        %v1796 = vunpack.c.l.b16 %v544
        %v1797 = vunpack.c.h.b16 %v544
        %v1798 = vunpack.c.l.b16 %v545
        %v1799 = vunpack.c.h.b16 %v545
        %v1800 = vunpack.c.l.b16 %v546
        %v1801 = vunpack.c.h.b16 %v546
        %v1802 = vunpack.c.l.b16 %v547
        %v1803 = vunpack.c.h.b16 %v547
        %v1804 = vunpack.c.l.b16 %v548
        %v1805 = vunpack.c.h.b16 %v548
        %v1806 = vunpack.c.l.b16 %v549
        %v1807 = vunpack.c.h.b16 %v549
        %v1808 = vunpack.c.l.b16 %v550
        %v1809 = vunpack.c.h.b16 %v550
        %v1810 = vunpack.c.l.b16 %v551
        %v1811 = vunpack.c.h.b16 %v551
        %v1812 = vunpack.c.l.b16 %v552
        %v1813 = vunpack.c.h.b16 %v552
        %v1814 = vunpack.c.l.b16 %v553
        %v1815 = vunpack.c.h.b16 %v553
        %v1816 = vunpack.c.l.b16 %v554
        %v1817 = vunpack.c.h.b16 %v554
        %v1818 = vunpack.c.l.b16 %v555
        %v1819 = vunpack.c.h.b16 %v555
        %v1820 = vunpack.c.l.b16 %v556
        %v1821 = vunpack.c.h.b16 %v556
        %v1822 = vunpack.c.l.b16 %v557
        %v1823 = vunpack.c.h.b16 %v557
        %v1824 = vunpack.c.l.b16 %v558
        %v1825 = vunpack.c.h.b16 %v558
        %v1826 = vunpack.c.l.b16 %v559
        %v1827 = vunpack.c.h.b16 %v559
        %v1828 = vunpack.c.l.b16 %v560
        %v1829 = vunpack.c.h.b16 %v560
        %v1830 = vunpack.c.l.b16 %v561
        %v1831 = vunpack.c.h.b16 %v561
        %v1832 = vunpack.c.l.b16 %v562
        %v1833 = vunpack.c.h.b16 %v562
        %v1834 = vunpack.c.l.b16 %v563
        %v1835 = vunpack.c.h.b16 %v563
        %v1836 = vunpack.c.l.b16 %v564
        %v1837 = vunpack.c.h.b16 %v564
        %v1838 = vunpack.c.l.b16 %v565
        %v1839 = vunpack.c.h.b16 %v565
        %v1840 = vunpack.c.l.b16 %v566
        %v1841 = vunpack.c.h.b16 %v566
        %v1842 = vunpack.c.l.b16 %v567
        %v1843 = vunpack.c.h.b16 %v567
        %v1844 = vunpack.c.l.b16 %v568
        %v1845 = vunpack.c.h.b16 %v568
        %v1846 = vunpack.c.l.b16 %v569
        %v1847 = vunpack.c.h.b16 %v569
        %v1848 = vunpack.c.l.b16 %v570
        %v1849 = vunpack.c.h.b16 %v570
        %v1850 = vunpack.c.l.b16 %v571
        %v1851 = vunpack.c.h.b16 %v571
        %v1852 = vunpack.c.l.b16 %v572
        %v1853 = vunpack.c.h.b16 %v572
        %v1854 = vunpack.c.l.b16 %v573
        %v1855 = vunpack.c.h.b16 %v573
        %v1856 = vunpack.c.l.b16 %v574
        %v1857 = vunpack.c.h.b16 %v574
        %v1858 = vunpack.c.l.b16 %v575
        %v1859 = vunpack.c.h.b16 %v575
        %v1860 = vunpack.c.l.b16 %v576
        %v1861 = vunpack.c.h.b16 %v576
        %v1862 = vunpack.c.l.b16 %v577
        %v1863 = vunpack.c.h.b16 %v577
        %v1864 = vunpack.c.l.b16 %v578
        %v1865 = vunpack.c.h.b16 %v578
        %v1866 = vunpack.c.l.b16 %v579
        %v1867 = vunpack.c.h.b16 %v579
        %v1868 = vunpack.c.l.b16 %v580
        %v1869 = vunpack.c.h.b16 %v580
        %v1870 = vunpack.c.l.b16 %v581
        %v1871 = vunpack.c.h.b16 %v581
        %v1872 = vunpack.c.l.b16 %v582
        %v1873 = vunpack.c.h.b16 %v582
        %v1874 = vunpack.c.l.b16 %v583
        %v1875 = vunpack.c.h.b16 %v583
        %v1876 = vunpack.c.l.b16 %v584
        %v1877 = vunpack.c.h.b16 %v584
        %v1878 = vunpack.c.l.b16 %v585
        %v1879 = vunpack.c.h.b16 %v585
        %v1880 = vunpack.c.l.b16 %v586
        %v1881 = vunpack.c.h.b16 %v586
        %v1882 = vunpack.c.l.b16 %v587
        %v1883 = vunpack.c.h.b16 %v587
        %v1884 = vunpack.c.l.b16 %v588
        %v1885 = vunpack.c.h.b16 %v588
        %v1886 = vunpack.c.l.b16 %v589
        %v1887 = vunpack.c.h.b16 %v589
        %v1888 = vunpack.c.l.b16 %v590
        %v1889 = vunpack.c.h.b16 %v590
        %v1890 = vunpack.c.l.b16 %v591
        %v1891 = vunpack.c.h.b16 %v591
        %v1892 = vunpack.c.l.b16 %v592
        %v1893 = vunpack.c.h.b16 %v592
        %v1894 = vunpack.c.l.b16 %v593
        %v1895 = vunpack.c.h.b16 %v593
        %v1896 = vunpack.c.l.b16 %v594
        %v1897 = vunpack.c.h.b16 %v594
        %v1898 = vunpack.c.l.b16 %v595
        %v1899 = vunpack.c.h.b16 %v595
        %v1900 = vunpack.c.l.b16 %v596
        %v1901 = vunpack.c.h.b16 %v596
        %v1902 = vunpack.c.l.b16 %v597
        %v1903 = vunpack.c.h.b16 %v597
        %v1904 = vunpack.c.l.b16 %v598
        %v1905 = vunpack.c.h.b16 %v598
        %v1906 = vunpack.c.l.b16 %v599
        %v1907 = vunpack.c.h.b16 %v599
        %v1908 = vunpack.c.l.b16 %v600
        %v1909 = vunpack.c.h.b16 %v600
        %v1910 = vunpack.c.l.b16 %v601
        %v1911 = vunpack.c.h.b16 %v601
        %v1912 = vunpack.c.l.b16 %v602
        %v1913 = vunpack.c.h.b16 %v602
        %v1914 = vunpack.c.l.b16 %v603
        %v1915 = vunpack.c.h.b16 %v603
        %v1916 = vunpack.c.l.b16 %v604
        %v1917 = vunpack.c.h.b16 %v604
        %v1918 = vunpack.c.l.b16 %v605
        %v1919 = vunpack.c.h.b16 %v605
        %v1920 = vunpack.c.l.b16 %v606
        %v1921 = vunpack.c.h.b16 %v606
        %v1922 = vunpack.c.l.b16 %v607
        %v1923 = vunpack.c.h.b16 %v607
        %v1924 = vunpack.c.l.b16 %v608
        %v1925 = vunpack.c.h.b16 %v608
        %v1926 = vunpack.c.l.b16 %v609
        %v1927 = vunpack.c.h.b16 %v609
        %v1928 = vunpack.c.l.b16 %v610
        %v1929 = vunpack.c.h.b16 %v610
        %v1930 = vunpack.c.l.b16 %v611
        %v1931 = vunpack.c.h.b16 %v611
        %v1932 = vunpack.c.l.b16 %v612
        %v1933 = vunpack.c.h.b16 %v612
        %v1934 = vunpack.c.l.b16 %v613
        %v1935 = vunpack.c.h.b16 %v613
        %v1936 = vunpack.c.l.b16 %v614
        %v1937 = vunpack.c.h.b16 %v614
        %v1938 = vunpack.c.l.b16 %v615
        %v1939 = vunpack.c.h.b16 %v615
        %v1940 = vunpack.c.l.b16 %v616
        %v1941 = vunpack.c.h.b16 %v616
        %v1942 = vunpack.c.l.b16 %v617
        %v1943 = vunpack.c.h.b16 %v617
        %v1944 = vunpack.c.l.b16 %v618
        %v1945 = vunpack.c.h.b16 %v618
        %v1946 = vunpack.c.l.b16 %v619
        %v1947 = vunpack.c.h.b16 %v619
        %v1948 = vunpack.c.l.b16 %v620
        %v1949 = vunpack.c.h.b16 %v620
        %v1950 = vunpack.c.l.b16 %v621
        %v1951 = vunpack.c.h.b16 %v621
        %v1952 = vunpack.c.l.b16 %v622
        %v1953 = vunpack.c.h.b16 %v622
        %v1954 = vunpack.c.l.b16 %v623
        %v1955 = vunpack.c.h.b16 %v623
        %v1956 = vunpack.c.l.b16 %v624
        %v1957 = vunpack.c.h.b16 %v624
        %v1958 = vunpack.c.l.b16 %v625
        %v1959 = vunpack.c.h.b16 %v625
        %v1960 = vunpack.c.l.b16 %v626
        %v1961 = vunpack.c.h.b16 %v626
        %v1962 = vunpack.c.l.b16 %v627
        %v1963 = vunpack.c.h.b16 %v627
        %v1964 = vunpack.c.l.b16 %v628
        %v1965 = vunpack.c.h.b16 %v628
        %v1966 = vunpack.c.l.b16 %v629
        %v1967 = vunpack.c.h.b16 %v629
        %v1968 = vunpack.c.l.b16 %v630
        %v1969 = vunpack.c.h.b16 %v630
        %v1970 = vunpack.c.l.b16 %v631
        %v1971 = vunpack.c.h.b16 %v631
        %v1972 = vunpack.c.l.b16 %v632
        %v1973 = vunpack.c.h.b16 %v632
        %v1974 = vunpack.c.l.b16 %v633
        %v1975 = vunpack.c.h.b16 %v633
        %v1976 = vunpack.c.l.b16 %v634
        %v1977 = vunpack.c.h.b16 %v634
        %v1978 = vunpack.c.l.b16 %v635
        %v1979 = vunpack.c.h.b16 %v635
        %v1980 = vunpack.c.l.b16 %v636
        %v1981 = vunpack.c.h.b16 %v636
        %v1982 = vunpack.c.l.b16 %v637
        %v1983 = vunpack.c.h.b16 %v637
        %v1984 = vunpack.c.l.b16 %v638
        %v1985 = vunpack.c.h.b16 %v638
        %v1986 = vunpack.c.l.b16 %v639
        %v1987 = vunpack.c.h.b16 %v639
        %v1988 = vunpack.c.l.b16 %v640
        %v1989 = vunpack.c.h.b16 %v640
        %v1990 = vunpack.c.l.b16 %v641
        %v1991 = vunpack.c.h.b16 %v641
        %v1992 = vunpack.c.l.b16 %v642
        %v1993 = vunpack.c.h.b16 %v642
        %v1994 = vunpack.c.l.b16 %v643
        %v1995 = vunpack.c.h.b16 %v643
        %v1996 = vunpack.c.l.b16 %v644
        %v1997 = vunpack.c.h.b16 %v644
        %v1998 = vunpack.c.l.b16 %v645
        %v1999 = vunpack.c.h.b16 %v645
        %v2000 = vunpack.c.l.b16 %v646
        %v2001 = vunpack.c.h.b16 %v646
        %v2002 = vunpack.c.l.b16 %v647
        %v2003 = vunpack.c.h.b16 %v647
        %v2004 = vunpack.c.l.b16 %v648
        %v2005 = vunpack.c.h.b16 %v648
        %v2006 = vunpack.c.l.b16 %v649
        %v2007 = vunpack.c.h.b16 %v649
        %v2008 = vunpack.c.l.b16 %v650
        %v2009 = vunpack.c.h.b16 %v650
        %v2010 = vunpack.c.l.b16 %v651
        %v2011 = vunpack.c.h.b16 %v651
        %v2012 = vunpack.c.l.b16 %v652
        %v2013 = vunpack.c.h.b16 %v652
        %v2014 = vunpack.c.l.b16 %v653
        %v2015 = vunpack.c.h.b16 %v653
        %v2016 = vunpack.c.l.b16 %v654
        %v2017 = vunpack.c.h.b16 %v654
        %v2018 = vunpack.c.l.b16 %v655
        %v2019 = vunpack.c.h.b16 %v655
        %v2020 = vunpack.c.l.b16 %v656
        %v2021 = vunpack.c.h.b16 %v656
        %v2022 = vunpack.c.l.b16 %v657
        %v2023 = vunpack.c.h.b16 %v657
        %v2024 = vunpack.c.l.b16 %v658
        %v2025 = vunpack.c.h.b16 %v658
        %v2026 = vunpack.c.l.b16 %v659
        %v2027 = vunpack.c.h.b16 %v659
        %v2028 = vunpack.c.l.b16 %v660
        %v2029 = vunpack.c.h.b16 %v660
        %v2030 = vunpack.c.l.b16 %v661
        %v2031 = vunpack.c.h.b16 %v661
        %v2032 = vunpack.c.l.b16 %v662
        %v2033 = vunpack.c.h.b16 %v662
        %v2034 = vunpack.c.l.b16 %v663
        %v2035 = vunpack.c.h.b16 %v663
        %v2036 = vunpack.c.l.b16 %v664
        %v2037 = vunpack.c.h.b16 %v664
        %v2038 = vunpack.c.l.b16 %v665
        %v2039 = vunpack.c.h.b16 %v665
        %v2040 = vunpack.c.l.b16 %v666
        %v2041 = vunpack.c.h.b16 %v666
        %v2042 = vunpack.c.l.b16 %v667
        %v2043 = vunpack.c.h.b16 %v667
        %v2044 = vunpack.c.l.b16 %v668
        %v2045 = vunpack.c.h.b16 %v668
        %v2046 = vunpack.c.l.b16 %v669
        %v2047 = vunpack.c.h.b16 %v669
        %v2048 = vunpack.c.l.b16 %v670
        %v2049 = vunpack.c.h.b16 %v670
        %v2050 = vunpack.c.l.b16 %v671
        %v2051 = vunpack.c.h.b16 %v671
        %v2052 = vunpack.c.l.b16 %v672
        %v2053 = vunpack.c.h.b16 %v672
        %v2054 = vunpack.c.l.b16 %v673
        %v2055 = vunpack.c.h.b16 %v673
        %v2056 = vunpack.c.l.b16 %v674
        %v2057 = vunpack.c.h.b16 %v674
        %v2058 = vunpack.c.l.b16 %v675
        %v2059 = vunpack.c.h.b16 %v675
        %v2060 = vunpack.c.l.b16 %v676
        %v2061 = vunpack.c.h.b16 %v676
        %v2062 = vunpack.c.l.b16 %v677
        %v2063 = vunpack.c.h.b16 %v677
        %v2064 = vunpack.c.l.b16 %v678
        %v2065 = vunpack.c.h.b16 %v678
        %v2066 = vunpack.c.l.b16 %v679
        %v2067 = vunpack.c.h.b16 %v679
        %v2068 = vunpack.c.l.b16 %v680
        %v2069 = vunpack.c.h.b16 %v680
        %v2070 = vunpack.c.l.b16 %v681
        %v2071 = vunpack.c.h.b16 %v681
        %v2072 = vunpack.c.l.b16 %v682
        %v2073 = vunpack.c.h.b16 %v682
        %v2074 = vunpack.c.l.b16 %v683
        %v2075 = vunpack.c.h.b16 %v683
        %v2076 = vunpack.c.l.b16 %v684
        %v2077 = vunpack.c.h.b16 %v684
        %v2078 = vunpack.c.l.b16 %v685
        %v2079 = vunpack.c.h.b16 %v685
        %v2080 = vunpack.c.l.b16 %v686
        %v2081 = vunpack.c.h.b16 %v686
        %v2082 = vunpack.c.l.b16 %v687
        %v2083 = vunpack.c.h.b16 %v687
        %v2084 = vunpack.c.l.b16 %v688
        %v2085 = vunpack.c.h.b16 %v688
        %v2086 = vunpack.c.l.b16 %v689
        %v2087 = vunpack.c.h.b16 %v689
        %v2088 = vunpack.c.l.b16 %v690
        %v2089 = vunpack.c.h.b16 %v690
        %v2090 = vunpack.c.l.b16 %v691
        %v2091 = vunpack.c.h.b16 %v691
        %v2092 = vunpack.c.l.b16 %v692
        %v2093 = vunpack.c.h.b16 %v692
        %v2094 = vunpack.c.l.b16 %v693
        %v2095 = vunpack.c.h.b16 %v693
        %v2096 = vunpack.c.l.b16 %v694
        %v2097 = vunpack.c.h.b16 %v694
        %v2098 = vunpack.c.l.b16 %v695
        %v2099 = vunpack.c.h.b16 %v695
        %v2100 = vunpack.c.l.b16 %v696
        %v2101 = vunpack.c.h.b16 %v696
        %v2102 = vunpack.c.l.b16 %v697
        %v2103 = vunpack.c.h.b16 %v697
        %v2104 = vunpack.c.l.b16 %v698
        %v2105 = vunpack.c.h.b16 %v698
        %v2106 = vunpack.c.l.b16 %v699
        %v2107 = vunpack.c.h.b16 %v699
        %v2108 = vunpack.c.l.b16 %v700
        %v2109 = vunpack.c.h.b16 %v700
        %v2110 = vunpack.c.l.b16 %v701
        %v2111 = vunpack.c.h.b16 %v701
        %v2112 = vunpack.c.l.b16 %v702
        %v2113 = vunpack.c.h.b16 %v702
        %v2114 = vunpack.c.l.b16 %v703
        %v2115 = vunpack.c.h.b16 %v703
        %v2116 = vunpack.c.l.b16 %v704
        %v2117 = vunpack.c.h.b16 %v704
        %v2118 = vunpack.c.l.b16 %v705
        %v2119 = vunpack.c.h.b16 %v705
        %v2120 = vunpack.c.l.b16 %v706
        %v2121 = vunpack.c.h.b16 %v706
        %v2122 = vunpack.c.l.b16 %v707
        %v2123 = vunpack.c.h.b16 %v707
        %v2124 = vunpack.c.l.b16 %v708
        %v2125 = vunpack.c.h.b16 %v708
        %v2126 = vunpack.c.l.b16 %v709
        %v2127 = vunpack.c.h.b16 %v709
        %v2128 = vunpack.c.l.b16 %v710
        %v2129 = vunpack.c.h.b16 %v710
        %v2130 = vunpack.c.l.b16 %v711
        %v2131 = vunpack.c.h.b16 %v711
        %v2132 = vunpack.c.l.b16 %v712
        %v2133 = vunpack.c.h.b16 %v712
        %v2134 = vunpack.c.l.b16 %v713
        %v2135 = vunpack.c.h.b16 %v713
        %v2136 = vunpack.c.l.b16 %v714
        %v2137 = vunpack.c.h.b16 %v714
        %v2138 = vunpack.c.l.b16 %v715
        %v2139 = vunpack.c.h.b16 %v715
        %v2140 = vunpack.c.l.b16 %v716
        %v2141 = vunpack.c.h.b16 %v716
        %v2142 = vunpack.c.l.b16 %v717
        %v2143 = vunpack.c.h.b16 %v717
        %v2144 = vunpack.c.l.b16 %v718
        %v2145 = vunpack.c.h.b16 %v718
        %v2146 = vunpack.c.l.b16 %v719
        %v2147 = vunpack.c.h.b16 %v719
        %v2148 = vunpack.c.l.b16 %v720
        %v2149 = vunpack.c.h.b16 %v720
        %v2150 = vunpack.c.l.b16 %v721
        %v2151 = vunpack.c.h.b16 %v721
        %v2152 = vunpack.c.l.b16 %v722
        %v2153 = vunpack.c.h.b16 %v722
        %v2154 = vunpack.c.l.b16 %v723
        %v2155 = vunpack.c.h.b16 %v723
        %v2156 = vunpack.c.l.b16 %v724
        %v2157 = vunpack.c.h.b16 %v724
        %v2158 = vunpack.c.l.b16 %v725
        %v2159 = vunpack.c.h.b16 %v725
        %v2160 = vunpack.c.l.b16 %v726
        %v2161 = vunpack.c.h.b16 %v726
        %v2162 = vunpack.c.l.b16 %v727
        %v2163 = vunpack.c.h.b16 %v727
        %v2164 = vunpack.c.l.b16 %v728
        %v2165 = vunpack.c.h.b16 %v728
        %v2166 = vunpack.c.l.b16 %v729
        %v2167 = vunpack.c.h.b16 %v729
        %v2168 = vunpack.c.l.b16 %v730
        %v2169 = vunpack.c.h.b16 %v730
        %v2170 = vunpack.c.l.b16 %v731
        %v2171 = vunpack.c.h.b16 %v731
        %v2172 = vunpack.c.l.b16 %v732
        %v2173 = vunpack.c.h.b16 %v732
        %v2174 = vunpack.c.l.b16 %v733
        %v2175 = vunpack.c.h.b16 %v733
        %v2176 = vunpack.c.l.b16 %v734
        %v2177 = vunpack.c.h.b16 %v734
        %v2178 = vunpack.c.l.b16 %v735
        %v2179 = vunpack.c.h.b16 %v735
        %v2180 = vunpack.c.l.b16 %v736
        %v2181 = vunpack.c.h.b16 %v736
        %v2182 = vunpack.c.l.b16 %v737
        %v2183 = vunpack.c.h.b16 %v737
        %v2184 = vunpack.c.l.b16 %v738
        %v2185 = vunpack.c.h.b16 %v738
        %v2186 = vunpack.c.l.b16 %v739
        %v2187 = vunpack.c.h.b16 %v739
        %v2188 = vunpack.c.l.b16 %v740
        %v2189 = vunpack.c.h.b16 %v740
        %v2190 = vunpack.c.l.b16 %v741
        %v2191 = vunpack.c.h.b16 %v741
        %v2192 = vunpack.c.l.b16 %v742
        %v2193 = vunpack.c.h.b16 %v742
        %v2194 = vunpack.c.l.b16 %v743
        %v2195 = vunpack.c.h.b16 %v743
        %v2196 = vunpack.c.l.b16 %v744
        %v2197 = vunpack.c.h.b16 %v744
        %v2198 = vunpack.c.l.b16 %v745
        %v2199 = vunpack.c.h.b16 %v745
        %v2200 = vunpack.c.l.b16 %v746
        %v2201 = vunpack.c.h.b16 %v746
        %v2202 = vunpack.c.l.b16 %v747
        %v2203 = vunpack.c.h.b16 %v747
        %v2204 = vunpack.c.l.b16 %v748
        %v2205 = vunpack.c.h.b16 %v748
        %v2206 = vunpack.c.l.b16 %v749
        %v2207 = vunpack.c.h.b16 %v749
        %v2208 = vunpack.c.l.b16 %v750
        %v2209 = vunpack.c.h.b16 %v750
        %v2210 = vunpack.c.l.b16 %v751
        %v2211 = vunpack.c.h.b16 %v751
        %v2212 = vunpack.c.l.b16 %v752
        %v2213 = vunpack.c.h.b16 %v752
        %v2214 = vunpack.c.l.b16 %v753
        %v2215 = vunpack.c.h.b16 %v753
        %v2216 = vunpack.c.l.b16 %v754
        %v2217 = vunpack.c.h.b16 %v754
        %v2218 = vunpack.c.l.b16 %v755
        %v2219 = vunpack.c.h.b16 %v755
        %v2220 = vunpack.c.l.b16 %v756
        %v2221 = vunpack.c.h.b16 %v756
        %v2222 = vunpack.c.l.b16 %v757
        %v2223 = vunpack.c.h.b16 %v757
        %v2224 = vunpack.c.l.b16 %v758
        %v2225 = vunpack.c.h.b16 %v758
        %v2226 = vunpack.c.l.b16 %v759
        %v2227 = vunpack.c.h.b16 %v759
        %v2228 = vunpack.c.l.b16 %v760
        %v2229 = vunpack.c.h.b16 %v760
        %v2230 = vunpack.c.l.b16 %v761
        %v2231 = vunpack.c.h.b16 %v761
        %v2232 = vunpack.c.l.b16 %v762
        %v2233 = vunpack.c.h.b16 %v762
        %v2234 = vunpack.c.l.b16 %v763
        %v2235 = vunpack.c.h.b16 %v763
        %v2236 = vunpack.c.l.b16 %v764
        %v2237 = vunpack.c.h.b16 %v764
        %v2238 = vunpack.c.l.b16 %v765
        %v2239 = vunpack.c.h.b16 %v765
        %v2240 = vunpack.c.l.b16 %v766
        %v2241 = vunpack.c.h.b16 %v766
        %v2242 = vunpack.c.l.b16 %v767
        %v2243 = vunpack.c.h.b16 %v767
        %v2244 = vunpack.c.l.b16 %v768
        %v2245 = vunpack.c.h.b16 %v768
        %v2246 = vunpack.c.l.b16 %v769
        %v2247 = vunpack.c.h.b16 %v769
        %v2248 = vunpack.c.l.b16 %v770
        %v2249 = vunpack.c.h.b16 %v770
        %v2250 = vunpack.c.l.b16 %v771
        %v2251 = vunpack.c.h.b16 %v771
        %v2252 = vunpack.c.l.b16 %v772
        %v2253 = vunpack.c.h.b16 %v772
        %v2254 = vunpack.c.l.b16 %v773
        %v2255 = vunpack.c.h.b16 %v773
        %v2256 = vunpack.c.l.b16 %v774
        %v2257 = vunpack.c.h.b16 %v774
        %v2258 = vunpack.c.l.b16 %v775
        %v2259 = vunpack.c.h.b16 %v775
        %v2260 = vunpack.c.l.b16 %v776
        %v2261 = vunpack.c.h.b16 %v776
        %v2262 = vunpack.c.l.b16 %v777
        %v2263 = vunpack.c.h.b16 %v777
        %v2264 = vunpack.c.l.b16 %v778
        %v2265 = vunpack.c.h.b16 %v778
        %v2266 = vunpack.c.l.b16 %v779
        %v2267 = vunpack.c.h.b16 %v779
        %v2268 = vunpack.c.l.b16 %v780
        %v2269 = vunpack.c.h.b16 %v780
        %v2270 = vunpack.c.l.b16 %v781
        %v2271 = vunpack.c.h.b16 %v781
        %v2272 = vunpack.c.l.b16 %v782
        %v2273 = vunpack.c.h.b16 %v782
        %v2274 = vunpack.c.l.b16 %v783
        %v2275 = vunpack.c.h.b16 %v783
        %v2276 = vunpack.c.l.b16 %v784
        %v2277 = vunpack.c.h.b16 %v784
        %v2278 = vunpack.c.l.b16 %v785
        %v2279 = vunpack.c.h.b16 %v785
        %v2280 = vunpack.c.l.b16 %v786
        %v2281 = vunpack.c.h.b16 %v786
        %v2282 = vunpack.c.l.b16 %v787
        %v2283 = vunpack.c.h.b16 %v787
        %v2284 = vunpack.c.l.b16 %v788
        %v2285 = vunpack.c.h.b16 %v788
        %v2286 = vunpack.c.l.b16 %v789
        %v2287 = vunpack.c.h.b16 %v789
        %v2288 = vunpack.c.l.b16 %v790
        %v2289 = vunpack.c.h.b16 %v790
        %v2290 = vunpack.c.l.b16 %v791
        %v2291 = vunpack.c.h.b16 %v791
        %v2292 = vunpack.c.l.b16 %v792
        %v2293 = vunpack.c.h.b16 %v792
        %v2294 = vunpack.c.l.b16 %v793
        %v2295 = vunpack.c.h.b16 %v793
        %v2296 = vunpack.c.l.b16 %v794
        %v2297 = vunpack.c.h.b16 %v794
        %v2298 = vunpack.c.l.b16 %v795
        %v2299 = vunpack.c.h.b16 %v795
        %v2300 = vunpack.c.l.b16 %v796
        %v2301 = vunpack.c.h.b16 %v796
        %v2302 = vunpack.c.l.b16 %v797
        %v2303 = vunpack.c.h.b16 %v797
        %v2304 = vunpack.c.l.b16 %v798
        %v2305 = vunpack.c.h.b16 %v798
        %v2306 = vunpack.c.l.b16 %v799
        %v2307 = vunpack.c.h.b16 %v799
        %v2308 = vunpack.c.l.b16 %v800
        %v2309 = vunpack.c.h.b16 %v800
        %v2310 = vunpack.c.l.b16 %v801
        %v2311 = vunpack.c.h.b16 %v801
        %v2312 = vunpack.c.l.b16 %v802
        %v2313 = vunpack.c.h.b16 %v802
        %v2314 = vunpack.c.l.b16 %v803
        %v2315 = vunpack.c.h.b16 %v803
        %v2316 = vunpack.c.l.b16 %v804
        %v2317 = vunpack.c.h.b16 %v804
        %v2318 = vunpack.c.l.b16 %v805
        %v2319 = vunpack.c.h.b16 %v805
        %v2320 = vunpack.c.l.b16 %v806
        %v2321 = vunpack.c.h.b16 %v806
        %v2322 = vunpack.c.l.b16 %v807
        %v2323 = vunpack.c.h.b16 %v807
        %v2324 = vunpack.c.l.b16 %v808
        %v2325 = vunpack.c.h.b16 %v808
        %v2326 = vunpack.c.l.b16 %v809
        %v2327 = vunpack.c.h.b16 %v809
        %v2328 = vunpack.c.l.b16 %v810
        %v2329 = vunpack.c.h.b16 %v810
        %v2330 = vunpack.c.l.b16 %v811
        %v2331 = vunpack.c.h.b16 %v811
        %v2332 = vunpack.c.l.b16 %v812
        %v2333 = vunpack.c.h.b16 %v812
        %v2334 = vunpack.c.l.b16 %v813
        %v2335 = vunpack.c.h.b16 %v813
        %v2336 = vunpack.c.l.b16 %v814
        %v2337 = vunpack.c.h.b16 %v814
        %v2338 = vunpack.c.l.b16 %v815
        %v2339 = vunpack.c.h.b16 %v815
        %v2340 = vunpack.c.l.b16 %v816
        %v2341 = vunpack.c.h.b16 %v816
        %v2342 = vunpack.c.l.b16 %v817
        %v2343 = vunpack.c.h.b16 %v817
        %v2344 = vunpack.c.l.b16 %v818
        %v2345 = vunpack.c.h.b16 %v818
        %v2346 = vunpack.c.l.b16 %v819
        %v2347 = vunpack.c.h.b16 %v819
        %v2348 = vunpack.c.l.b16 %v820
        %v2349 = vunpack.c.h.b16 %v820
        %v2350 = vunpack.c.l.b16 %v821
        %v2351 = vunpack.c.h.b16 %v821
        %v2352 = vunpack.c.l.b16 %v822
        %v2353 = vunpack.c.h.b16 %v822
        %v2354 = vunpack.c.l.b16 %v823
        %v2355 = vunpack.c.h.b16 %v823
        %v2356 = vunpack.c.l.b16 %v824
        %v2357 = vunpack.c.h.b16 %v824
        %v2358 = vunpack.c.l.b16 %v825
        %v2359 = vunpack.c.h.b16 %v825
        %v2360 = vunpack.c.l.b16 %v826
        %v2361 = vunpack.c.h.b16 %v826
        %v2362 = vunpack.c.l.b16 %v827
        %v2363 = vunpack.c.h.b16 %v827
        %v2364 = vunpack.c.l.b16 %v828
        %v2365 = vunpack.c.h.b16 %v828
        %v2366 = vunpack.c.l.b16 %v829
        %v2367 = vunpack.c.h.b16 %v829
        %v2368 = vunpack.c.l.b16 %v830
        %v2369 = vunpack.c.h.b16 %v830
        %v2370 = vunpack.c.l.b16 %v831
        %v2371 = vunpack.c.h.b16 %v831
        %v2372 = vunpack.c.l.b16 %v832
        %v2373 = vunpack.c.h.b16 %v832
        %v2374 = vunpack.c.l.b16 %v833
        %v2375 = vunpack.c.h.b16 %v833
        %v2376 = vunpack.c.l.b16 %v834
        %v2377 = vunpack.c.h.b16 %v834
        %v2378 = vunpack.c.l.b16 %v835
        %v2379 = vunpack.c.h.b16 %v835
        %v2380 = vunpack.c.l.b16 %v836
        %v2381 = vunpack.c.h.b16 %v836
        %v2382 = vunpack.c.l.b16 %v837
        %v2383 = vunpack.c.h.b16 %v837
        %v2384 = vunpack.c.l.b16 %v838
        %v2385 = vunpack.c.h.b16 %v838
        %v2386 = vunpack.c.l.b16 %v839
        %v2387 = vunpack.c.h.b16 %v839
        %v2388 = vunpack.c.l.b16 %v840
        %v2389 = vunpack.c.h.b16 %v840
        %v2390 = vunpack.c.l.b16 %v841
        %v2391 = vunpack.c.h.b16 %v841
        %v2392 = vunpack.c.l.b16 %v842
        %v2393 = vunpack.c.h.b16 %v842
        %v2394 = vunpack.c.l.b16 %v843
        %v2395 = vunpack.c.h.b16 %v843
        %v2396 = vunpack.c.l.b16 %v844
        %v2397 = vunpack.c.h.b16 %v844
        %v2398 = vunpack.c.l.b16 %v845
        %v2399 = vunpack.c.h.b16 %v845
        %v2400 = vunpack.c.l.b16 %v846
        %v2401 = vunpack.c.h.b16 %v846
        %v2402 = vunpack.c.l.b16 %v847
        %v2403 = vunpack.c.h.b16 %v847
        %v2404 = vunpack.c.l.b16 %v848
        %v2405 = vunpack.c.h.b16 %v848
        %v2406 = vunpack.c.l.b16 %v849
        %v2407 = vunpack.c.h.b16 %v849
        %v2408 = vunpack.c.l.b16 %v850
        %v2409 = vunpack.c.h.b16 %v850
        %v2410 = vunpack.c.l.b16 %v851
        %v2411 = vunpack.c.h.b16 %v851
        %v2412 = vunpack.c.l.b16 %v852
        %v2413 = vunpack.c.h.b16 %v852
        %v2414 = vunpack.c.l.b16 %v853
        %v2415 = vunpack.c.h.b16 %v853
        %v2416 = vunpack.c.l.b16 %v854
        %v2417 = vunpack.c.h.b16 %v854
        %v2418 = vunpack.c.l.b16 %v855
        %v2419 = vunpack.c.h.b16 %v855
        %v2420 = vunpack.c.l.b16 %v856
        %v2421 = vunpack.c.h.b16 %v856
        %v2422 = vunpack.c.l.b16 %v857
        %v2423 = vunpack.c.h.b16 %v857
        %v2424 = vunpack.c.l.b16 %v858
        %v2425 = vunpack.c.h.b16 %v858
        %v2426 = vunpack.c.l.b16 %v859
        %v2427 = vunpack.c.h.b16 %v859
        %v2428 = vunpack.c.l.b16 %v860
        %v2429 = vunpack.c.h.b16 %v860
        %v2430 = vunpack.c.l.b16 %v861
        %v2431 = vunpack.c.h.b16 %v861
        %v2432 = vunpack.c.l.b16 %v862
        %v2433 = vunpack.c.h.b16 %v862
        %v2434 = vunpack.c.l.b16 %v863
        %v2435 = vunpack.c.h.b16 %v863
        %v2436 = vunpack.c.l.b16 %v864
        %v2437 = vunpack.c.h.b16 %v864
        %v2438 = vunpack.c.l.b16 %v865
        %v2439 = vunpack.c.h.b16 %v865
        %v2440 = vunpack.c.l.b16 %v866
        %v2441 = vunpack.c.h.b16 %v866
        %v2442 = vunpack.c.l.b16 %v867
        %v2443 = vunpack.c.h.b16 %v867
        %v2444 = vunpack.c.l.b16 %v868
        %v2445 = vunpack.c.h.b16 %v868
        %v2446 = vunpack.c.l.b16 %v869
        %v2447 = vunpack.c.h.b16 %v869
        %v2448 = vpack.c.b16 %v1432, %v1424
        %v2449 = vpack.c.b16 %v1433, %v1425
        %v2450 = vpack.c.b16 %v1434, %v1426
        %v2451 = vpack.c.b16 %v1435, %v1427
        %v2452 = vpack.c.b16 %v1436, %v1428
        %v2453 = vpack.c.b16 %v1437, %v1429
        %v2454 = vpack.c.b16 %v1438, %v1430
        %v2455 = vpack.c.b16 %v1439, %v1431
        %v2456 = vpack.c.b16 %v1448, %v1440
        %v2457 = vpack.c.b16 %v1449, %v1441
        %v2458 = vpack.c.b16 %v1450, %v1442
        %v2459 = vpack.c.b16 %v1451, %v1443
        %v2460 = vpack.c.b16 %v1452, %v1444
        %v2461 = vpack.c.b16 %v1453, %v1445
        %v2462 = vpack.c.b16 %v1454, %v1446
        %v2463 = vpack.c.b16 %v1455, %v1447
        %v2464 = vpack.c.b16 %v1464, %v1456
        %v2465 = vpack.c.b16 %v1465, %v1457
        %v2466 = vpack.c.b16 %v1466, %v1458
        %v2467 = vpack.c.b16 %v1467, %v1459
        %v2468 = vpack.c.b16 %v1468, %v1460
        %v2469 = vpack.c.b16 %v1469, %v1461
        %v2470 = vpack.c.b16 %v1470, %v1462
        %v2471 = vpack.c.b16 %v1471, %v1463
        %v2472 = vpack.c.b16 %v1480, %v1472
        %v2473 = vpack.c.b16 %v1481, %v1473
        %v2474 = vpack.c.b16 %v1482, %v1474
        %v2475 = vpack.c.b16 %v1483, %v1475
        %v2476 = vpack.c.b16 %v1484, %v1476
        %v2477 = vpack.c.b16 %v1485, %v1477
        %v2478 = vpack.c.b16 %v1486, %v1478
        %v2479 = vpack.c.b16 %v1487, %v1479
        %v2480 = vpack.c.b16 %v1496, %v1488
        %v2481 = vpack.c.b16 %v1497, %v1489
        %v2482 = vpack.c.b16 %v1498, %v1490
        %v2483 = vpack.c.b16 %v1499, %v1491
        %v2484 = vpack.c.b16 %v1500, %v1492
        %v2485 = vpack.c.b16 %v1501, %v1493
        %v2486 = vpack.c.b16 %v1502, %v1494
        %v2487 = vpack.c.b16 %v1503, %v1495
        %v2488 = vpack.c.b16 %v1512, %v1504
        %v2489 = vpack.c.b16 %v1513, %v1505
        %v2490 = vpack.c.b16 %v1514, %v1506
        %v2491 = vpack.c.b16 %v1515, %v1507
        %v2492 = vpack.c.b16 %v1516, %v1508
        %v2493 = vpack.c.b16 %v1517, %v1509
        %v2494 = vpack.c.b16 %v1518, %v1510
        %v2495 = vpack.c.b16 %v1519, %v1511
        %v2496 = vpack.c.b16 %v1528, %v1520
        %v2497 = vpack.c.b16 %v1529, %v1521
        %v2498 = vpack.c.b16 %v1530, %v1522
        %v2499 = vpack.c.b16 %v1531, %v1523
        %v2500 = vpack.c.b16 %v1532, %v1524
        %v2501 = vpack.c.b16 %v1533, %v1525
        %v2502 = vpack.c.b16 %v1534, %v1526
        %v2503 = vpack.c.b16 %v1535, %v1527
        %v2504 = vpack.c.b16 %v1544, %v1536
        %v2505 = vpack.c.b16 %v1545, %v1537
        %v2506 = vpack.c.b16 %v1546, %v1538
        %v2507 = vpack.c.b16 %v1547, %v1539
        %v2508 = vpack.c.b16 %v1548, %v1540
        %v2509 = vpack.c.b16 %v1549, %v1541
        %v2510 = vpack.c.b16 %v1550, %v1542
        %v2511 = vpack.c.b16 %v1551, %v1543
        %v2512 = vpack.c.b16 %v1560, %v1552
        %v2513 = vpack.c.b16 %v1561, %v1553
        %v2514 = vpack.c.b16 %v1562, %v1554
        %v2515 = vpack.c.b16 %v1563, %v1555
        %v2516 = vpack.c.b16 %v1564, %v1556
        %v2517 = vpack.c.b16 %v1565, %v1557
        %v2518 = vpack.c.b16 %v1566, %v1558
        %v2519 = vpack.c.b16 %v1567, %v1559
        %v2520 = vpack.c.b16 %v1576, %v1568
        %v2521 = vpack.c.b16 %v1577, %v1569
        %v2522 = vpack.c.b16 %v1578, %v1570
        %v2523 = vpack.c.b16 %v1579, %v1571
        %v2524 = vpack.c.b16 %v1580, %v1572
        %v2525 = vpack.c.b16 %v1581, %v1573
        %v2526 = vpack.c.b16 %v1582, %v1574
        %v2527 = vpack.c.b16 %v1583, %v1575
        %v2528 = vpack.c.b16 %v1592, %v1584
        %v2529 = vpack.c.b16 %v1593, %v1585
        %v2530 = vpack.c.b16 %v1594, %v1586
        %v2531 = vpack.c.b16 %v1595, %v1587
        %v2532 = vpack.c.b16 %v1596, %v1588
        %v2533 = vpack.c.b16 %v1597, %v1589
        %v2534 = vpack.c.b16 %v1598, %v1590
        %v2535 = vpack.c.b16 %v1599, %v1591
        %v2536 = vpack.c.b16 %v1608, %v1600
        %v2537 = vpack.c.b16 %v1609, %v1601
        %v2538 = vpack.c.b16 %v1610, %v1602
        %v2539 = vpack.c.b16 %v1611, %v1603
        %v2540 = vpack.c.b16 %v1612, %v1604
        %v2541 = vpack.c.b16 %v1613, %v1605
        %v2542 = vpack.c.b16 %v1614, %v1606
        %v2543 = vpack.c.b16 %v1615, %v1607
        %v2544 = vpack.c.b16 %v1624, %v1616
        %v2545 = vpack.c.b16 %v1625, %v1617
        %v2546 = vpack.c.b16 %v1626, %v1618
        %v2547 = vpack.c.b16 %v1627, %v1619
        %v2548 = vpack.c.b16 %v1628, %v1620
        %v2549 = vpack.c.b16 %v1629, %v1621
        %v2550 = vpack.c.b16 %v1630, %v1622
        %v2551 = vpack.c.b16 %v1631, %v1623
        %v2552 = vpack.c.b16 %v1640, %v1632
        %v2553 = vpack.c.b16 %v1641, %v1633
        %v2554 = vpack.c.b16 %v1642, %v1634
        %v2555 = vpack.c.b16 %v1643, %v1635
        %v2556 = vpack.c.b16 %v1644, %v1636
        %v2557 = vpack.c.b16 %v1645, %v1637
        %v2558 = vpack.c.b16 %v1646, %v1638
        %v2559 = vpack.c.b16 %v1647, %v1639
        %v2560 = vpack.c.b16 %v1656, %v1648
        %v2561 = vpack.c.b16 %v1657, %v1649
        %v2562 = vpack.c.b16 %v1658, %v1650
        %v2563 = vpack.c.b16 %v1659, %v1651
        %v2564 = vpack.c.b16 %v1660, %v1652
        %v2565 = vpack.c.b16 %v1661, %v1653
        %v2566 = vpack.c.b16 %v1662, %v1654
        %v2567 = vpack.c.b16 %v1663, %v1655
        %v2568 = vpack.c.b16 %v1672, %v1664
        %v2569 = vpack.c.b16 %v1673, %v1665
        %v2570 = vpack.c.b16 %v1674, %v1666
        %v2571 = vpack.c.b16 %v1675, %v1667
        %v2572 = vpack.c.b16 %v1676, %v1668
        %v2573 = vpack.c.b16 %v1677, %v1669
        %v2574 = vpack.c.b16 %v1678, %v1670
        %v2575 = vpack.c.b16 %v1679, %v1671
        %v2576 = vpack.c.b16 %v1688, %v1680
        %v2577 = vpack.c.b16 %v1689, %v1681
        %v2578 = vpack.c.b16 %v1690, %v1682
        %v2579 = vpack.c.b16 %v1691, %v1683
        %v2580 = vpack.c.b16 %v1692, %v1684
        %v2581 = vpack.c.b16 %v1693, %v1685
        %v2582 = vpack.c.b16 %v1694, %v1686
        %v2583 = vpack.c.b16 %v1695, %v1687
        %v2584 = vpack.c.b16 %v1704, %v1696
        %v2585 = vpack.c.b16 %v1705, %v1697
        %v2586 = vpack.c.b16 %v1706, %v1698
        %v2587 = vpack.c.b16 %v1707, %v1699
        %v2588 = vpack.c.b16 %v1708, %v1700
        %v2589 = vpack.c.b16 %v1709, %v1701
        %v2590 = vpack.c.b16 %v1710, %v1702
        %v2591 = vpack.c.b16 %v1711, %v1703
        %v2592 = vpack.c.b16 %v1720, %v1712
        %v2593 = vpack.c.b16 %v1721, %v1713
        %v2594 = vpack.c.b16 %v1722, %v1714
        %v2595 = vpack.c.b16 %v1723, %v1715
        %v2596 = vpack.c.b16 %v1724, %v1716
        %v2597 = vpack.c.b16 %v1725, %v1717
        %v2598 = vpack.c.b16 %v1726, %v1718
        %v2599 = vpack.c.b16 %v1727, %v1719
        %v2600 = vpack.c.b16 %v1736, %v1728
        %v2601 = vpack.c.b16 %v1737, %v1729
        %v2602 = vpack.c.b16 %v1738, %v1730
        %v2603 = vpack.c.b16 %v1739, %v1731
        %v2604 = vpack.c.b16 %v1740, %v1732
        %v2605 = vpack.c.b16 %v1741, %v1733
        %v2606 = vpack.c.b16 %v1742, %v1734
        %v2607 = vpack.c.b16 %v1743, %v1735
        %v2608 = vpack.c.b16 %v1752, %v1744
        %v2609 = vpack.c.b16 %v1753, %v1745
        %v2610 = vpack.c.b16 %v1754, %v1746
        %v2611 = vpack.c.b16 %v1755, %v1747
        %v2612 = vpack.c.b16 %v1756, %v1748
        %v2613 = vpack.c.b16 %v1757, %v1749
        %v2614 = vpack.c.b16 %v1758, %v1750
        %v2615 = vpack.c.b16 %v1759, %v1751
        %v2616 = vpack.c.b16 %v1768, %v1760
        %v2617 = vpack.c.b16 %v1769, %v1761
        %v2618 = vpack.c.b16 %v1770, %v1762
        %v2619 = vpack.c.b16 %v1771, %v1763
        %v2620 = vpack.c.b16 %v1772, %v1764
        %v2621 = vpack.c.b16 %v1773, %v1765
        %v2622 = vpack.c.b16 %v1774, %v1766
        %v2623 = vpack.c.b16 %v1775, %v1767
        %v2624 = vpack.c.b16 %v1784, %v1776
        %v2625 = vpack.c.b16 %v1785, %v1777
        %v2626 = vpack.c.b16 %v1786, %v1778
        %v2627 = vpack.c.b16 %v1787, %v1779
        %v2628 = vpack.c.b16 %v1788, %v1780
        %v2629 = vpack.c.b16 %v1789, %v1781
        %v2630 = vpack.c.b16 %v1790, %v1782
        %v2631 = vpack.c.b16 %v1791, %v1783
        %v2632 = vpack.c.b16 %v1800, %v1792
        %v2633 = vpack.c.b16 %v1801, %v1793
        %v2634 = vpack.c.b16 %v1802, %v1794
        %v2635 = vpack.c.b16 %v1803, %v1795
        %v2636 = vpack.c.b16 %v1804, %v1796
        %v2637 = vpack.c.b16 %v1805, %v1797
        %v2638 = vpack.c.b16 %v1806, %v1798
        %v2639 = vpack.c.b16 %v1807, %v1799
        %v2640 = vpack.c.b16 %v1816, %v1808
        %v2641 = vpack.c.b16 %v1817, %v1809
        %v2642 = vpack.c.b16 %v1818, %v1810
        %v2643 = vpack.c.b16 %v1819, %v1811
        %v2644 = vpack.c.b16 %v1820, %v1812
        %v2645 = vpack.c.b16 %v1821, %v1813
        %v2646 = vpack.c.b16 %v1822, %v1814
        %v2647 = vpack.c.b16 %v1823, %v1815
        %v2648 = vpack.c.b16 %v1832, %v1824
        %v2649 = vpack.c.b16 %v1833, %v1825
        %v2650 = vpack.c.b16 %v1834, %v1826
        %v2651 = vpack.c.b16 %v1835, %v1827
        %v2652 = vpack.c.b16 %v1836, %v1828
        %v2653 = vpack.c.b16 %v1837, %v1829
        %v2654 = vpack.c.b16 %v1838, %v1830
        %v2655 = vpack.c.b16 %v1839, %v1831
        %v2656 = vpack.c.b16 %v1848, %v1840
        %v2657 = vpack.c.b16 %v1849, %v1841
        %v2658 = vpack.c.b16 %v1850, %v1842
        %v2659 = vpack.c.b16 %v1851, %v1843
        %v2660 = vpack.c.b16 %v1852, %v1844
        %v2661 = vpack.c.b16 %v1853, %v1845
        %v2662 = vpack.c.b16 %v1854, %v1846
        %v2663 = vpack.c.b16 %v1855, %v1847
        %v2664 = vpack.c.b16 %v1864, %v1856
        %v2665 = vpack.c.b16 %v1865, %v1857
        %v2666 = vpack.c.b16 %v1866, %v1858
        %v2667 = vpack.c.b16 %v1867, %v1859
        %v2668 = vpack.c.b16 %v1868, %v1860
        %v2669 = vpack.c.b16 %v1869, %v1861
        %v2670 = vpack.c.b16 %v1870, %v1862
        %v2671 = vpack.c.b16 %v1871, %v1863
        %v2672 = vpack.c.b16 %v1880, %v1872
        %v2673 = vpack.c.b16 %v1881, %v1873
        %v2674 = vpack.c.b16 %v1882, %v1874
        %v2675 = vpack.c.b16 %v1883, %v1875
        %v2676 = vpack.c.b16 %v1884, %v1876
        %v2677 = vpack.c.b16 %v1885, %v1877
        %v2678 = vpack.c.b16 %v1886, %v1878
        %v2679 = vpack.c.b16 %v1887, %v1879
        %v2680 = vpack.c.b16 %v1896, %v1888
        %v2681 = vpack.c.b16 %v1897, %v1889
        %v2682 = vpack.c.b16 %v1898, %v1890
        %v2683 = vpack.c.b16 %v1899, %v1891
        %v2684 = vpack.c.b16 %v1900, %v1892
        %v2685 = vpack.c.b16 %v1901, %v1893
        %v2686 = vpack.c.b16 %v1902, %v1894
        %v2687 = vpack.c.b16 %v1903, %v1895
        %v2688 = vpack.c.b16 %v1912, %v1904
        %v2689 = vpack.c.b16 %v1913, %v1905
        %v2690 = vpack.c.b16 %v1914, %v1906
        %v2691 = vpack.c.b16 %v1915, %v1907
        %v2692 = vpack.c.b16 %v1916, %v1908
        %v2693 = vpack.c.b16 %v1917, %v1909
        %v2694 = vpack.c.b16 %v1918, %v1910
        %v2695 = vpack.c.b16 %v1919, %v1911
        %v2696 = vpack.c.b16 %v1928, %v1920
        %v2697 = vpack.c.b16 %v1929, %v1921
        %v2698 = vpack.c.b16 %v1930, %v1922
        %v2699 = vpack.c.b16 %v1931, %v1923
        %v2700 = vpack.c.b16 %v1932, %v1924
        %v2701 = vpack.c.b16 %v1933, %v1925
        %v2702 = vpack.c.b16 %v1934, %v1926
        %v2703 = vpack.c.b16 %v1935, %v1927
        %v2704 = vpack.c.b16 %v1944, %v1936
        %v2705 = vpack.c.b16 %v1945, %v1937
        %v2706 = vpack.c.b16 %v1946, %v1938
        %v2707 = vpack.c.b16 %v1947, %v1939
        %v2708 = vpack.c.b16 %v1948, %v1940
        %v2709 = vpack.c.b16 %v1949, %v1941
        %v2710 = vpack.c.b16 %v1950, %v1942
        %v2711 = vpack.c.b16 %v1951, %v1943
        %v2712 = vpack.c.b16 %v1960, %v1952
        %v2713 = vpack.c.b16 %v1961, %v1953
        %v2714 = vpack.c.b16 %v1962, %v1954
        %v2715 = vpack.c.b16 %v1963, %v1955
        %v2716 = vpack.c.b16 %v1964, %v1956
        %v2717 = vpack.c.b16 %v1965, %v1957
        %v2718 = vpack.c.b16 %v1966, %v1958
        %v2719 = vpack.c.b16 %v1967, %v1959
        %v2720 = vpack.c.b16 %v1976, %v1968
        %v2721 = vpack.c.b16 %v1977, %v1969
        %v2722 = vpack.c.b16 %v1978, %v1970
        %v2723 = vpack.c.b16 %v1979, %v1971
        %v2724 = vpack.c.b16 %v1980, %v1972
        %v2725 = vpack.c.b16 %v1981, %v1973
        %v2726 = vpack.c.b16 %v1982, %v1974
        %v2727 = vpack.c.b16 %v1983, %v1975
        %v2728 = vpack.c.b16 %v1992, %v1984
        %v2729 = vpack.c.b16 %v1993, %v1985
        %v2730 = vpack.c.b16 %v1994, %v1986
        %v2731 = vpack.c.b16 %v1995, %v1987
        %v2732 = vpack.c.b16 %v1996, %v1988
        %v2733 = vpack.c.b16 %v1997, %v1989
        %v2734 = vpack.c.b16 %v1998, %v1990
        %v2735 = vpack.c.b16 %v1999, %v1991
        %v2736 = vpack.c.b16 %v2008, %v2000
        %v2737 = vpack.c.b16 %v2009, %v2001
        %v2738 = vpack.c.b16 %v2010, %v2002
        %v2739 = vpack.c.b16 %v2011, %v2003
        %v2740 = vpack.c.b16 %v2012, %v2004
        %v2741 = vpack.c.b16 %v2013, %v2005
        %v2742 = vpack.c.b16 %v2014, %v2006
        %v2743 = vpack.c.b16 %v2015, %v2007
        %v2744 = vpack.c.b16 %v2024, %v2016
        %v2745 = vpack.c.b16 %v2025, %v2017
        %v2746 = vpack.c.b16 %v2026, %v2018
        %v2747 = vpack.c.b16 %v2027, %v2019
        %v2748 = vpack.c.b16 %v2028, %v2020
        %v2749 = vpack.c.b16 %v2029, %v2021
        %v2750 = vpack.c.b16 %v2030, %v2022
        %v2751 = vpack.c.b16 %v2031, %v2023
        %v2752 = vpack.c.b16 %v2040, %v2032
        %v2753 = vpack.c.b16 %v2041, %v2033
        %v2754 = vpack.c.b16 %v2042, %v2034
        %v2755 = vpack.c.b16 %v2043, %v2035
        %v2756 = vpack.c.b16 %v2044, %v2036
        %v2757 = vpack.c.b16 %v2045, %v2037
        %v2758 = vpack.c.b16 %v2046, %v2038
        %v2759 = vpack.c.b16 %v2047, %v2039
        %v2760 = vpack.c.b16 %v2056, %v2048
        %v2761 = vpack.c.b16 %v2057, %v2049
        %v2762 = vpack.c.b16 %v2058, %v2050
        %v2763 = vpack.c.b16 %v2059, %v2051
        %v2764 = vpack.c.b16 %v2060, %v2052
        %v2765 = vpack.c.b16 %v2061, %v2053
        %v2766 = vpack.c.b16 %v2062, %v2054
        %v2767 = vpack.c.b16 %v2063, %v2055
        %v2768 = vpack.c.b16 %v2072, %v2064
        %v2769 = vpack.c.b16 %v2073, %v2065
        %v2770 = vpack.c.b16 %v2074, %v2066
        %v2771 = vpack.c.b16 %v2075, %v2067
        %v2772 = vpack.c.b16 %v2076, %v2068
        %v2773 = vpack.c.b16 %v2077, %v2069
        %v2774 = vpack.c.b16 %v2078, %v2070
        %v2775 = vpack.c.b16 %v2079, %v2071
        %v2776 = vpack.c.b16 %v2088, %v2080
        %v2777 = vpack.c.b16 %v2089, %v2081
        %v2778 = vpack.c.b16 %v2090, %v2082
        %v2779 = vpack.c.b16 %v2091, %v2083
        %v2780 = vpack.c.b16 %v2092, %v2084
        %v2781 = vpack.c.b16 %v2093, %v2085
        %v2782 = vpack.c.b16 %v2094, %v2086
        %v2783 = vpack.c.b16 %v2095, %v2087
        %v2784 = vpack.c.b16 %v2104, %v2096
        %v2785 = vpack.c.b16 %v2105, %v2097
        %v2786 = vpack.c.b16 %v2106, %v2098
        %v2787 = vpack.c.b16 %v2107, %v2099
        %v2788 = vpack.c.b16 %v2108, %v2100
        %v2789 = vpack.c.b16 %v2109, %v2101
        %v2790 = vpack.c.b16 %v2110, %v2102
        %v2791 = vpack.c.b16 %v2111, %v2103
        %v2792 = vpack.c.b16 %v2120, %v2112
        %v2793 = vpack.c.b16 %v2121, %v2113
        %v2794 = vpack.c.b16 %v2122, %v2114
        %v2795 = vpack.c.b16 %v2123, %v2115
        %v2796 = vpack.c.b16 %v2124, %v2116
        %v2797 = vpack.c.b16 %v2125, %v2117
        %v2798 = vpack.c.b16 %v2126, %v2118
        %v2799 = vpack.c.b16 %v2127, %v2119
        %v2800 = vpack.c.b16 %v2136, %v2128
        %v2801 = vpack.c.b16 %v2137, %v2129
        %v2802 = vpack.c.b16 %v2138, %v2130
        %v2803 = vpack.c.b16 %v2139, %v2131
        %v2804 = vpack.c.b16 %v2140, %v2132
        %v2805 = vpack.c.b16 %v2141, %v2133
        %v2806 = vpack.c.b16 %v2142, %v2134
        %v2807 = vpack.c.b16 %v2143, %v2135
        %v2808 = vpack.c.b16 %v2152, %v2144
        %v2809 = vpack.c.b16 %v2153, %v2145
        %v2810 = vpack.c.b16 %v2154, %v2146
        %v2811 = vpack.c.b16 %v2155, %v2147
        %v2812 = vpack.c.b16 %v2156, %v2148
        %v2813 = vpack.c.b16 %v2157, %v2149
        %v2814 = vpack.c.b16 %v2158, %v2150
        %v2815 = vpack.c.b16 %v2159, %v2151
        %v2816 = vpack.c.b16 %v2168, %v2160
        %v2817 = vpack.c.b16 %v2169, %v2161
        %v2818 = vpack.c.b16 %v2170, %v2162
        %v2819 = vpack.c.b16 %v2171, %v2163
        %v2820 = vpack.c.b16 %v2172, %v2164
        %v2821 = vpack.c.b16 %v2173, %v2165
        %v2822 = vpack.c.b16 %v2174, %v2166
        %v2823 = vpack.c.b16 %v2175, %v2167
        %v2824 = vpack.c.b16 %v2184, %v2176
        %v2825 = vpack.c.b16 %v2185, %v2177
        %v2826 = vpack.c.b16 %v2186, %v2178
        %v2827 = vpack.c.b16 %v2187, %v2179
        %v2828 = vpack.c.b16 %v2188, %v2180
        %v2829 = vpack.c.b16 %v2189, %v2181
        %v2830 = vpack.c.b16 %v2190, %v2182
        %v2831 = vpack.c.b16 %v2191, %v2183
        %v2832 = vpack.c.b16 %v2200, %v2192
        %v2833 = vpack.c.b16 %v2201, %v2193
        %v2834 = vpack.c.b16 %v2202, %v2194
        %v2835 = vpack.c.b16 %v2203, %v2195
        %v2836 = vpack.c.b16 %v2204, %v2196
        %v2837 = vpack.c.b16 %v2205, %v2197
        %v2838 = vpack.c.b16 %v2206, %v2198
        %v2839 = vpack.c.b16 %v2207, %v2199
        %v2840 = vpack.c.b16 %v2216, %v2208
        %v2841 = vpack.c.b16 %v2217, %v2209
        %v2842 = vpack.c.b16 %v2218, %v2210
        %v2843 = vpack.c.b16 %v2219, %v2211
        %v2844 = vpack.c.b16 %v2220, %v2212
        %v2845 = vpack.c.b16 %v2221, %v2213
        %v2846 = vpack.c.b16 %v2222, %v2214
        %v2847 = vpack.c.b16 %v2223, %v2215
        %v2848 = vpack.c.b16 %v2232, %v2224
        %v2849 = vpack.c.b16 %v2233, %v2225
        %v2850 = vpack.c.b16 %v2234, %v2226
        %v2851 = vpack.c.b16 %v2235, %v2227
        %v2852 = vpack.c.b16 %v2236, %v2228
        %v2853 = vpack.c.b16 %v2237, %v2229
        %v2854 = vpack.c.b16 %v2238, %v2230
        %v2855 = vpack.c.b16 %v2239, %v2231
        %v2856 = vpack.c.b16 %v2248, %v2240
        %v2857 = vpack.c.b16 %v2249, %v2241
        %v2858 = vpack.c.b16 %v2250, %v2242
        %v2859 = vpack.c.b16 %v2251, %v2243
        %v2860 = vpack.c.b16 %v2252, %v2244
        %v2861 = vpack.c.b16 %v2253, %v2245
        %v2862 = vpack.c.b16 %v2254, %v2246
        %v2863 = vpack.c.b16 %v2255, %v2247
        %v2864 = vpack.c.b16 %v2264, %v2256
        %v2865 = vpack.c.b16 %v2265, %v2257
        %v2866 = vpack.c.b16 %v2266, %v2258
        %v2867 = vpack.c.b16 %v2267, %v2259
        %v2868 = vpack.c.b16 %v2268, %v2260
        %v2869 = vpack.c.b16 %v2269, %v2261
        %v2870 = vpack.c.b16 %v2270, %v2262
        %v2871 = vpack.c.b16 %v2271, %v2263
        %v2872 = vpack.c.b16 %v2280, %v2272
        %v2873 = vpack.c.b16 %v2281, %v2273
        %v2874 = vpack.c.b16 %v2282, %v2274
        %v2875 = vpack.c.b16 %v2283, %v2275
        %v2876 = vpack.c.b16 %v2284, %v2276
        %v2877 = vpack.c.b16 %v2285, %v2277
        %v2878 = vpack.c.b16 %v2286, %v2278
        %v2879 = vpack.c.b16 %v2287, %v2279
        %v2880 = vpack.c.b16 %v2296, %v2288
        %v2881 = vpack.c.b16 %v2297, %v2289
        %v2882 = vpack.c.b16 %v2298, %v2290
        %v2883 = vpack.c.b16 %v2299, %v2291
        %v2884 = vpack.c.b16 %v2300, %v2292
        %v2885 = vpack.c.b16 %v2301, %v2293
        %v2886 = vpack.c.b16 %v2302, %v2294
        %v2887 = vpack.c.b16 %v2303, %v2295
        %v2888 = vpack.c.b16 %v2312, %v2304
        %v2889 = vpack.c.b16 %v2313, %v2305
        %v2890 = vpack.c.b16 %v2314, %v2306
        %v2891 = vpack.c.b16 %v2315, %v2307
        %v2892 = vpack.c.b16 %v2316, %v2308
        %v2893 = vpack.c.b16 %v2317, %v2309
        %v2894 = vpack.c.b16 %v2318, %v2310
        %v2895 = vpack.c.b16 %v2319, %v2311
        %v2896 = vpack.c.b16 %v2328, %v2320
        %v2897 = vpack.c.b16 %v2329, %v2321
        %v2898 = vpack.c.b16 %v2330, %v2322
        %v2899 = vpack.c.b16 %v2331, %v2323
        %v2900 = vpack.c.b16 %v2332, %v2324
        %v2901 = vpack.c.b16 %v2333, %v2325
        %v2902 = vpack.c.b16 %v2334, %v2326
        %v2903 = vpack.c.b16 %v2335, %v2327
        %v2904 = vpack.c.b16 %v2344, %v2336
        %v2905 = vpack.c.b16 %v2345, %v2337
        %v2906 = vpack.c.b16 %v2346, %v2338
        %v2907 = vpack.c.b16 %v2347, %v2339
        %v2908 = vpack.c.b16 %v2348, %v2340
        %v2909 = vpack.c.b16 %v2349, %v2341
        %v2910 = vpack.c.b16 %v2350, %v2342
        %v2911 = vpack.c.b16 %v2351, %v2343
        %v2912 = vpack.c.b16 %v2360, %v2352
        %v2913 = vpack.c.b16 %v2361, %v2353
        %v2914 = vpack.c.b16 %v2362, %v2354
        %v2915 = vpack.c.b16 %v2363, %v2355
        %v2916 = vpack.c.b16 %v2364, %v2356
        %v2917 = vpack.c.b16 %v2365, %v2357
        %v2918 = vpack.c.b16 %v2366, %v2358
        %v2919 = vpack.c.b16 %v2367, %v2359
        %v2920 = vpack.c.b16 %v2376, %v2368
        %v2921 = vpack.c.b16 %v2377, %v2369
        %v2922 = vpack.c.b16 %v2378, %v2370
        %v2923 = vpack.c.b16 %v2379, %v2371
        %v2924 = vpack.c.b16 %v2380, %v2372
        %v2925 = vpack.c.b16 %v2381, %v2373
        %v2926 = vpack.c.b16 %v2382, %v2374
        %v2927 = vpack.c.b16 %v2383, %v2375
        %v2928 = vpack.c.b16 %v2392, %v2384
        %v2929 = vpack.c.b16 %v2393, %v2385
        %v2930 = vpack.c.b16 %v2394, %v2386
        %v2931 = vpack.c.b16 %v2395, %v2387
        %v2932 = vpack.c.b16 %v2396, %v2388
        %v2933 = vpack.c.b16 %v2397, %v2389
        %v2934 = vpack.c.b16 %v2398, %v2390
        %v2935 = vpack.c.b16 %v2399, %v2391
        %v2936 = vpack.c.b16 %v2408, %v2400
        %v2937 = vpack.c.b16 %v2409, %v2401
        %v2938 = vpack.c.b16 %v2410, %v2402
        %v2939 = vpack.c.b16 %v2411, %v2403
        %v2940 = vpack.c.b16 %v2412, %v2404
        %v2941 = vpack.c.b16 %v2413, %v2405
        %v2942 = vpack.c.b16 %v2414, %v2406
        %v2943 = vpack.c.b16 %v2415, %v2407
        %v2944 = vpack.c.b16 %v2424, %v2416
        %v2945 = vpack.c.b16 %v2425, %v2417
        %v2946 = vpack.c.b16 %v2426, %v2418
        %v2947 = vpack.c.b16 %v2427, %v2419
        %v2948 = vpack.c.b16 %v2428, %v2420
        %v2949 = vpack.c.b16 %v2429, %v2421
        %v2950 = vpack.c.b16 %v2430, %v2422
        %v2951 = vpack.c.b16 %v2431, %v2423
        %v2952 = vpack.c.b16 %v2440, %v2432
        %v2953 = vpack.c.b16 %v2441, %v2433
        %v2954 = vpack.c.b16 %v2442, %v2434
        %v2955 = vpack.c.b16 %v2443, %v2435
        %v2956 = vpack.c.b16 %v2444, %v2436
        %v2957 = vpack.c.b16 %v2445, %v2437
        %v2958 = vpack.c.b16 %v2446, %v2438
        %v2959 = vpack.c.b16 %v2447, %v2439
        %3472 = vmatprep.subr.bf16.mxu0 %v2449
        %3473 = vmatpush1.bf16.msra.mxu0 %v2448
        %3474 = vmatprep.subr.bf16.mxu0 %v2457
        %3475 = vmatpush1.bf16.msra.mxu0 %v2456
        %3476 = vmatprep.subr.bf16.mxu0 %v2465
        %3477 = vmatpush1.bf16.msra.mxu0 %v2464
        %3478 = vmatprep.subr.bf16.mxu0 %v2473
        %3479 = vmatpush1.bf16.msra.mxu0 %v2472
        %3480 = vmatprep.subr.bf16.mxu0 %v2481
        %3481 = vmatpush1.bf16.msra.mxu0 %v2480
        %3482 = vmatprep.subr.bf16.mxu0 %v2489
        %3483 = vmatpush1.bf16.msra.mxu0 %v2488
        %3484 = vmatprep.subr.bf16.mxu0 %v2497
        %3485 = vmatpush1.bf16.msra.mxu0 %v2496
        %3486 = vmatprep.subr.bf16.mxu0 %v2505
        %3487 = vmatpush1.bf16.msra.mxu0 %v2504
        %3488 = vmatprep.subr.bf16.mxu0 %v2513
        %3489 = vmatpush1.bf16.msra.mxu0 %v2512
        %3490 = vmatprep.subr.bf16.mxu0 %v2521
        %3491 = vmatpush1.bf16.msra.mxu0 %v2520
        %3492 = vmatprep.subr.bf16.mxu0 %v2529
        %3493 = vmatpush1.bf16.msra.mxu0 %v2528
        %3494 = vmatprep.subr.bf16.mxu0 %v2537
        %3495 = vmatpush1.bf16.msra.mxu0 %v2536
        %3496 = vmatprep.subr.bf16.mxu0 %v2545
        %3497 = vmatpush1.bf16.msra.mxu0 %v2544
        %3498 = vmatprep.subr.bf16.mxu0 %v2553
        %3499 = vmatpush1.bf16.msra.mxu0 %v2552
        %3500 = vmatprep.subr.bf16.mxu0 %v2561
        %3501 = vmatpush1.bf16.msra.mxu0 %v2560
        %3502 = vmatprep.subr.bf16.mxu0 %v2569
        %3503 = vmatpush1.bf16.msra.mxu0 %v2568
        %3504 = vmatprep.mubr.bf16.mxu0 %v351
        %3505 = vmatmul.mubr.bf16.gmra.mrb[0].mxu0 %v350
        %v3506 = vpop.f32.mrb[0].mxu0
        %v3507 = vadd.f32 %v875, %v3506
        %v3508 = vpop.f32.mrb[0].mxu0
        %v3509 = vadd.f32 %v879, %v3508
        %v3510 = vpop.f32.mrb[0].mxu0
        %v3511 = vpop.f32.mrb[0].mxu0
        %3512 = vdwg.mxu0
        %3513 = vmatprep.subr.bf16.mxu0 %v2577
        %3514 = vmatpush1.bf16.msra.mxu0 %v2576
        %3515 = vmatprep.subr.bf16.mxu0 %v2585
        %3516 = vmatpush1.bf16.msra.mxu0 %v2584
        %3517 = vmatprep.subr.bf16.mxu0 %v2593
        %3518 = vmatpush1.bf16.msra.mxu0 %v2592
        %3519 = vmatprep.subr.bf16.mxu0 %v2601
        %3520 = vmatpush1.bf16.msra.mxu0 %v2600
        %3521 = vmatprep.subr.bf16.mxu0 %v2609
        %3522 = vmatpush1.bf16.msra.mxu0 %v2608
        %3523 = vmatprep.subr.bf16.mxu0 %v2617
        %3524 = vmatpush1.bf16.msra.mxu0 %v2616
        %3525 = vmatprep.subr.bf16.mxu0 %v2625
        %3526 = vmatpush1.bf16.msra.mxu0 %v2624
        %3527 = vmatprep.subr.bf16.mxu0 %v2633
        %3528 = vmatpush1.bf16.msra.mxu0 %v2632
        %3529 = vmatprep.subr.bf16.mxu0 %v2641
        %3530 = vmatpush1.bf16.msra.mxu0 %v2640
        %3531 = vmatprep.subr.bf16.mxu0 %v2649
        %3532 = vmatpush1.bf16.msra.mxu0 %v2648
        %3533 = vmatprep.subr.bf16.mxu0 %v2657
        %3534 = vmatpush1.bf16.msra.mxu0 %v2656
        %3535 = vmatprep.subr.bf16.mxu0 %v2665
        %3536 = vmatpush1.bf16.msra.mxu0 %v2664
        %3537 = vmatprep.subr.bf16.mxu0 %v2673
        %3538 = vmatpush1.bf16.msra.mxu0 %v2672
        %3539 = vmatprep.subr.bf16.mxu0 %v2681
        %3540 = vmatpush1.bf16.msra.mxu0 %v2680
        %3541 = vmatprep.subr.bf16.mxu0 %v2689
        %3542 = vmatpush1.bf16.msra.mxu0 %v2688
        %3543 = vmatprep.subr.bf16.mxu0 %v2697
        %3544 = vmatpush1.bf16.msra.mxu0 %v2696
        %3545 = vmatprep.mubr.bf16.mxu0 %v353
        %3546 = vmatmul.mubr.bf16.gmra.mrb[0].mxu0 %v352
        %v3547 = vpop.f32.mrb[0].mxu0
        %v3548 = vadd.f32 %v3507, %v3547
        %v3549 = vpop.f32.mrb[0].mxu0
        %v3550 = vadd.f32 %v3509, %v3549
        %v3551 = vpop.f32.mrb[0].mxu0
        %v3552 = vpop.f32.mrb[0].mxu0
        %3553 = vdwg.mxu0
        %3554 = vmatprep.subr.bf16.mxu0 %v2705
        %3555 = vmatpush1.bf16.msra.mxu0 %v2704
        %3556 = vmatprep.subr.bf16.mxu0 %v2713
        %3557 = vmatpush1.bf16.msra.mxu0 %v2712
        %3558 = vmatprep.subr.bf16.mxu0 %v2721
        %3559 = vmatpush1.bf16.msra.mxu0 %v2720
        %3560 = vmatprep.subr.bf16.mxu0 %v2729
        %3561 = vmatpush1.bf16.msra.mxu0 %v2728
        %3562 = vmatprep.subr.bf16.mxu0 %v2737
        %3563 = vmatpush1.bf16.msra.mxu0 %v2736
        %3564 = vmatprep.subr.bf16.mxu0 %v2745
        %3565 = vmatpush1.bf16.msra.mxu0 %v2744
        %3566 = vmatprep.subr.bf16.mxu0 %v2753
        %3567 = vmatpush1.bf16.msra.mxu0 %v2752
        %3568 = vmatprep.subr.bf16.mxu0 %v2761
        %3569 = vmatpush1.bf16.msra.mxu0 %v2760
        %3570 = vmatprep.subr.bf16.mxu0 %v2769
        %3571 = vmatpush1.bf16.msra.mxu0 %v2768
        %3572 = vmatprep.subr.bf16.mxu0 %v2777
        %3573 = vmatpush1.bf16.msra.mxu0 %v2776
        %3574 = vmatprep.subr.bf16.mxu0 %v2785
        %3575 = vmatpush1.bf16.msra.mxu0 %v2784
        %3576 = vmatprep.subr.bf16.mxu0 %v2793
        %3577 = vmatpush1.bf16.msra.mxu0 %v2792
        %3578 = vmatprep.subr.bf16.mxu0 %v2801
        %3579 = vmatpush1.bf16.msra.mxu0 %v2800
        %3580 = vmatprep.subr.bf16.mxu0 %v2809
        %3581 = vmatpush1.bf16.msra.mxu0 %v2808
        %3582 = vmatprep.subr.bf16.mxu0 %v2817
        %3583 = vmatpush1.bf16.msra.mxu0 %v2816
        %3584 = vmatprep.subr.bf16.mxu0 %v2825
        %3585 = vmatpush1.bf16.msra.mxu0 %v2824
        %3586 = vmatprep.mubr.bf16.mxu0 %v355
        %3587 = vmatmul.mubr.bf16.gmra.mrb[0].mxu0 %v354
        %v3588 = vpop.f32.mrb[0].mxu0
        %v3589 = vadd.f32 %v3548, %v3588
        %v3590 = vpop.f32.mrb[0].mxu0
        %v3591 = vadd.f32 %v3550, %v3590
        %v3592 = vpop.f32.mrb[0].mxu0
        %v3593 = vpop.f32.mrb[0].mxu0
        %3594 = vdwg.mxu0
        %3595 = vmatprep.subr.bf16.mxu0 %v2833
        %3596 = vmatpush1.bf16.msra.mxu0 %v2832
        %3597 = vmatprep.subr.bf16.mxu0 %v2841
        %3598 = vmatpush1.bf16.msra.mxu0 %v2840
        %3599 = vmatprep.subr.bf16.mxu0 %v2849
        %3600 = vmatpush1.bf16.msra.mxu0 %v2848
        %3601 = vmatprep.subr.bf16.mxu0 %v2857
        %3602 = vmatpush1.bf16.msra.mxu0 %v2856
        %3603 = vmatprep.subr.bf16.mxu0 %v2865
        %3604 = vmatpush1.bf16.msra.mxu0 %v2864
        %3605 = vmatprep.subr.bf16.mxu0 %v2873
        %3606 = vmatpush1.bf16.msra.mxu0 %v2872
        %3607 = vmatprep.subr.bf16.mxu0 %v2881
        %3608 = vmatpush1.bf16.msra.mxu0 %v2880
        %3609 = vmatprep.subr.bf16.mxu0 %v2889
        %3610 = vmatpush1.bf16.msra.mxu0 %v2888
        %3611 = vmatprep.subr.bf16.mxu0 %v2897
        %3612 = vmatpush1.bf16.msra.mxu0 %v2896
        %3613 = vmatprep.subr.bf16.mxu0 %v2905
        %3614 = vmatpush1.bf16.msra.mxu0 %v2904
        %3615 = vmatprep.subr.bf16.mxu0 %v2913
        %3616 = vmatpush1.bf16.msra.mxu0 %v2912
        %3617 = vmatprep.subr.bf16.mxu0 %v2921
        %3618 = vmatpush1.bf16.msra.mxu0 %v2920
        %3619 = vmatprep.subr.bf16.mxu0 %v2929
        %3620 = vmatpush1.bf16.msra.mxu0 %v2928
        %3621 = vmatprep.subr.bf16.mxu0 %v2937
        %3622 = vmatpush1.bf16.msra.mxu0 %v2936
        %3623 = vmatprep.subr.bf16.mxu0 %v2945
        %3624 = vmatpush1.bf16.msra.mxu0 %v2944
        %3625 = vmatprep.subr.bf16.mxu0 %v2953
        %3626 = vmatpush1.bf16.msra.mxu0 %v2952
        %3627 = vmatprep.mubr.bf16.mxu0 %v357
        %3628 = vmatmul.mubr.bf16.gmra.mrb[0].mxu0 %v356
        %v3629 = vpop.f32.mrb[0].mxu0
        %v3630 = vadd.f32 %v3589, %v3629
        %v3631 = vpop.f32.mrb[0].mxu0
        %v3632 = vadd.f32 %v3591, %v3631
        %v3633 = vpop.f32.mrb[0].mxu0
        %v3634 = vpop.f32.mrb[0].mxu0
        %3635 = vdwg.mxu0
        %3636 = vmatprep.subr.bf16.mxu0 %v2451
        %3637 = vmatpush1.bf16.msra.mxu0 %v2450
        %3638 = vmatprep.subr.bf16.mxu0 %v2459
        %3639 = vmatpush1.bf16.msra.mxu0 %v2458
        %3640 = vmatprep.subr.bf16.mxu0 %v2467
        %3641 = vmatpush1.bf16.msra.mxu0 %v2466
        %3642 = vmatprep.subr.bf16.mxu0 %v2475
        %3643 = vmatpush1.bf16.msra.mxu0 %v2474
        %3644 = vmatprep.subr.bf16.mxu0 %v2483
        %3645 = vmatpush1.bf16.msra.mxu0 %v2482
        %3646 = vmatprep.subr.bf16.mxu0 %v2491
        %3647 = vmatpush1.bf16.msra.mxu0 %v2490
        %3648 = vmatprep.subr.bf16.mxu0 %v2499
        %3649 = vmatpush1.bf16.msra.mxu0 %v2498
        %3650 = vmatprep.subr.bf16.mxu0 %v2507
        %3651 = vmatpush1.bf16.msra.mxu0 %v2506
        %3652 = vmatprep.subr.bf16.mxu0 %v2515
        %3653 = vmatpush1.bf16.msra.mxu0 %v2514
        %3654 = vmatprep.subr.bf16.mxu0 %v2523
        %3655 = vmatpush1.bf16.msra.mxu0 %v2522
        %3656 = vmatprep.subr.bf16.mxu0 %v2531
        %3657 = vmatpush1.bf16.msra.mxu0 %v2530
        %3658 = vmatprep.subr.bf16.mxu0 %v2539
        %3659 = vmatpush1.bf16.msra.mxu0 %v2538
        %3660 = vmatprep.subr.bf16.mxu0 %v2547
        %3661 = vmatpush1.bf16.msra.mxu0 %v2546
        %3662 = vmatprep.subr.bf16.mxu0 %v2555
        %3663 = vmatpush1.bf16.msra.mxu0 %v2554
        %3664 = vmatprep.subr.bf16.mxu0 %v2563
        %3665 = vmatpush1.bf16.msra.mxu0 %v2562
        %3666 = vmatprep.subr.bf16.mxu0 %v2571
        %3667 = vmatpush1.bf16.msra.mxu0 %v2570
        %3668 = vmatprep.mubr.bf16.mxu0 %v351
        %3669 = vmatmul.mubr.bf16.gmra.mrb[0].mxu0 %v350
        %v3670 = vpop.f32.mrb[0].mxu0
        %v3671 = vadd.f32 %v883, %v3670
        %v3672 = vpop.f32.mrb[0].mxu0
        %v3673 = vadd.f32 %v887, %v3672
        %v3674 = vpop.f32.mrb[0].mxu0
        %v3675 = vpop.f32.mrb[0].mxu0
        %3676 = vdwg.mxu0
        %3677 = vmatprep.subr.bf16.mxu0 %v2579
        %3678 = vmatpush1.bf16.msra.mxu0 %v2578
        %3679 = vmatprep.subr.bf16.mxu0 %v2587
        %3680 = vmatpush1.bf16.msra.mxu0 %v2586
        %3681 = vmatprep.subr.bf16.mxu0 %v2595
        %3682 = vmatpush1.bf16.msra.mxu0 %v2594
        %3683 = vmatprep.subr.bf16.mxu0 %v2603
        %3684 = vmatpush1.bf16.msra.mxu0 %v2602
        %3685 = vmatprep.subr.bf16.mxu0 %v2611
        %3686 = vmatpush1.bf16.msra.mxu0 %v2610
        %3687 = vmatprep.subr.bf16.mxu0 %v2619
        %3688 = vmatpush1.bf16.msra.mxu0 %v2618
        %3689 = vmatprep.subr.bf16.mxu0 %v2627
        %3690 = vmatpush1.bf16.msra.mxu0 %v2626
        %3691 = vmatprep.subr.bf16.mxu0 %v2635
        %3692 = vmatpush1.bf16.msra.mxu0 %v2634
        %3693 = vmatprep.subr.bf16.mxu0 %v2643
        %3694 = vmatpush1.bf16.msra.mxu0 %v2642
        %3695 = vmatprep.subr.bf16.mxu0 %v2651
        %3696 = vmatpush1.bf16.msra.mxu0 %v2650
        %3697 = vmatprep.subr.bf16.mxu0 %v2659
        %3698 = vmatpush1.bf16.msra.mxu0 %v2658
        %3699 = vmatprep.subr.bf16.mxu0 %v2667
        %3700 = vmatpush1.bf16.msra.mxu0 %v2666
        %3701 = vmatprep.subr.bf16.mxu0 %v2675
        %3702 = vmatpush1.bf16.msra.mxu0 %v2674
        %3703 = vmatprep.subr.bf16.mxu0 %v2683
        %3704 = vmatpush1.bf16.msra.mxu0 %v2682
        %3705 = vmatprep.subr.bf16.mxu0 %v2691
        %3706 = vmatpush1.bf16.msra.mxu0 %v2690
        %3707 = vmatprep.subr.bf16.mxu0 %v2699
        %3708 = vmatpush1.bf16.msra.mxu0 %v2698
        %3709 = vmatprep.mubr.bf16.mxu0 %v353
        %3710 = vmatmul.mubr.bf16.gmra.mrb[0].mxu0 %v352
        %v3711 = vpop.f32.mrb[0].mxu0
        %v3712 = vadd.f32 %v3671, %v3711
        %v3713 = vpop.f32.mrb[0].mxu0
        %v3714 = vadd.f32 %v3673, %v3713
        %v3715 = vpop.f32.mrb[0].mxu0
        %v3716 = vpop.f32.mrb[0].mxu0
        %3717 = vdwg.mxu0
        %3718 = vmatprep.subr.bf16.mxu0 %v2707
        %3719 = vmatpush1.bf16.msra.mxu0 %v2706
        %3720 = vmatprep.subr.bf16.mxu0 %v2715
        %3721 = vmatpush1.bf16.msra.mxu0 %v2714
        %3722 = vmatprep.subr.bf16.mxu0 %v2723
        %3723 = vmatpush1.bf16.msra.mxu0 %v2722
        %3724 = vmatprep.subr.bf16.mxu0 %v2731
        %3725 = vmatpush1.bf16.msra.mxu0 %v2730
        %3726 = vmatprep.subr.bf16.mxu0 %v2739
        %3727 = vmatpush1.bf16.msra.mxu0 %v2738
        %3728 = vmatprep.subr.bf16.mxu0 %v2747
        %3729 = vmatpush1.bf16.msra.mxu0 %v2746
        %3730 = vmatprep.subr.bf16.mxu0 %v2755
        %3731 = vmatpush1.bf16.msra.mxu0 %v2754
        %3732 = vmatprep.subr.bf16.mxu0 %v2763
        %3733 = vmatpush1.bf16.msra.mxu0 %v2762
        %3734 = vmatprep.subr.bf16.mxu0 %v2771
        %3735 = vmatpush1.bf16.msra.mxu0 %v2770
        %3736 = vmatprep.subr.bf16.mxu0 %v2779
        %3737 = vmatpush1.bf16.msra.mxu0 %v2778
        %3738 = vmatprep.subr.bf16.mxu0 %v2787
        %3739 = vmatpush1.bf16.msra.mxu0 %v2786
        %3740 = vmatprep.subr.bf16.mxu0 %v2795
        %3741 = vmatpush1.bf16.msra.mxu0 %v2794
        %3742 = vmatprep.subr.bf16.mxu0 %v2803
        %3743 = vmatpush1.bf16.msra.mxu0 %v2802
        %3744 = vmatprep.subr.bf16.mxu0 %v2811
        %3745 = vmatpush1.bf16.msra.mxu0 %v2810
        %3746 = vmatprep.subr.bf16.mxu0 %v2819
        %3747 = vmatpush1.bf16.msra.mxu0 %v2818
        %3748 = vmatprep.subr.bf16.mxu0 %v2827
        %3749 = vmatpush1.bf16.msra.mxu0 %v2826
        %3750 = vmatprep.mubr.bf16.mxu0 %v355
        %3751 = vmatmul.mubr.bf16.gmra.mrb[0].mxu0 %v354
        %v3752 = vpop.f32.mrb[0].mxu0
        %v3753 = vadd.f32 %v3712, %v3752
        %v3754 = vpop.f32.mrb[0].mxu0
        %v3755 = vadd.f32 %v3714, %v3754
        %v3756 = vpop.f32.mrb[0].mxu0
        %v3757 = vpop.f32.mrb[0].mxu0
        %3758 = vdwg.mxu0
        %3759 = vmatprep.subr.bf16.mxu0 %v2835
        %3760 = vmatpush1.bf16.msra.mxu0 %v2834
        %3761 = vmatprep.subr.bf16.mxu0 %v2843
        %3762 = vmatpush1.bf16.msra.mxu0 %v2842
        %3763 = vmatprep.subr.bf16.mxu0 %v2851
        %3764 = vmatpush1.bf16.msra.mxu0 %v2850
        %3765 = vmatprep.subr.bf16.mxu0 %v2859
        %3766 = vmatpush1.bf16.msra.mxu0 %v2858
        %3767 = vmatprep.subr.bf16.mxu0 %v2867
        %3768 = vmatpush1.bf16.msra.mxu0 %v2866
        %3769 = vmatprep.subr.bf16.mxu0 %v2875
        %3770 = vmatpush1.bf16.msra.mxu0 %v2874
        %3771 = vmatprep.subr.bf16.mxu0 %v2883
        %3772 = vmatpush1.bf16.msra.mxu0 %v2882
        %3773 = vmatprep.subr.bf16.mxu0 %v2891
        %3774 = vmatpush1.bf16.msra.mxu0 %v2890
        %3775 = vmatprep.subr.bf16.mxu0 %v2899
        %3776 = vmatpush1.bf16.msra.mxu0 %v2898
        %3777 = vmatprep.subr.bf16.mxu0 %v2907
        %3778 = vmatpush1.bf16.msra.mxu0 %v2906
        %3779 = vmatprep.subr.bf16.mxu0 %v2915
        %3780 = vmatpush1.bf16.msra.mxu0 %v2914
        %3781 = vmatprep.subr.bf16.mxu0 %v2923
        %3782 = vmatpush1.bf16.msra.mxu0 %v2922
        %3783 = vmatprep.subr.bf16.mxu0 %v2931
        %3784 = vmatpush1.bf16.msra.mxu0 %v2930
        %3785 = vmatprep.subr.bf16.mxu0 %v2939
        %3786 = vmatpush1.bf16.msra.mxu0 %v2938
        %3787 = vmatprep.subr.bf16.mxu0 %v2947
        %3788 = vmatpush1.bf16.msra.mxu0 %v2946
        %3789 = vmatprep.subr.bf16.mxu0 %v2955
        %3790 = vmatpush1.bf16.msra.mxu0 %v2954
        %3791 = vmatprep.mubr.bf16.mxu0 %v357
        %3792 = vmatmul.mubr.bf16.gmra.mrb[0].mxu0 %v356
        %v3793 = vpop.f32.mrb[0].mxu0
        %v3794 = vadd.f32 %v3753, %v3793
        %v3795 = vpop.f32.mrb[0].mxu0
        %v3796 = vadd.f32 %v3755, %v3795
        %v3797 = vpop.f32.mrb[0].mxu0
        %v3798 = vpop.f32.mrb[0].mxu0
        %3799 = vdwg.mxu0
        %3800 = vmatprep.subr.bf16.mxu0 %v2453
        %3801 = vmatpush1.bf16.msra.mxu0 %v2452
        %3802 = vmatprep.subr.bf16.mxu0 %v2461
        %3803 = vmatpush1.bf16.msra.mxu0 %v2460
        %3804 = vmatprep.subr.bf16.mxu0 %v2469
        %3805 = vmatpush1.bf16.msra.mxu0 %v2468
        %3806 = vmatprep.subr.bf16.mxu0 %v2477
        %3807 = vmatpush1.bf16.msra.mxu0 %v2476
        %3808 = vmatprep.subr.bf16.mxu0 %v2485
        %3809 = vmatpush1.bf16.msra.mxu0 %v2484
        %3810 = vmatprep.subr.bf16.mxu0 %v2493
        %3811 = vmatpush1.bf16.msra.mxu0 %v2492
        %3812 = vmatprep.subr.bf16.mxu0 %v2501
        %3813 = vmatpush1.bf16.msra.mxu0 %v2500
        %3814 = vmatprep.subr.bf16.mxu0 %v2509
        %3815 = vmatpush1.bf16.msra.mxu0 %v2508
        %3816 = vmatprep.subr.bf16.mxu0 %v2517
        %3817 = vmatpush1.bf16.msra.mxu0 %v2516
        %3818 = vmatprep.subr.bf16.mxu0 %v2525
        %3819 = vmatpush1.bf16.msra.mxu0 %v2524
        %3820 = vmatprep.subr.bf16.mxu0 %v2533
        %3821 = vmatpush1.bf16.msra.mxu0 %v2532
        %3822 = vmatprep.subr.bf16.mxu0 %v2541
        %3823 = vmatpush1.bf16.msra.mxu0 %v2540
        %3824 = vmatprep.subr.bf16.mxu0 %v2549
        %3825 = vmatpush1.bf16.msra.mxu0 %v2548
        %3826 = vmatprep.subr.bf16.mxu0 %v2557
        %3827 = vmatpush1.bf16.msra.mxu0 %v2556
        %3828 = vmatprep.subr.bf16.mxu0 %v2565
        %3829 = vmatpush1.bf16.msra.mxu0 %v2564
        %3830 = vmatprep.subr.bf16.mxu0 %v2573
        %3831 = vmatpush1.bf16.msra.mxu0 %v2572
        %3832 = vmatprep.mubr.bf16.mxu0 %v351
        %3833 = vmatmul.mubr.bf16.gmra.mrb[0].mxu0 %v350
        %v3834 = vpop.f32.mrb[0].mxu0
        %v3835 = vadd.f32 %v891, %v3834
        %v3836 = vpop.f32.mrb[0].mxu0
        %v3837 = vadd.f32 %v895, %v3836
        %v3838 = vpop.f32.mrb[0].mxu0
        %v3839 = vpop.f32.mrb[0].mxu0
        %3840 = vdwg.mxu0
        %3841 = vmatprep.subr.bf16.mxu0 %v2581
        %3842 = vmatpush1.bf16.msra.mxu0 %v2580
        %3843 = vmatprep.subr.bf16.mxu0 %v2589
        %3844 = vmatpush1.bf16.msra.mxu0 %v2588
        %3845 = vmatprep.subr.bf16.mxu0 %v2597
        %3846 = vmatpush1.bf16.msra.mxu0 %v2596
        %3847 = vmatprep.subr.bf16.mxu0 %v2605
        %3848 = vmatpush1.bf16.msra.mxu0 %v2604
        %3849 = vmatprep.subr.bf16.mxu0 %v2613
        %3850 = vmatpush1.bf16.msra.mxu0 %v2612
        %3851 = vmatprep.subr.bf16.mxu0 %v2621
        %3852 = vmatpush1.bf16.msra.mxu0 %v2620
        %3853 = vmatprep.subr.bf16.mxu0 %v2629
        %3854 = vmatpush1.bf16.msra.mxu0 %v2628
        %3855 = vmatprep.subr.bf16.mxu0 %v2637
        %3856 = vmatpush1.bf16.msra.mxu0 %v2636
        %3857 = vmatprep.subr.bf16.mxu0 %v2645
        %3858 = vmatpush1.bf16.msra.mxu0 %v2644
        %3859 = vmatprep.subr.bf16.mxu0 %v2653
        %3860 = vmatpush1.bf16.msra.mxu0 %v2652
        %3861 = vmatprep.subr.bf16.mxu0 %v2661
        %3862 = vmatpush1.bf16.msra.mxu0 %v2660
        %3863 = vmatprep.subr.bf16.mxu0 %v2669
        %3864 = vmatpush1.bf16.msra.mxu0 %v2668
        %3865 = vmatprep.subr.bf16.mxu0 %v2677
        %3866 = vmatpush1.bf16.msra.mxu0 %v2676
        %3867 = vmatprep.subr.bf16.mxu0 %v2685
        %3868 = vmatpush1.bf16.msra.mxu0 %v2684
        %3869 = vmatprep.subr.bf16.mxu0 %v2693
        %3870 = vmatpush1.bf16.msra.mxu0 %v2692
        %3871 = vmatprep.subr.bf16.mxu0 %v2701
        %3872 = vmatpush1.bf16.msra.mxu0 %v2700
        %3873 = vmatprep.mubr.bf16.mxu0 %v353
        %3874 = vmatmul.mubr.bf16.gmra.mrb[0].mxu0 %v352
        %v3875 = vpop.f32.mrb[0].mxu0
        %v3876 = vadd.f32 %v3835, %v3875
        %v3877 = vpop.f32.mrb[0].mxu0
        %v3878 = vadd.f32 %v3837, %v3877
        %v3879 = vpop.f32.mrb[0].mxu0
        %v3880 = vpop.f32.mrb[0].mxu0
        %3881 = vdwg.mxu0
        %3882 = vmatprep.subr.bf16.mxu0 %v2709
        %3883 = vmatpush1.bf16.msra.mxu0 %v2708
        %3884 = vmatprep.subr.bf16.mxu0 %v2717
        %3885 = vmatpush1.bf16.msra.mxu0 %v2716
        %3886 = vmatprep.subr.bf16.mxu0 %v2725
        %3887 = vmatpush1.bf16.msra.mxu0 %v2724
        %3888 = vmatprep.subr.bf16.mxu0 %v2733
        %3889 = vmatpush1.bf16.msra.mxu0 %v2732
        %3890 = vmatprep.subr.bf16.mxu0 %v2741
        %3891 = vmatpush1.bf16.msra.mxu0 %v2740
        %3892 = vmatprep.subr.bf16.mxu0 %v2749
        %3893 = vmatpush1.bf16.msra.mxu0 %v2748
        %3894 = vmatprep.subr.bf16.mxu0 %v2757
        %3895 = vmatpush1.bf16.msra.mxu0 %v2756
        %3896 = vmatprep.subr.bf16.mxu0 %v2765
        %3897 = vmatpush1.bf16.msra.mxu0 %v2764
        %3898 = vmatprep.subr.bf16.mxu0 %v2773
        %3899 = vmatpush1.bf16.msra.mxu0 %v2772
        %3900 = vmatprep.subr.bf16.mxu0 %v2781
        %3901 = vmatpush1.bf16.msra.mxu0 %v2780
        %3902 = vmatprep.subr.bf16.mxu0 %v2789
        %3903 = vmatpush1.bf16.msra.mxu0 %v2788
        %3904 = vmatprep.subr.bf16.mxu0 %v2797
        %3905 = vmatpush1.bf16.msra.mxu0 %v2796
        %3906 = vmatprep.subr.bf16.mxu0 %v2805
        %3907 = vmatpush1.bf16.msra.mxu0 %v2804
        %3908 = vmatprep.subr.bf16.mxu0 %v2813
        %3909 = vmatpush1.bf16.msra.mxu0 %v2812
        %3910 = vmatprep.subr.bf16.mxu0 %v2821
        %3911 = vmatpush1.bf16.msra.mxu0 %v2820
        %3912 = vmatprep.subr.bf16.mxu0 %v2829
        %3913 = vmatpush1.bf16.msra.mxu0 %v2828
        %3914 = vmatprep.mubr.bf16.mxu0 %v355
        %3915 = vmatmul.mubr.bf16.gmra.mrb[0].mxu0 %v354
        %v3916 = vpop.f32.mrb[0].mxu0
        %v3917 = vadd.f32 %v3876, %v3916
        %v3918 = vpop.f32.mrb[0].mxu0
        %v3919 = vadd.f32 %v3878, %v3918
        %v3920 = vpop.f32.mrb[0].mxu0
        %v3921 = vpop.f32.mrb[0].mxu0
        %3922 = vdwg.mxu0
        %3923 = vmatprep.subr.bf16.mxu0 %v2837
        %3924 = vmatpush1.bf16.msra.mxu0 %v2836
        %3925 = vmatprep.subr.bf16.mxu0 %v2845
        %3926 = vmatpush1.bf16.msra.mxu0 %v2844
        %3927 = vmatprep.subr.bf16.mxu0 %v2853
        %3928 = vmatpush1.bf16.msra.mxu0 %v2852
        %3929 = vmatprep.subr.bf16.mxu0 %v2861
        %3930 = vmatpush1.bf16.msra.mxu0 %v2860
        %3931 = vmatprep.subr.bf16.mxu0 %v2869
        %3932 = vmatpush1.bf16.msra.mxu0 %v2868
        %3933 = vmatprep.subr.bf16.mxu0 %v2877
        %3934 = vmatpush1.bf16.msra.mxu0 %v2876
        %3935 = vmatprep.subr.bf16.mxu0 %v2885
        %3936 = vmatpush1.bf16.msra.mxu0 %v2884
        %3937 = vmatprep.subr.bf16.mxu0 %v2893
        %3938 = vmatpush1.bf16.msra.mxu0 %v2892
        %3939 = vmatprep.subr.bf16.mxu0 %v2901
        %3940 = vmatpush1.bf16.msra.mxu0 %v2900
        %3941 = vmatprep.subr.bf16.mxu0 %v2909
        %3942 = vmatpush1.bf16.msra.mxu0 %v2908
        %3943 = vmatprep.subr.bf16.mxu0 %v2917
        %3944 = vmatpush1.bf16.msra.mxu0 %v2916
        %3945 = vmatprep.subr.bf16.mxu0 %v2925
        %3946 = vmatpush1.bf16.msra.mxu0 %v2924
        %3947 = vmatprep.subr.bf16.mxu0 %v2933
        %3948 = vmatpush1.bf16.msra.mxu0 %v2932
        %3949 = vmatprep.subr.bf16.mxu0 %v2941
        %3950 = vmatpush1.bf16.msra.mxu0 %v2940
        %3951 = vmatprep.subr.bf16.mxu0 %v2949
        %3952 = vmatpush1.bf16.msra.mxu0 %v2948
        %3953 = vmatprep.subr.bf16.mxu0 %v2957
        %3954 = vmatpush1.bf16.msra.mxu0 %v2956
        %3955 = vmatprep.mubr.bf16.mxu0 %v357
        %3956 = vmatmul.mubr.bf16.gmra.mrb[0].mxu0 %v356
        %v3957 = vpop.f32.mrb[0].mxu0
        %v3958 = vadd.f32 %v3917, %v3957
        %v3959 = vpop.f32.mrb[0].mxu0
        %v3960 = vadd.f32 %v3919, %v3959
        %v3961 = vpop.f32.mrb[0].mxu0
        %v3962 = vpop.f32.mrb[0].mxu0
        %3963 = vdwg.mxu0
        %3964 = vmatprep.subr.bf16.mxu0 %v2455
        %3965 = vmatpush1.bf16.msra.mxu0 %v2454
        %3966 = vmatprep.subr.bf16.mxu0 %v2463
        %3967 = vmatpush1.bf16.msra.mxu0 %v2462
        %3968 = vmatprep.subr.bf16.mxu0 %v2471
        %3969 = vmatpush1.bf16.msra.mxu0 %v2470
        %3970 = vmatprep.subr.bf16.mxu0 %v2479
        %3971 = vmatpush1.bf16.msra.mxu0 %v2478
        %3972 = vmatprep.subr.bf16.mxu0 %v2487
        %3973 = vmatpush1.bf16.msra.mxu0 %v2486
        %3974 = vmatprep.subr.bf16.mxu0 %v2495
        %3975 = vmatpush1.bf16.msra.mxu0 %v2494
        %3976 = vmatprep.subr.bf16.mxu0 %v2503
        %3977 = vmatpush1.bf16.msra.mxu0 %v2502
        %3978 = vmatprep.subr.bf16.mxu0 %v2511
        %3979 = vmatpush1.bf16.msra.mxu0 %v2510
        %3980 = vmatprep.subr.bf16.mxu0 %v2519
        %3981 = vmatpush1.bf16.msra.mxu0 %v2518
        %3982 = vmatprep.subr.bf16.mxu0 %v2527
        %3983 = vmatpush1.bf16.msra.mxu0 %v2526
        %3984 = vmatprep.subr.bf16.mxu0 %v2535
        %3985 = vmatpush1.bf16.msra.mxu0 %v2534
        %3986 = vmatprep.subr.bf16.mxu0 %v2543
        %3987 = vmatpush1.bf16.msra.mxu0 %v2542
        %3988 = vmatprep.subr.bf16.mxu0 %v2551
        %3989 = vmatpush1.bf16.msra.mxu0 %v2550
        %3990 = vmatprep.subr.bf16.mxu0 %v2559
        %3991 = vmatpush1.bf16.msra.mxu0 %v2558
        %3992 = vmatprep.subr.bf16.mxu0 %v2567
        %3993 = vmatpush1.bf16.msra.mxu0 %v2566
        %3994 = vmatprep.subr.bf16.mxu0 %v2575
        %3995 = vmatpush1.bf16.msra.mxu0 %v2574
        %3996 = vmatprep.mubr.bf16.mxu0 %v351
        %3997 = vmatmul.mubr.bf16.gmra.mrb[0].mxu0 %v350
        %v3998 = vpop.f32.mrb[0].mxu0
        %v3999 = vadd.f32 %v899, %v3998
        %v4000 = vpop.f32.mrb[0].mxu0
        %v4001 = vadd.f32 %v903, %v4000
        %v4002 = vpop.f32.mrb[0].mxu0
        %v4003 = vpop.f32.mrb[0].mxu0
        %4004 = vdwg.mxu0
        %4005 = vmatprep.subr.bf16.mxu0 %v2583
        %4006 = vmatpush1.bf16.msra.mxu0 %v2582
        %4007 = vmatprep.subr.bf16.mxu0 %v2591
        %4008 = vmatpush1.bf16.msra.mxu0 %v2590
        %4009 = vmatprep.subr.bf16.mxu0 %v2599
        %4010 = vmatpush1.bf16.msra.mxu0 %v2598
        %4011 = vmatprep.subr.bf16.mxu0 %v2607
        %4012 = vmatpush1.bf16.msra.mxu0 %v2606
        %4013 = vmatprep.subr.bf16.mxu0 %v2615
        %4014 = vmatpush1.bf16.msra.mxu0 %v2614
        %4015 = vmatprep.subr.bf16.mxu0 %v2623
        %4016 = vmatpush1.bf16.msra.mxu0 %v2622
        %4017 = vmatprep.subr.bf16.mxu0 %v2631
        %4018 = vmatpush1.bf16.msra.mxu0 %v2630
        %4019 = vmatprep.subr.bf16.mxu0 %v2639
        %4020 = vmatpush1.bf16.msra.mxu0 %v2638
        %4021 = vmatprep.subr.bf16.mxu0 %v2647
        %4022 = vmatpush1.bf16.msra.mxu0 %v2646
        %4023 = vmatprep.subr.bf16.mxu0 %v2655
        %4024 = vmatpush1.bf16.msra.mxu0 %v2654
        %4025 = vmatprep.subr.bf16.mxu0 %v2663
        %4026 = vmatpush1.bf16.msra.mxu0 %v2662
        %4027 = vmatprep.subr.bf16.mxu0 %v2671
        %4028 = vmatpush1.bf16.msra.mxu0 %v2670
        %4029 = vmatprep.subr.bf16.mxu0 %v2679
        %4030 = vmatpush1.bf16.msra.mxu0 %v2678
        %4031 = vmatprep.subr.bf16.mxu0 %v2687
        %4032 = vmatpush1.bf16.msra.mxu0 %v2686
        %4033 = vmatprep.subr.bf16.mxu0 %v2695
        %4034 = vmatpush1.bf16.msra.mxu0 %v2694
        %4035 = vmatprep.subr.bf16.mxu0 %v2703
        %4036 = vmatpush1.bf16.msra.mxu0 %v2702
        %4037 = vmatprep.mubr.bf16.mxu0 %v353
        %4038 = vmatmul.mubr.bf16.gmra.mrb[0].mxu0 %v352
        %v4039 = vpop.f32.mrb[0].mxu0
        %v4040 = vadd.f32 %v3999, %v4039
        %v4041 = vpop.f32.mrb[0].mxu0
        %v4042 = vadd.f32 %v4001, %v4041
        %v4043 = vpop.f32.mrb[0].mxu0
        %v4044 = vpop.f32.mrb[0].mxu0
        %4045 = vdwg.mxu0
        %4046 = vmatprep.subr.bf16.mxu0 %v2711
        %4047 = vmatpush1.bf16.msra.mxu0 %v2710
        %4048 = vmatprep.subr.bf16.mxu0 %v2719
        %4049 = vmatpush1.bf16.msra.mxu0 %v2718
        %4050 = vmatprep.subr.bf16.mxu0 %v2727
        %4051 = vmatpush1.bf16.msra.mxu0 %v2726
        %4052 = vmatprep.subr.bf16.mxu0 %v2735
        %4053 = vmatpush1.bf16.msra.mxu0 %v2734
        %4054 = vmatprep.subr.bf16.mxu0 %v2743
        %4055 = vmatpush1.bf16.msra.mxu0 %v2742
        %4056 = vmatprep.subr.bf16.mxu0 %v2751
        %4057 = vmatpush1.bf16.msra.mxu0 %v2750
        %4058 = vmatprep.subr.bf16.mxu0 %v2759
        %4059 = vmatpush1.bf16.msra.mxu0 %v2758
        %4060 = vmatprep.subr.bf16.mxu0 %v2767
        %4061 = vmatpush1.bf16.msra.mxu0 %v2766
        %4062 = vmatprep.subr.bf16.mxu0 %v2775
        %4063 = vmatpush1.bf16.msra.mxu0 %v2774
        %4064 = vmatprep.subr.bf16.mxu0 %v2783
        %4065 = vmatpush1.bf16.msra.mxu0 %v2782
        %4066 = vmatprep.subr.bf16.mxu0 %v2791
        %4067 = vmatpush1.bf16.msra.mxu0 %v2790
        %4068 = vmatprep.subr.bf16.mxu0 %v2799
        %4069 = vmatpush1.bf16.msra.mxu0 %v2798
        %4070 = vmatprep.subr.bf16.mxu0 %v2807
        %4071 = vmatpush1.bf16.msra.mxu0 %v2806
        %4072 = vmatprep.subr.bf16.mxu0 %v2815
        %4073 = vmatpush1.bf16.msra.mxu0 %v2814
        %4074 = vmatprep.subr.bf16.mxu0 %v2823
        %4075 = vmatpush1.bf16.msra.mxu0 %v2822
        %4076 = vmatprep.subr.bf16.mxu0 %v2831
        %4077 = vmatpush1.bf16.msra.mxu0 %v2830
        %4078 = vmatprep.mubr.bf16.mxu0 %v355
        %4079 = vmatmul.mubr.bf16.gmra.mrb[0].mxu0 %v354
        %v4080 = vpop.f32.mrb[0].mxu0
        %v4081 = vadd.f32 %v4040, %v4080
        %v4082 = vpop.f32.mrb[0].mxu0
        %v4083 = vadd.f32 %v4042, %v4082
        %v4084 = vpop.f32.mrb[0].mxu0
        %v4085 = vpop.f32.mrb[0].mxu0
        %4086 = vdwg.mxu0
        %4087 = vmatprep.subr.bf16.mxu0 %v2839
        %4088 = vmatpush1.bf16.msra.mxu0 %v2838
        %4089 = vmatprep.subr.bf16.mxu0 %v2847
        %4090 = vmatpush1.bf16.msra.mxu0 %v2846
        %4091 = vmatprep.subr.bf16.mxu0 %v2855
        %4092 = vmatpush1.bf16.msra.mxu0 %v2854
        %4093 = vmatprep.subr.bf16.mxu0 %v2863
        %4094 = vmatpush1.bf16.msra.mxu0 %v2862
        %4095 = vmatprep.subr.bf16.mxu0 %v2871
        %4096 = vmatpush1.bf16.msra.mxu0 %v2870
        %4097 = vmatprep.subr.bf16.mxu0 %v2879
        %4098 = vmatpush1.bf16.msra.mxu0 %v2878
        %4099 = vmatprep.subr.bf16.mxu0 %v2887
        %4100 = vmatpush1.bf16.msra.mxu0 %v2886
        %4101 = vmatprep.subr.bf16.mxu0 %v2895
        %4102 = vmatpush1.bf16.msra.mxu0 %v2894
        %4103 = vmatprep.subr.bf16.mxu0 %v2903
        %4104 = vmatpush1.bf16.msra.mxu0 %v2902
        %4105 = vmatprep.subr.bf16.mxu0 %v2911
        %4106 = vmatpush1.bf16.msra.mxu0 %v2910
        %4107 = vmatprep.subr.bf16.mxu0 %v2919
        %4108 = vmatpush1.bf16.msra.mxu0 %v2918
        %4109 = vmatprep.subr.bf16.mxu0 %v2927
        %4110 = vmatpush1.bf16.msra.mxu0 %v2926
        %4111 = vmatprep.subr.bf16.mxu0 %v2935
        %4112 = vmatpush1.bf16.msra.mxu0 %v2934
        %4113 = vmatprep.subr.bf16.mxu0 %v2943
        %4114 = vmatpush1.bf16.msra.mxu0 %v2942
        %4115 = vmatprep.subr.bf16.mxu0 %v2951
        %4116 = vmatpush1.bf16.msra.mxu0 %v2950
        %4117 = vmatprep.subr.bf16.mxu0 %v2959
        %4118 = vmatpush1.bf16.msra.mxu0 %v2958
        %4119 = vmatprep.mubr.bf16.mxu0 %v357
        %4120 = vmatmul.mubr.bf16.gmra.mrb[0].mxu0 %v356
        %v4121 = vpop.f32.mrb[0].mxu0
        %v4122 = vadd.f32 %v4081, %v4121
        %v4123 = vpop.f32.mrb[0].mxu0
        %v4124 = vadd.f32 %v4083, %v4123
        %v4125 = vpop.f32.mrb[0].mxu0
        %v4126 = vpop.f32.mrb[0].mxu0
        %4127 = vdwg.mxu0
        %v4128 = vtanh.pop %v3630
        %v4129 = vtanh.pop %v3632
        %v4130 = vtanh.pop %v3794
        %v4131 = vtanh.pop %v3796
        %v4132 = vtanh.pop %v3958
        %v4133 = vtanh.pop %v3960
        %v4134 = vtanh.pop %v4122
        %v4135 = vtanh.pop %v4124
        %v4136 = vpack.c.bf16 %v4128, %v4128
        %v4137 = vpack.c.bf16 %v4129, %v4129
        %v4138 = vpack.c.bf16 %v4130, %v4130
        %v4139 = vpack.c.bf16 %v4131, %v4131
        %v4140 = vpack.c.bf16 %v4132, %v4132
        %v4141 = vpack.c.bf16 %v4133, %v4133
        %v4142 = vpack.c.bf16 %v4134, %v4134
        %v4143 = vpack.c.bf16 %v4135, %v4135
        %v4144 = vld [vmem:[%s4] sm:$0xf]
        %v4145 = vld [vmem:[%s4 + $0x4] sm:$0xf]
        %v4146 = vld [vmem:[%s4 + $0x8] sm:$0xf]
        %v4147 = vld [vmem:[%s4 + $0xc] sm:$0xf]
        %v4148 = vld [vmem:[%s4 + $0x10] sm:$0xf]
        %v4149 = vld [vmem:[%s4 + $0x14] sm:$0xf]
        %v4150 = vld [vmem:[%s4 + $0x18] sm:$0xf]
        %v4151 = vld [vmem:[%s4 + $0x1c] sm:$0xf]
        %v4152 = vld [vmem:[%s4 + $0x20] sm:$0xf]
        %v4153 = vld [vmem:[%s4 + $0x24] sm:$0xf]
        %v4154 = vld [vmem:[%s4 + $0x28] sm:$0xf]
        %v4155 = vld [vmem:[%s4 + $0x2c] sm:$0xf]
        %v4156 = vld [vmem:[%s4 + $0x30] sm:$0xf]
        %v4157 = vld [vmem:[%s4 + $0x34] sm:$0xf]
        %v4158 = vld [vmem:[%s4 + $0x38] sm:$0xf]
        %v4159 = vld [vmem:[%s4 + $0x3c] sm:$0xf]
        %v4160 = vld [vmem:[%s4 + $0x40] sm:$0xf]
        %v4161 = vld [vmem:[%s4 + $0x44] sm:$0xf]
        %v4162 = vld [vmem:[%s4 + $0x48] sm:$0xf]
        %v4163 = vld [vmem:[%s4 + $0x4c] sm:$0xf]
        %v4164 = vld [vmem:[%s4 + $0x50] sm:$0xf]
        %v4165 = vld [vmem:[%s4 + $0x54] sm:$0xf]
        %v4166 = vld [vmem:[%s4 + $0x58] sm:$0xf]
        %v4167 = vld [vmem:[%s4 + $0x5c] sm:$0xf]
        %v4168 = vld [vmem:[%s4 + $0x60] sm:$0xf]
        %v4169 = vld [vmem:[%s4 + $0x64] sm:$0xf]
        %v4170 = vld [vmem:[%s4 + $0x68] sm:$0xf]
        %v4171 = vld [vmem:[%s4 + $0x6c] sm:$0xf]
        %v4172 = vld [vmem:[%s4 + $0x70] sm:$0xf]
        %v4173 = vld [vmem:[%s4 + $0x74] sm:$0xf]
        %v4174 = vld [vmem:[%s4 + $0x78] sm:$0xf]
        %v4175 = vld [vmem:[%s4 + $0x7c] sm:$0xf]
        %v4176 = vld [vmem:[%s4 + $0x80] sm:$0xf]
        %v4177 = vld [vmem:[%s4 + $0x84] sm:$0xf]
        %v4178 = vld [vmem:[%s4 + $0x88] sm:$0xf]
        %v4179 = vld [vmem:[%s4 + $0x8c] sm:$0xf]
        %v4180 = vld [vmem:[%s4 + $0x90] sm:$0xf]
        %v4181 = vld [vmem:[%s4 + $0x94] sm:$0xf]
        %v4182 = vld [vmem:[%s4 + $0x98] sm:$0xf]
        %v4183 = vld [vmem:[%s4 + $0x9c] sm:$0xf]
        %v4184 = vld [vmem:[%s4 + $0xa0] sm:$0xf]
        %v4185 = vld [vmem:[%s4 + $0xa4] sm:$0xf]
        %v4186 = vld [vmem:[%s4 + $0xa8] sm:$0xf]
        %v4187 = vld [vmem:[%s4 + $0xac] sm:$0xf]
        %v4188 = vld [vmem:[%s4 + $0xb0] sm:$0xf]
        %v4189 = vld [vmem:[%s4 + $0xb4] sm:$0xf]
        %v4190 = vld [vmem:[%s4 + $0xb8] sm:$0xf]
        %v4191 = vld [vmem:[%s4 + $0xbc] sm:$0xf]
        %v4192 = vld [vmem:[%s4 + $0xc0] sm:$0xf]
        %v4193 = vld [vmem:[%s4 + $0xc4] sm:$0xf]
        %v4194 = vld [vmem:[%s4 + $0xc8] sm:$0xf]
        %v4195 = vld [vmem:[%s4 + $0xcc] sm:$0xf]
        %v4196 = vld [vmem:[%s4 + $0xd0] sm:$0xf]
        %v4197 = vld [vmem:[%s4 + $0xd4] sm:$0xf]
        %v4198 = vld [vmem:[%s4 + $0xd8] sm:$0xf]
        %v4199 = vld [vmem:[%s4 + $0xdc] sm:$0xf]
        %v4200 = vld [vmem:[%s4 + $0xe0] sm:$0xf]
        %v4201 = vld [vmem:[%s4 + $0xe4] sm:$0xf]
        %v4202 = vld [vmem:[%s4 + $0xe8] sm:$0xf]
        %v4203 = vld [vmem:[%s4 + $0xec] sm:$0xf]
        %v4204 = vld [vmem:[%s4 + $0xf0] sm:$0xf]
        %v4205 = vld [vmem:[%s4 + $0xf4] sm:$0xf]
        %v4206 = vld [vmem:[%s4 + $0xf8] sm:$0xf]
        %v4207 = vld [vmem:[%s4 + $0xfc] sm:$0xf]
        %v4208 = vld [vmem:[%s4 + $0x100] sm:$0xf]
        %v4209 = vld [vmem:[%s4 + $0x104] sm:$0xf]
        %v4210 = vld [vmem:[%s4 + $0x108] sm:$0xf]
        %v4211 = vld [vmem:[%s4 + $0x10c] sm:$0xf]
        %v4212 = vld [vmem:[%s4 + $0x110] sm:$0xf]
        %v4213 = vld [vmem:[%s4 + $0x114] sm:$0xf]
        %v4214 = vld [vmem:[%s4 + $0x118] sm:$0xf]
        %v4215 = vld [vmem:[%s4 + $0x11c] sm:$0xf]
        %v4216 = vld [vmem:[%s4 + $0x120] sm:$0xf]
        %v4217 = vld [vmem:[%s4 + $0x124] sm:$0xf]
        %v4218 = vld [vmem:[%s4 + $0x128] sm:$0xf]
        %v4219 = vld [vmem:[%s4 + $0x12c] sm:$0xf]
        %v4220 = vld [vmem:[%s4 + $0x130] sm:$0xf]
        %v4221 = vld [vmem:[%s4 + $0x134] sm:$0xf]
        %v4222 = vld [vmem:[%s4 + $0x138] sm:$0xf]
        %v4223 = vld [vmem:[%s4 + $0x13c] sm:$0xf]
        %v4224 = vld [vmem:[%s4 + $0x140] sm:$0xf]
        %v4225 = vld [vmem:[%s4 + $0x144] sm:$0xf]
        %v4226 = vld [vmem:[%s4 + $0x148] sm:$0xf]
        %v4227 = vld [vmem:[%s4 + $0x14c] sm:$0xf]
        %v4228 = vld [vmem:[%s4 + $0x150] sm:$0xf]
        %v4229 = vld [vmem:[%s4 + $0x154] sm:$0xf]
        %v4230 = vld [vmem:[%s4 + $0x158] sm:$0xf]
        %v4231 = vld [vmem:[%s4 + $0x15c] sm:$0xf]
        %v4232 = vld [vmem:[%s4 + $0x160] sm:$0xf]
        %v4233 = vld [vmem:[%s4 + $0x164] sm:$0xf]
        %v4234 = vld [vmem:[%s4 + $0x168] sm:$0xf]
        %v4235 = vld [vmem:[%s4 + $0x16c] sm:$0xf]
        %v4236 = vld [vmem:[%s4 + $0x170] sm:$0xf]
        %v4237 = vld [vmem:[%s4 + $0x174] sm:$0xf]
        %v4238 = vld [vmem:[%s4 + $0x178] sm:$0xf]
        %v4239 = vld [vmem:[%s4 + $0x17c] sm:$0xf]
        %v4240 = vld [vmem:[%s4 + $0x180] sm:$0xf]
        %v4241 = vld [vmem:[%s4 + $0x184] sm:$0xf]
        %v4242 = vld [vmem:[%s4 + $0x188] sm:$0xf]
        %v4243 = vld [vmem:[%s4 + $0x18c] sm:$0xf]
        %v4244 = vld [vmem:[%s4 + $0x190] sm:$0xf]
        %v4245 = vld [vmem:[%s4 + $0x194] sm:$0xf]
        %v4246 = vld [vmem:[%s4 + $0x198] sm:$0xf]
        %v4247 = vld [vmem:[%s4 + $0x19c] sm:$0xf]
        %v4248 = vld [vmem:[%s4 + $0x1a0] sm:$0xf]
        %v4249 = vld [vmem:[%s4 + $0x1a4] sm:$0xf]
        %v4250 = vld [vmem:[%s4 + $0x1a8] sm:$0xf]
        %v4251 = vld [vmem:[%s4 + $0x1ac] sm:$0xf]
        %v4252 = vld [vmem:[%s4 + $0x1b0] sm:$0xf]
        %v4253 = vld [vmem:[%s4 + $0x1b4] sm:$0xf]
        %v4254 = vld [vmem:[%s4 + $0x1b8] sm:$0xf]
        %v4255 = vld [vmem:[%s4 + $0x1bc] sm:$0xf]
        %v4256 = vld [vmem:[%s4 + $0x1c0] sm:$0xf]
        %v4257 = vld [vmem:[%s4 + $0x1c4] sm:$0xf]
        %v4258 = vld [vmem:[%s4 + $0x1c8] sm:$0xf]
        %v4259 = vld [vmem:[%s4 + $0x1cc] sm:$0xf]
        %v4260 = vld [vmem:[%s4 + $0x1d0] sm:$0xf]
        %v4261 = vld [vmem:[%s4 + $0x1d4] sm:$0xf]
        %v4262 = vld [vmem:[%s4 + $0x1d8] sm:$0xf]
        %v4263 = vld [vmem:[%s4 + $0x1dc] sm:$0xf]
        %v4264 = vld [vmem:[%s4 + $0x1e0] sm:$0xf]
        %v4265 = vld [vmem:[%s4 + $0x1e4] sm:$0xf]
        %v4266 = vld [vmem:[%s4 + $0x1e8] sm:$0xf]
        %v4267 = vld [vmem:[%s4 + $0x1ec] sm:$0xf]
        %v4268 = vld [vmem:[%s4 + $0x1f0] sm:$0xf]
        %v4269 = vld [vmem:[%s4 + $0x1f4] sm:$0xf]
        %v4270 = vld [vmem:[%s4 + $0x1f8] sm:$0xf]
        %v4271 = vld [vmem:[%s4 + $0x1fc] sm:$0xf]
        %v4272 = vld [vmem:[#allocation9] sm:$0x1]
        %v4274 = vlaneseq
        %v4275 = vshrl.u32 %v4274, 7
        %v4276 = vsub.s32 0, %v4275
        %v4277 = vrot.slane %v4272, %v4276
        %v4407 = vunpack.c.l.b16 %v4144
        %v4408 = vunpack.c.l.b16 %v4145
        %v4409 = vunpack.c.l.b16 %v4146
        %v4410 = vunpack.c.l.b16 %v4147
        %v4411 = vunpack.c.l.b16 %v4148
        %v4412 = vunpack.c.l.b16 %v4149
        %v4413 = vunpack.c.l.b16 %v4150
        %v4414 = vunpack.c.l.b16 %v4151
        %v4415 = vunpack.c.l.b16 %v4152
        %v4416 = vunpack.c.l.b16 %v4153
        %v4417 = vunpack.c.l.b16 %v4154
        %v4418 = vunpack.c.l.b16 %v4155
        %v4419 = vunpack.c.l.b16 %v4156
        %v4420 = vunpack.c.l.b16 %v4157
        %v4421 = vunpack.c.l.b16 %v4158
        %v4422 = vunpack.c.l.b16 %v4159
        %v4423 = vunpack.c.l.b16 %v4160
        %v4424 = vunpack.c.l.b16 %v4161
        %v4425 = vunpack.c.l.b16 %v4162
        %v4426 = vunpack.c.l.b16 %v4163
        %v4427 = vunpack.c.l.b16 %v4164
        %v4428 = vunpack.c.l.b16 %v4165
        %v4429 = vunpack.c.l.b16 %v4166
        %v4430 = vunpack.c.l.b16 %v4167
        %v4431 = vunpack.c.l.b16 %v4168
        %v4432 = vunpack.c.l.b16 %v4169
        %v4433 = vunpack.c.l.b16 %v4170
        %v4434 = vunpack.c.l.b16 %v4171
        %v4435 = vunpack.c.l.b16 %v4172
        %v4436 = vunpack.c.l.b16 %v4173
        %v4437 = vunpack.c.l.b16 %v4174
        %v4438 = vunpack.c.l.b16 %v4175
        %v4439 = vunpack.c.l.b16 %v4176
        %v4440 = vunpack.c.l.b16 %v4177
        %v4441 = vunpack.c.l.b16 %v4178
        %v4442 = vunpack.c.l.b16 %v4179
        %v4443 = vunpack.c.l.b16 %v4180
        %v4444 = vunpack.c.l.b16 %v4181
        %v4445 = vunpack.c.l.b16 %v4182
        %v4446 = vunpack.c.l.b16 %v4183
        %v4447 = vunpack.c.l.b16 %v4184
        %v4448 = vunpack.c.l.b16 %v4185
        %v4449 = vunpack.c.l.b16 %v4186
        %v4450 = vunpack.c.l.b16 %v4187
        %v4451 = vunpack.c.l.b16 %v4188
        %v4452 = vunpack.c.l.b16 %v4189
        %v4453 = vunpack.c.l.b16 %v4190
        %v4454 = vunpack.c.l.b16 %v4191
        %v4455 = vunpack.c.l.b16 %v4192
        %v4456 = vunpack.c.l.b16 %v4193
        %v4457 = vunpack.c.l.b16 %v4194
        %v4458 = vunpack.c.l.b16 %v4195
        %v4459 = vunpack.c.l.b16 %v4196
        %v4460 = vunpack.c.l.b16 %v4197
        %v4461 = vunpack.c.l.b16 %v4198
        %v4462 = vunpack.c.l.b16 %v4199
        %v4463 = vunpack.c.l.b16 %v4200
        %v4464 = vunpack.c.l.b16 %v4201
        %v4465 = vunpack.c.l.b16 %v4202
        %v4466 = vunpack.c.l.b16 %v4203
        %v4467 = vunpack.c.l.b16 %v4204
        %v4468 = vunpack.c.l.b16 %v4205
        %v4469 = vunpack.c.l.b16 %v4206
        %v4470 = vunpack.c.l.b16 %v4207
        %v4471 = vunpack.c.l.b16 %v4208
        %v4472 = vunpack.c.l.b16 %v4209
        %v4473 = vunpack.c.l.b16 %v4210
        %v4474 = vunpack.c.l.b16 %v4211
        %v4475 = vunpack.c.l.b16 %v4212
        %v4476 = vunpack.c.l.b16 %v4213
        %v4477 = vunpack.c.l.b16 %v4214
        %v4478 = vunpack.c.l.b16 %v4215
        %v4479 = vunpack.c.l.b16 %v4216
        %v4480 = vunpack.c.l.b16 %v4217
        %v4481 = vunpack.c.l.b16 %v4218
        %v4482 = vunpack.c.l.b16 %v4219
        %v4483 = vunpack.c.l.b16 %v4220
        %v4484 = vunpack.c.l.b16 %v4221
        %v4485 = vunpack.c.l.b16 %v4222
        %v4486 = vunpack.c.l.b16 %v4223
        %v4487 = vunpack.c.l.b16 %v4224
        %v4488 = vunpack.c.l.b16 %v4225
        %v4489 = vunpack.c.l.b16 %v4226
        %v4490 = vunpack.c.l.b16 %v4227
        %v4491 = vunpack.c.l.b16 %v4228
        %v4492 = vunpack.c.l.b16 %v4229
        %v4493 = vunpack.c.l.b16 %v4230
        %v4494 = vunpack.c.l.b16 %v4231
        %v4495 = vunpack.c.l.b16 %v4232
        %v4496 = vunpack.c.l.b16 %v4233
        %v4497 = vunpack.c.l.b16 %v4234
        %v4498 = vunpack.c.l.b16 %v4235
        %v4499 = vunpack.c.l.b16 %v4236
        %v4500 = vunpack.c.l.b16 %v4237
        %v4501 = vunpack.c.l.b16 %v4238
        %v4502 = vunpack.c.l.b16 %v4239
        %v4503 = vunpack.c.l.b16 %v4240
        %v4504 = vunpack.c.l.b16 %v4241
        %v4505 = vunpack.c.l.b16 %v4242
        %v4506 = vunpack.c.l.b16 %v4243
        %v4507 = vunpack.c.l.b16 %v4244
        %v4508 = vunpack.c.l.b16 %v4245
        %v4509 = vunpack.c.l.b16 %v4246
        %v4510 = vunpack.c.l.b16 %v4247
        %v4511 = vunpack.c.l.b16 %v4248
        %v4512 = vunpack.c.l.b16 %v4249
        %v4513 = vunpack.c.l.b16 %v4250
        %v4514 = vunpack.c.l.b16 %v4251
        %v4515 = vunpack.c.l.b16 %v4252
        %v4516 = vunpack.c.l.b16 %v4253
        %v4517 = vunpack.c.l.b16 %v4254
        %v4518 = vunpack.c.l.b16 %v4255
        %v4519 = vunpack.c.l.b16 %v4256
        %v4520 = vunpack.c.l.b16 %v4257
        %v4521 = vunpack.c.l.b16 %v4258
        %v4522 = vunpack.c.l.b16 %v4259
        %v4523 = vunpack.c.l.b16 %v4260
        %v4524 = vunpack.c.l.b16 %v4261
        %v4525 = vunpack.c.l.b16 %v4262
        %v4526 = vunpack.c.l.b16 %v4263
        %v4527 = vunpack.c.l.b16 %v4264
        %v4528 = vunpack.c.l.b16 %v4265
        %v4529 = vunpack.c.l.b16 %v4266
        %v4530 = vunpack.c.l.b16 %v4267
        %v4531 = vunpack.c.l.b16 %v4268
        %v4532 = vunpack.c.l.b16 %v4269
        %v4533 = vunpack.c.l.b16 %v4270
        %v4534 = vunpack.c.l.b16 %v4271
        %v4535 = vpack.c.b16 %v4408, %v4407
        %v4536 = vpack.c.b16 %v4410, %v4409
        %v4537 = vpack.c.b16 %v4412, %v4411
        %v4538 = vpack.c.b16 %v4414, %v4413
        %v4539 = vpack.c.b16 %v4416, %v4415
        %v4540 = vpack.c.b16 %v4418, %v4417
        %v4541 = vpack.c.b16 %v4420, %v4419
        %v4542 = vpack.c.b16 %v4422, %v4421
        %v4543 = vpack.c.b16 %v4424, %v4423
        %v4544 = vpack.c.b16 %v4426, %v4425
        %v4545 = vpack.c.b16 %v4428, %v4427
        %v4546 = vpack.c.b16 %v4430, %v4429
        %v4547 = vpack.c.b16 %v4432, %v4431
        %v4548 = vpack.c.b16 %v4434, %v4433
        %v4549 = vpack.c.b16 %v4436, %v4435
        %v4550 = vpack.c.b16 %v4438, %v4437
        %v4551 = vpack.c.b16 %v4440, %v4439
        %v4552 = vpack.c.b16 %v4442, %v4441
        %v4553 = vpack.c.b16 %v4444, %v4443
        %v4554 = vpack.c.b16 %v4446, %v4445
        %v4555 = vpack.c.b16 %v4448, %v4447
        %v4556 = vpack.c.b16 %v4450, %v4449
        %v4557 = vpack.c.b16 %v4452, %v4451
        %v4558 = vpack.c.b16 %v4454, %v4453
        %v4559 = vpack.c.b16 %v4456, %v4455
        %v4560 = vpack.c.b16 %v4458, %v4457
        %v4561 = vpack.c.b16 %v4460, %v4459
        %v4562 = vpack.c.b16 %v4462, %v4461
        %v4563 = vpack.c.b16 %v4464, %v4463
        %v4564 = vpack.c.b16 %v4466, %v4465
        %v4565 = vpack.c.b16 %v4468, %v4467
        %v4566 = vpack.c.b16 %v4470, %v4469
        %v4567 = vpack.c.b16 %v4472, %v4471
        %v4568 = vpack.c.b16 %v4474, %v4473
        %v4569 = vpack.c.b16 %v4476, %v4475
        %v4570 = vpack.c.b16 %v4478, %v4477
        %v4571 = vpack.c.b16 %v4480, %v4479
        %v4572 = vpack.c.b16 %v4482, %v4481
        %v4573 = vpack.c.b16 %v4484, %v4483
        %v4574 = vpack.c.b16 %v4486, %v4485
        %v4575 = vpack.c.b16 %v4488, %v4487
        %v4576 = vpack.c.b16 %v4490, %v4489
        %v4577 = vpack.c.b16 %v4492, %v4491
        %v4578 = vpack.c.b16 %v4494, %v4493
        %v4579 = vpack.c.b16 %v4496, %v4495
        %v4580 = vpack.c.b16 %v4498, %v4497
        %v4581 = vpack.c.b16 %v4500, %v4499
        %v4582 = vpack.c.b16 %v4502, %v4501
        %v4583 = vpack.c.b16 %v4504, %v4503
        %v4584 = vpack.c.b16 %v4506, %v4505
        %v4585 = vpack.c.b16 %v4508, %v4507
        %v4586 = vpack.c.b16 %v4510, %v4509
        %v4587 = vpack.c.b16 %v4512, %v4511
        %v4588 = vpack.c.b16 %v4514, %v4513
        %v4589 = vpack.c.b16 %v4516, %v4515
        %v4590 = vpack.c.b16 %v4518, %v4517
        %v4591 = vpack.c.b16 %v4520, %v4519
        %v4592 = vpack.c.b16 %v4522, %v4521
        %v4593 = vpack.c.b16 %v4524, %v4523
        %v4594 = vpack.c.b16 %v4526, %v4525
        %v4595 = vpack.c.b16 %v4528, %v4527
        %v4596 = vpack.c.b16 %v4530, %v4529
        %v4597 = vpack.c.b16 %v4532, %v4531
        %v4598 = vpack.c.b16 %v4534, %v4533
        %4663 = vmatprep.subr.bf16.mxu0 0
        %4664 = vmatpush1.bf16.msra.mxu0 %v4535
        %4665 = vmatprep.subr.bf16.mxu0 0
        %4666 = vmatpush1.bf16.msra.mxu0 %v4536
        %4667 = vmatprep.subr.bf16.mxu0 0
        %4668 = vmatpush1.bf16.msra.mxu0 %v4537
        %4669 = vmatprep.subr.bf16.mxu0 0
        %4670 = vmatpush1.bf16.msra.mxu0 %v4538
        %4671 = vmatprep.subr.bf16.mxu0 0
        %4672 = vmatpush1.bf16.msra.mxu0 %v4539
        %4673 = vmatprep.subr.bf16.mxu0 0
        %4674 = vmatpush1.bf16.msra.mxu0 %v4540
        %4675 = vmatprep.subr.bf16.mxu0 0
        %4676 = vmatpush1.bf16.msra.mxu0 %v4541
        %4677 = vmatprep.subr.bf16.mxu0 0
        %4678 = vmatpush1.bf16.msra.mxu0 %v4542
        %4679 = vmatprep.subr.bf16.mxu0 0
        %4680 = vmatpush1.bf16.msra.mxu0 %v4543
        %4681 = vmatprep.subr.bf16.mxu0 0
        %4682 = vmatpush1.bf16.msra.mxu0 %v4544
        %4683 = vmatprep.subr.bf16.mxu0 0
        %4684 = vmatpush1.bf16.msra.mxu0 %v4545
        %4685 = vmatprep.subr.bf16.mxu0 0
        %4686 = vmatpush1.bf16.msra.mxu0 %v4546
        %4687 = vmatprep.subr.bf16.mxu0 0
        %4688 = vmatpush1.bf16.msra.mxu0 %v4547
        %4689 = vmatprep.subr.bf16.mxu0 0
        %4690 = vmatpush1.bf16.msra.mxu0 %v4548
        %4691 = vmatprep.subr.bf16.mxu0 0
        %4692 = vmatpush1.bf16.msra.mxu0 %v4549
        %4693 = vmatprep.subr.bf16.mxu0 0
        %4694 = vmatpush1.bf16.msra.mxu0 %v4550
        %4695 = vmatprep.mubr.bf16.mxu0 %v4137
        %4696 = vmatmul.mubr.bf16.gmra.mrb[0].mxu0 %v4136
        %v4697 = vpop.f32.mrb[0].mxu0
        %v4698 = vadd.f32 %v4277, %v4697
        %v4699 = vpop.f32.mrb[0].mxu0
        %v4700 = vpop.f32.mrb[0].mxu0
        %v4701 = vpop.f32.mrb[0].mxu0
        %4702 = vdwg.mxu0
        %4703 = vmatprep.subr.bf16.mxu0 0
        %4704 = vmatpush1.bf16.msra.mxu0 %v4551
        %4705 = vmatprep.subr.bf16.mxu0 0
        %4706 = vmatpush1.bf16.msra.mxu0 %v4552
        %4707 = vmatprep.subr.bf16.mxu0 0
        %4708 = vmatpush1.bf16.msra.mxu0 %v4553
        %4709 = vmatprep.subr.bf16.mxu0 0
        %4710 = vmatpush1.bf16.msra.mxu0 %v4554
        %4711 = vmatprep.subr.bf16.mxu0 0
        %4712 = vmatpush1.bf16.msra.mxu0 %v4555
        %4713 = vmatprep.subr.bf16.mxu0 0
        %4714 = vmatpush1.bf16.msra.mxu0 %v4556
        %4715 = vmatprep.subr.bf16.mxu0 0
        %4716 = vmatpush1.bf16.msra.mxu0 %v4557
        %4717 = vmatprep.subr.bf16.mxu0 0
        %4718 = vmatpush1.bf16.msra.mxu0 %v4558
        %4719 = vmatprep.subr.bf16.mxu0 0
        %4720 = vmatpush1.bf16.msra.mxu0 %v4559
        %4721 = vmatprep.subr.bf16.mxu0 0
        %4722 = vmatpush1.bf16.msra.mxu0 %v4560
        %4723 = vmatprep.subr.bf16.mxu0 0
        %4724 = vmatpush1.bf16.msra.mxu0 %v4561
        %4725 = vmatprep.subr.bf16.mxu0 0
        %4726 = vmatpush1.bf16.msra.mxu0 %v4562
        %4727 = vmatprep.subr.bf16.mxu0 0
        %4728 = vmatpush1.bf16.msra.mxu0 %v4563
        %4729 = vmatprep.subr.bf16.mxu0 0
        %4730 = vmatpush1.bf16.msra.mxu0 %v4564
        %4731 = vmatprep.subr.bf16.mxu0 0
        %4732 = vmatpush1.bf16.msra.mxu0 %v4565
        %4733 = vmatprep.subr.bf16.mxu0 0
        %4734 = vmatpush1.bf16.msra.mxu0 %v4566
        %4735 = vmatprep.mubr.bf16.mxu0 %v4139
        %4736 = vmatmul.mubr.bf16.gmra.mrb[0].mxu0 %v4138
        %v4737 = vpop.f32.mrb[0].mxu0
        %v4738 = vadd.f32 %v4698, %v4737
        %v4739 = vpop.f32.mrb[0].mxu0
        %v4740 = vpop.f32.mrb[0].mxu0
        %v4741 = vpop.f32.mrb[0].mxu0
        %4742 = vdwg.mxu0
        %4743 = vmatprep.subr.bf16.mxu0 0
        %4744 = vmatpush1.bf16.msra.mxu0 %v4567
        %4745 = vmatprep.subr.bf16.mxu0 0
        %4746 = vmatpush1.bf16.msra.mxu0 %v4568
        %4747 = vmatprep.subr.bf16.mxu0 0
        %4748 = vmatpush1.bf16.msra.mxu0 %v4569
        %4749 = vmatprep.subr.bf16.mxu0 0
        %4750 = vmatpush1.bf16.msra.mxu0 %v4570
        %4751 = vmatprep.subr.bf16.mxu0 0
        %4752 = vmatpush1.bf16.msra.mxu0 %v4571
        %4753 = vmatprep.subr.bf16.mxu0 0
        %4754 = vmatpush1.bf16.msra.mxu0 %v4572
        %4755 = vmatprep.subr.bf16.mxu0 0
        %4756 = vmatpush1.bf16.msra.mxu0 %v4573
        %4757 = vmatprep.subr.bf16.mxu0 0
        %4758 = vmatpush1.bf16.msra.mxu0 %v4574
        %4759 = vmatprep.subr.bf16.mxu0 0
        %4760 = vmatpush1.bf16.msra.mxu0 %v4575
        %4761 = vmatprep.subr.bf16.mxu0 0
        %4762 = vmatpush1.bf16.msra.mxu0 %v4576
        %4763 = vmatprep.subr.bf16.mxu0 0
        %4764 = vmatpush1.bf16.msra.mxu0 %v4577
        %4765 = vmatprep.subr.bf16.mxu0 0
        %4766 = vmatpush1.bf16.msra.mxu0 %v4578
        %4767 = vmatprep.subr.bf16.mxu0 0
        %4768 = vmatpush1.bf16.msra.mxu0 %v4579
        %4769 = vmatprep.subr.bf16.mxu0 0
        %4770 = vmatpush1.bf16.msra.mxu0 %v4580
        %4771 = vmatprep.subr.bf16.mxu0 0
        %4772 = vmatpush1.bf16.msra.mxu0 %v4581
        %4773 = vmatprep.subr.bf16.mxu0 0
        %4774 = vmatpush1.bf16.msra.mxu0 %v4582
        %4775 = vmatprep.mubr.bf16.mxu0 %v4141
        %4776 = vmatmul.mubr.bf16.gmra.mrb[0].mxu0 %v4140
        %v4777 = vpop.f32.mrb[0].mxu0
        %v4778 = vadd.f32 %v4738, %v4777
        %v4779 = vpop.f32.mrb[0].mxu0
        %v4780 = vpop.f32.mrb[0].mxu0
        %v4781 = vpop.f32.mrb[0].mxu0
        %4782 = vdwg.mxu0
        %4783 = vmatprep.subr.bf16.mxu0 0
        %4784 = vmatpush1.bf16.msra.mxu0 %v4583
        %4785 = vmatprep.subr.bf16.mxu0 0
        %4786 = vmatpush1.bf16.msra.mxu0 %v4584
        %4787 = vmatprep.subr.bf16.mxu0 0
        %4788 = vmatpush1.bf16.msra.mxu0 %v4585
        %4789 = vmatprep.subr.bf16.mxu0 0
        %4790 = vmatpush1.bf16.msra.mxu0 %v4586
        %4791 = vmatprep.subr.bf16.mxu0 0
        %4792 = vmatpush1.bf16.msra.mxu0 %v4587
        %4793 = vmatprep.subr.bf16.mxu0 0
        %4794 = vmatpush1.bf16.msra.mxu0 %v4588
        %4795 = vmatprep.subr.bf16.mxu0 0
        %4796 = vmatpush1.bf16.msra.mxu0 %v4589
        %4797 = vmatprep.subr.bf16.mxu0 0
        %4798 = vmatpush1.bf16.msra.mxu0 %v4590
        %4799 = vmatprep.subr.bf16.mxu0 0
        %4800 = vmatpush1.bf16.msra.mxu0 %v4591
        %4801 = vmatprep.subr.bf16.mxu0 0
        %4802 = vmatpush1.bf16.msra.mxu0 %v4592
        %4803 = vmatprep.subr.bf16.mxu0 0
        %4804 = vmatpush1.bf16.msra.mxu0 %v4593
        %4805 = vmatprep.subr.bf16.mxu0 0
        %4806 = vmatpush1.bf16.msra.mxu0 %v4594
        %4807 = vmatprep.subr.bf16.mxu0 0
        %4808 = vmatpush1.bf16.msra.mxu0 %v4595
        %4809 = vmatprep.subr.bf16.mxu0 0
        %4810 = vmatpush1.bf16.msra.mxu0 %v4596
        %4811 = vmatprep.subr.bf16.mxu0 0
        %4812 = vmatpush1.bf16.msra.mxu0 %v4597
        %4813 = vmatprep.subr.bf16.mxu0 0
        %4814 = vmatpush1.bf16.msra.mxu0 %v4598
        %4815 = vmatprep.mubr.bf16.mxu0 %v4143
        %4816 = vmatmul.mubr.bf16.gmra.mrb[0].mxu0 %v4142
        %v4817 = vpop.f32.mrb[0].mxu0
        %v4818 = vadd.f32 %v4778, %v4817
        %v4819 = vpop.f32.mrb[0].mxu0
        %v4820 = vpop.f32.mrb[0].mxu0
        %v4821 = vpop.f32.mrb[0].mxu0
        %4822 = vdwg.mxu0
        %4823 = vxpose.xlu0.b32.start [1/16] %v4818, 128
        %4824 = vxpose.xlu0.b32.cont [2/16] 0.0, 128
        %4825 = vxpose.xlu0.b32.cont [3/16] 0.0, 128
        %4826 = vxpose.xlu0.b32.cont [4/16] 0.0, 128
        %4827 = vxpose.xlu0.b32.cont [5/16] 0.0, 128
        %4828 = vxpose.xlu0.b32.cont [6/16] 0.0, 128
        %4829 = vxpose.xlu0.b32.cont [7/16] 0.0, 128
        %4830 = vxpose.xlu0.b32.cont [8/16] 0.0, 128
        %4831 = vxpose.xlu0.b32.cont [9/16] 0.0, 128
        %4832 = vxpose.xlu0.b32.cont [10/16] 0.0, 128
        %4833 = vxpose.xlu0.b32.cont [11/16] 0.0, 128
        %4834 = vxpose.xlu0.b32.cont [12/16] 0.0, 128
        %4835 = vxpose.xlu0.b32.cont [13/16] 0.0, 128
        %4836 = vxpose.xlu0.b32.cont [14/16] 0.0, 128
        %4837 = vxpose.xlu0.b32.cont [15/16] 0.0, 128
        %4838 = vxpose.xlu0.b32.end [16/16] 0.0, 128
        %v4839 = vpop.trf.xlu0
        %v4840 = vpop.trf.xlu0
        %v4841 = vpop.trf.xlu0
        %v4842 = vpop.trf.xlu0
        %v4843 = vpop.trf.xlu0
        %v4844 = vpop.trf.xlu0
        %v4845 = vpop.trf.xlu0
        %v4846 = vpop.trf.xlu0
        %v4847 = vpop.trf.xlu0
        %v4848 = vpop.trf.xlu0
        %v4849 = vpop.trf.xlu0
        %v4850 = vpop.trf.xlu0
        %v4851 = vpop.trf.xlu0
        %v4852 = vpop.trf.xlu0
        %v4853 = vpop.trf.xlu0
        %v4854 = vpop.trf.xlu0
        %v4855 = vld [vmem:[%s293] sm:$0x1]
        %vm4856 = vcmp.eq.f32.partialorder %v4855, 0.0
        %v4857 = vsel %vm4856, 1, 0
        %v4858 = vlaneseq
        %v4859 = vshrl.u32 %v4858, 7
        %v4860 = vsub.s32 0, %v4859
        %v4861 = vrot.slane %v4857, %v4860
        %vm4862 = vcmp.eq.s32.totalorder %v4861, 1
        %v4863 = vsel %vm4862, -1e+30, %v4839
        %vm4864 = vcmask 58368
        %v4865 = vsel %vm4864, %v4863, -inf
        %4866 = vmax.xlane.f32.xlu0 %v4865
        %v4867 = vpop.xlane.xlu0 %4866
        %v4868 = vsub.f32 %v4863, %v4867
        %v4869 = vmul.f32 %v4868, 1.442695
        %v4870 = vpow.pop %v4869
        %v4871 = vsel %vm4864, %v4870, 0.0
        %4872 = vadd.xlane.f32.xlu0 %v4871
        %v4873 = vpop.xlane.xlu0 %4872
        %v4874 = vrcp.pop %v4873
        %v4875 = vmul.f32 %v4870, %v4874
        %4876 = vst.msk [vmem:[%s340] sm:$0x3] %vm4864, %v4875
        %p4877 = scmp.lt.s32.totalorder %s24, 1
        %s4878 = scalar_select %p4877, %s24, 1
        %s4879 = smul.addr %s4878, 2
        %s4880 = scalar_lea.vmem %s6, %s4879
        // Predicated region
        $region65: #{qa_head_pallas.1} parent=43 // pred_check
          %p4881 = pneg %p178
        $region66: #{qa_head_pallas.1} parent=43 // pred_check_branch
          %4883 = sbr.rel (%p4881) target = $region68
        $region67: #{qa_head_pallas.1} parent=43 // pred_region
          _
        $region68: #{qa_head_pallas.1} parent=43 // pred_fallthru
          _
      $region44: #{qa_head_pallas.1} parent=5 // pred_fallthru
        _
      %p4884 = scmp.le.s32.totalorder 2, %s19
      // Predicated region
      $region69: #{qa_head_pallas.1} parent=5 // pred_check
        %p4885 = pneg %p4884
      $region70: #{qa_head_pallas.1} parent=5 // pred_check_branch
        %4887 = sbr.rel (%p4885) target = $region72
      $region71: #{qa_head_pallas.1} parent=5 // pred_region
        %s4888 = ssub.s32 %s19, 2
        // Predicated region
        $region73: #{qa_head_pallas.1} parent=71 // pred_check
          %p4889 = pneg %p184
        $region74: #{qa_head_pallas.1} parent=71 // pred_check_branch
          %4891 = sbr.rel (%p4889) target = $region76
        $region75: #{qa_head_pallas.1} parent=71 // pred_region
          %p4892 = scmp.lt.s32.totalorder %s25, 1
          %s4893 = scalar_select %p4892, %s25, 1
          %s4894 = smul.addr %s4893, 2
          %s4895 = scalar_lea.vmem %s6, %s4894
        $region76: #{qa_head_pallas.1} parent=71 // pred_fallthru
          _
      $region72: #{qa_head_pallas.1} parent=5 // pred_fallthru
        _
    $region6: #{qa_head_pallas.1} parent=1 // loop_footer
      %s23 = sadd.s32 1, %s19
    $region7: #{qa_head_pallas.1} parent=1 // loop_footer_branch
      %18 = sbr.rel target = $region3
    $region8: #{qa_head_pallas.1} parent=1 // loop_exit
      _
    %4896 = vsyncpa [#allocation3], 1
    %s4897 = scalar_lea.sflag [#allocation3], 1
    %4898 = vsyncpa %s4897, 1
    %4899 = vsyncpa [#allocation5], 1
    %s4900 = scalar_lea.sflag [#allocation5], 1
    %4901 = vsyncpa %s4900, 1
    %4902 = vsyncpa [#allocation8], 1

</llo_original>
